<compile_context>
chip_gen: v6e
topology: v6e:2x2x1
jax: 0.10.0
libtpu: 0.0.40
codegen_flags: <defaults>
</compile_context>

<pallas_src>
import jax
import jax.numpy as jnp
from jax.experimental import pallas as pl
from jax.experimental.pallas import tpu as pltpu


NEG_BIG = -1e30  # additive mask; equivalent to masked_fill(-inf) when a row has >=1 valid position


def _round_up(v, m):
    return ((v + m - 1) // m) * m


def _nonlinear_seq_attn_kernel(x_ref, mb_ref, w1_ref, b1_ref, w2_ref, out_ref):
    """One grid step == one block of TB independent batch rows.

    x_ref : (TB, L, D) bf16/f32   mb_ref : (TB, L) f32   out_ref : (TB, L) f32
    w1_ref: (D, H) (same dtype as x)  b1_ref: (1, H) f32  w2_ref: (1, H) f32
    Weights are resident across the grid (constant index_map).
    """
    TB, L, D = x_ref.shape
    H = w1_ref.shape[1]

    # FFN layer 1: ONE MXU matmul for the whole block, f32 accumulation.
    xf = x_ref[...].reshape(TB * L, D)                  # leading-dim merge, no relayout
    h = jnp.dot(xf, w1_ref[...], preferred_element_type=jnp.float32)   # (TB*L, H) f32
    h = jnp.maximum(h + b1_ref[...], 0.0)               # + b1, ReLU; dropout_rate=0 -> identity

    # FFN layer 2 (H -> 1): broadcast-mul + single lane reduce on the batched tensor.
    s = jnp.sum(h.reshape(TB, L, H) * w2_ref[...], axis=-1)            # (TB, L) f32

    # Masked softmax over the sequence axis.  mb = (padding ? NEG_BIG : 0);
    # the scalar output bias b2 is omitted (softmax is shift-invariant).
    s = s + mb_ref[...]
    m = jnp.max(s, axis=-1, keepdims=True)
    e = jnp.exp(s - m)
    denom = jnp.sum(e, axis=-1, keepdims=True)
    inv = pl.reciprocal(denom, approx=True)              # EUP vrcp (free slot)
    inv = inv * (2.0 - denom * inv)                      # one Newton step -> ~f32 accuracy

    out_ref[...] = e * inv                               # single unmasked lane-dense store


def nonlinear_seq_attn(x, x_mask, params, *, block_b=256, x_dtype=jnp.bfloat16):
    """x: (B, L, D) float, x_mask: (B, L) bool (True = padding) -> alpha: (B, L) f32."""
    B, L, D = x.shape
    H = params["W1"].shape[1]

    # --- batch-block (TB) selection -------------------------------------------------
    # TB must be a multiple of 8 so the (TB, L) mask/output blocks are (8,128)-tileable.
    block_b = max(8, (block_b // 8) * 8)
    TB = min(block_b, _round_up(B, 8))
    if B >= 16:
        # Keep >= 2 grid steps so both v7x TensorCores get work (also trims padding).
        TB = min(TB, _round_up(pl.cdiv(B, 2), 8))
    TB = max(TB, 8)
    nb = pl.cdiv(B, TB)
    Bp = nb * TB

    # --- operand preparation ---------------------------------------------------------
    # MXU operands (x, W1) stream in x_dtype (bf16 by default: half the HBM bytes);
    # everything post-matmul stays in f32.
    x = x.astype(x_dtype)
    w1 = params["W1"].astype(x_dtype)
    b1 = params["b1"].astype(jnp.float32).reshape(1, H)
    w2 = params["W2"].astype(jnp.float32).reshape(1, H)
    mb = jnp.where(x_mask, NEG_BIG, 0.0).astype(jnp.float32)   # additive mask only

    if Bp != B:  # pad batch to a multiple of TB; padded rows become uniform and are trimmed
        x = jnp.pad(x, ((0, Bp - B), (0, 0), (0, 0)))
        mb = jnp.pad(mb, ((0, Bp - B), (0, 0)), constant_values=NEG_BIG)

    # --- VMEM budget (x/mb/out double-buffered by the pipeline, + f32 intermediates) --
    isz = jnp.dtype(x_dtype).itemsize
    vmem_est = (2 * TB * L * D * isz          # x, double-buffered
                + 2 * TB * L * 4              # mask bias
                + 2 * TB * L * 4              # output
                + 2 * TB * L * H * 4          # h / intermediates (f32)
                + 2 * (D * H * isz + 2 * H * 4))
    vmem_limit = int(min(max(int(1.5 * vmem_est) + (4 << 20), 16 << 20), 48 << 20))

    const = lambda r, c: pl.BlockSpec((r, c), lambda i: (0, 0))

    out = pl.pallas_call(
        _nonlinear_seq_attn_kernel,
        out_shape=jax.ShapeDtypeStruct((Bp, L), jnp.float32),
        grid=(nb,),
        in_specs=[
            pl.BlockSpec((TB, L, D), lambda i: (i, 0, 0)),   # x, one batch block per step
            pl.BlockSpec((TB, L), lambda i: (i, 0)),         # additive mask, per block
            const(D, H),                                     # W1  (resident)
            const(1, H),                                     # b1
            const(1, H),                                     # W2 as a row vector
        ],
        out_specs=pl.BlockSpec((TB, L), lambda i: (i, 0)),
        compiler_params=pltpu.CompilerParams(
            dimension_semantics=("parallel",),               # batch blocks are independent
            vmem_limit_bytes=vmem_limit),
    )(x, mb, w1, b1, w2)

    return out[:B]


def reference(x, x_mask, params):
    """Pure-JAX port of NonLinearSeqAttn.forward (dropout_rate=0 / eval semantics)."""
    h = jax.nn.relu(x @ params["W1"] + params["b1"])                       # (B, L, H)
    scores = jnp.einsum("blh,h->bl", h, params["W2"][0]) + params["b2"]    # (B, L)
    scores = jnp.where(x_mask, -jnp.inf, scores)
    return jax.nn.softmax(scores, axis=-1)


def init_params(key, input_size, hidden_size):
    ks = jax.random.split(key, 4)
    H = hidden_size
    s1 = 0.25
    s2 = 0.2
    return {
        "W1": s1 * jax.random.normal(ks[0], (input_size, H), jnp.float32),  # linear1.weight.T
        "b1": s1 * jax.random.normal(ks[1], (1, H), jnp.float32),           # linear1.bias
        "W2": s2 * jax.random.normal(ks[2], (1, H), jnp.float32),           # linear2.weight (1, H)
        "b2": s2 * jax.random.normal(ks[3], (1,), jnp.float32),             # linear2.bias
    }


if __name__ == "__main__":
    # batch * len * dim; L is lane-dense (multiple of 128); B=16 gives two 8-row
    # batch blocks, i.e. a 2-step "parallel" grid (both TensorCores on v7x).
    B, L, input_size, hidden_size = 16, 128, 64, 32

    key = jax.random.PRNGKey(0)
    kx, kp = jax.random.split(key)
    x = jax.random.normal(kx, (B, L, input_size), jnp.float32)
    # last 5 positions of every row are padding (True = pad)
    x_mask = jnp.zeros((B, L), jnp.bool_).at[:, L - 5:].set(True)

    params = init_params(kp, input_size, hidden_size)
    ref = jax.block_until_ready(reference(x, x_mask, params))

    # 1) f32-streaming run: tight numerical check against the f32 reference.
    out_f32 = jax.block_until_ready(
        nonlinear_seq_attn(x, x_mask, params, x_dtype=jnp.float32))
    assert out_f32.shape == (B, L)
    assert jnp.allclose(out_f32, ref, atol=1e-3, rtol=1e-3), (
        f"f32 mismatch vs reference, max abs err {float(jnp.max(jnp.abs(out_f32 - ref)))}")

    # 2) Default bf16-streaming run (half the HBM traffic): bf16-level tolerance.
    out_bf16 = jax.block_until_ready(nonlinear_seq_attn(x, x_mask, params))
    assert out_bf16.shape == (B, L)
    assert jnp.allclose(out_bf16, ref, atol=2e-2, rtol=2e-2), (
        f"bf16 mismatch vs reference, max abs err {float(jnp.max(jnp.abs(out_bf16 - ref)))}")
    assert jnp.allclose(out_bf16.sum(-1), 1.0, atol=1e-3), "rows do not sum to 1"

    # Note: if an entire x_mask row is True, PyTorch's masked_fill(-inf) softmax yields NaN;
    # the additive -1e30 mask here yields a uniform distribution instead (documented choice).
    # TODO(synk): F.dropout with dropout_rate>0 in training mode (RNG-dependent) is not
    # implemented; the module constructs its FFN with dropout_rate=0, making it the identity.
    print("KERNEL_OK")
</pallas_src>

<mosaic_0001>
module attributes {stable_mosaic.version = 11 : i64} {
  func.func @_nonlinear_seq_attn_kernel(%arg0: i32, %arg1: memref<8x128x64xf32, #tpu.memory_space<vmem>>, %arg2: memref<8x128xf32, #tpu.memory_space<vmem>>, %arg3: memref<64x32xf32, #tpu.memory_space<vmem>>, %arg4: memref<1x32xf32, #tpu.memory_space<vmem>>, %arg5: memref<1x32xf32, #tpu.memory_space<vmem>>, %arg6: memref<8x128xf32, #tpu.memory_space<vmem>>) attributes {dimension_semantics = [#tpu.dimension_semantics<parallel>], iteration_bounds = array<i64: 2>, scalar_prefetch = 0 : i64, scratch_operands = 0 : i64, tpu.core_type = #tpu.core_type<tc>, window_params = [{transform_indices = @transform_0, window_bounds = array<i64: 8, 128, 64>}, {transform_indices = @transform_1, window_bounds = array<i64: 8, 128>}, {pipeline_mode = #tpu.pipeline_mode<synchronous>, transform_indices = @transform_2, window_bounds = array<i64: 64, 32>}, {pipeline_mode = #tpu.pipeline_mode<synchronous>, transform_indices = @transform_3, window_bounds = array<i64: 1, 32>}, {pipeline_mode = #tpu.pipeline_mode<synchronous>, transform_indices = @transform_4, window_bounds = array<i64: 1, 32>}, {transform_indices = @transform_5, window_bounds = array<i64: 8, 128>}]} {
    %c0 = arith.constant 0 : index
    %c0_0 = arith.constant 0 : index
    %c0_1 = arith.constant 0 : index
    %0 = vector.load %arg1[%c0, %c0_0, %c0_1] : memref<8x128x64xf32, #tpu.memory_space<vmem>>, vector<8x128x64xf32>
    %1 = vector.shape_cast %0 : vector<8x128x64xf32> to vector<1024x64xf32>
    %c0_2 = arith.constant 0 : index
    %c0_3 = arith.constant 0 : index
    %2 = vector.load %arg3[%c0_2, %c0_3] : memref<64x32xf32, #tpu.memory_space<vmem>>, vector<64x32xf32>
    %cst = arith.constant dense<0.000000e+00> : vector<1024x32xf32>
    %3 = tpu.matmul %1, %2, %cst {dimension_numbers = #tpu.dot_dimension_numbers<[1], [0], [0], [1], [0, 0, 1, 1], [], []>} : vector<1024x64xf32>, vector<64x32xf32>, vector<1024x32xf32> -> vector<1024x32xf32>
    %c0_4 = arith.constant 0 : index
    %c0_5 = arith.constant 0 : index
    %4 = vector.load %arg4[%c0_4, %c0_5] : memref<1x32xf32, #tpu.memory_space<vmem>>, vector<1x32xf32>
    %5 = vector.broadcast %4 : vector<1x32xf32> to vector<1024x32xf32>
    %6 = arith.addf %3, %5 : vector<1024x32xf32>
    %cst_6 = arith.constant 0.000000e+00 : f32
    %7 = vector.broadcast %cst_6 : f32 to vector<1024x32xf32>
    %8 = arith.maximumf %6, %7 : vector<1024x32xf32>
    %9 = vector.shape_cast %8 : vector<1024x32xf32> to vector<8x128x32xf32>
    %c0_7 = arith.constant 0 : index
    %c0_8 = arith.constant 0 : index
    %10 = vector.load %arg5[%c0_7, %c0_8] : memref<1x32xf32, #tpu.memory_space<vmem>>, vector<1x32xf32>
    %11 = vector.shape_cast %10 : vector<1x32xf32> to vector<1x1x32xf32>
    %12 = vector.broadcast %11 : vector<1x1x32xf32> to vector<8x128x32xf32>
    %13 = arith.mulf %9, %12 : vector<8x128x32xf32>
    %cst_9 = arith.constant dense<0.000000e+00> : vector<8x128xf32>
    %14 = vector.multi_reduction <add>, %13, %cst_9 [2] : vector<8x128x32xf32> to vector<8x128xf32>
    %c0_10 = arith.constant 0 : index
    %c0_11 = arith.constant 0 : index
    %15 = vector.load %arg2[%c0_10, %c0_11] : memref<8x128xf32, #tpu.memory_space<vmem>>, vector<8x128xf32>
    %16 = arith.addf %14, %15 : vector<8x128xf32>
    %cst_12 = arith.constant dense<0xFF800000> : vector<8xf32>
    %17 = vector.multi_reduction <maximumf>, %16, %cst_12 [1] : vector<8x128xf32> to vector<8xf32>
    %18 = vector.shape_cast %17 : vector<8xf32> to vector<8x1xf32>
    %19 = vector.broadcast %18 : vector<8x1xf32> to vector<8x128xf32>
    %20 = arith.subf %16, %19 : vector<8x128xf32>
    %21 = math.exp %20 : vector<8x128xf32>
    %cst_13 = arith.constant dense<0.000000e+00> : vector<8xf32>
    %22 = vector.multi_reduction <add>, %21, %cst_13 [1] : vector<8x128xf32> to vector<8xf32>
    %23 = vector.shape_cast %22 : vector<8xf32> to vector<8x1xf32>
    %24 = tpu.reciprocal %23 {approx = true} : vector<8x1xf32> -> vector<8x1xf32>
    %25 = arith.mulf %23, %24 : vector<8x1xf32>
    %cst_14 = arith.constant 2.000000e+00 : f32
    %26 = vector.broadcast %cst_14 : f32 to vector<8x1xf32>
    %27 = arith.subf %26, %25 : vector<8x1xf32>
    %28 = arith.mulf %24, %27 : vector<8x1xf32>
    %29 = vector.broadcast %28 : vector<8x1xf32> to vector<8x128xf32>
    %30 = arith.mulf %21, %29 : vector<8x128xf32>
    %c0_15 = arith.constant 0 : index
    %c0_16 = arith.constant 0 : index
    %31 = vector.load %arg6[%c0_15, %c0_16] : memref<8x128xf32, #tpu.memory_space<vmem>>, vector<8x128xf32>
    tpu.vector_store %arg6[%c0_15, %c0_16], %30 {strides = array<i32>} : memref<8x128xf32, #tpu.memory_space<vmem>>, vector<8x128xf32>,
    return
  }
  func.func @transform_0(%arg0: i32) -> (i32, i32, i32) {
    %c0_i32 = arith.constant 0 : i32
    %c0_i32_0 = arith.constant 0 : i32
    %c0_i32_1 = arith.constant 0 : i32
    return %arg0, %c0_i32, %c0_i32_0 : i32, i32, i32
  }
  func.func @transform_1(%arg0: i32) -> (i32, i32) {
    %c0_i32 = arith.constant 0 : i32
    %c0_i32_0 = arith.constant 0 : i32
    return %arg0, %c0_i32 : i32, i32
  }
  func.func @transform_2(%arg0: i32) -> (i32, i32) {
    %c0_i32 = arith.constant 0 : i32
    %c0_i32_0 = arith.constant 0 : i32
    %c0_i32_1 = arith.constant 0 : i32
    return %c0_i32, %c0_i32_0 : i32, i32
  }
  func.func @transform_3(%arg0: i32) -> (i32, i32) {
    %c0_i32 = arith.constant 0 : i32
    %c0_i32_0 = arith.constant 0 : i32
    %c0_i32_1 = arith.constant 0 : i32
    return %c0_i32, %c0_i32_0 : i32, i32
  }
  func.func @transform_4(%arg0: i32) -> (i32, i32) {
    %c0_i32 = arith.constant 0 : i32
    %c0_i32_0 = arith.constant 0 : i32
    %c0_i32_1 = arith.constant 0 : i32
    return %c0_i32, %c0_i32_0 : i32, i32
  }
  func.func @transform_5(%arg0: i32) -> (i32, i32) {
    %c0_i32 = arith.constant 0 : i32
    %c0_i32_0 = arith.constant 0 : i32
    return %arg0, %c0_i32 : i32, i32
  }
}

</mosaic_0001>

<llo_original>
// kernel: tpu_custom_call.1
$region0: #{tpu_custom_call.1}
  #allocation0 [shape = 'u32[]', space=smem, size = 0x4, offset = 0x4, fixed_abs, tag = 'smem constant byte address 0x4 - core index']
  #allocation1 [shape = 'u32[144,128]{1,0:T(1,128)}', space=vmem, size = 0x12000, scoped, tag = 'internal scratch']
  %s0 = inlined_call_operand.vmem [shape: f32[16,128,64], index: 0, kind: input, shape index: {}]
  %s1 = inlined_call_operand.vmem [shape: f32[16,128], index: 1, kind: input, shape index: {}]
  %s2 = inlined_call_operand.vmem [shape: f32[64,32], index: 2, kind: input, shape index: {}]
  %s3 = inlined_call_operand.vmem [shape: f32[1,32], index: 3, kind: input, shape index: {}]
  %s4 = inlined_call_operand.vmem [shape: f32[1,32], index: 4, kind: input, shape index: {}]
  %s5 = inlined_call_operand.hbm [shape: f32[16,128], index: 5, kind: output, shape index: {}]
  %s6 = sld [smem:[#allocation0]]
  $region53: #{tpu_custom_call.1} parent=0
    _
  %s8 = ssub.s32 1, %s6
  %s9 = scalar_select 0, %s8, %s6
  $region1: #{tpu_custom_call.1} parent=0
    #allocation2 [shape = 'u8[8192]{0}', space=vmem, size = 0x2000, scoped, tag = 'output window, operand 0']
    #allocation3 [shape = 's32[2]{0}', space=sflag, size = 0x8, scoped, tag = 'scoped memory for tpu_custom_call.1']
    %10 = vsyncpa [#allocation3], 0
    %s11 = scalar_lea.sflag [#allocation3], 1
    %12 = vsyncpa %s11, 0
    loop: start=0, step=1, limit=4
    $region2: #{tpu_custom_call.1} parent=1 // loop_pre_header
      _
    $region3: #{tpu_custom_call.1} parent=1 // loop_header
      %s14 = sphi 0, %s18
      %p15 = scmp.ge.s32.totalorder %s14, 4
      %s24 = sphi 0, %s26
      %s27 = sphi 0, %s24
      %s28 = sphi 0, %s27
      %s44 = sphi 0, %s28
      %s50 = sphi 0, %s52
      %s53 = sphi 0, %s50
      %s54 = sphi 0, %s53
      %s70 = sphi 0, %s54
      %s74 = sphi 0, %s74
      %s76 = sphi 0, %s74
      %s77 = sphi 0, %s76
      %s91 = sphi 0, %s77
      %s95 = sphi 0, %s95
      %s97 = sphi 0, %s95
      %s98 = sphi 0, %s97
      %s112 = sphi 0, %s98
      %s116 = sphi 0, %s116
      %s118 = sphi 0, %s116
      %s119 = sphi 0, %s118
      %s133 = sphi 0, %s119
      %s139 = sphi 0, %s141
      %s142 = sphi 0, %s139
      %s143 = sphi 0, %s142
      %s159 = sphi 0, %s143
    $region4: #{tpu_custom_call.1} parent=1 // loop_header_branch
      %17 = sbr.rel (%p15) target = $region8
    $region5: #{tpu_custom_call.1} parent=1 // loop_body
      %s19 = ssub.s32 %s14, 1
      %s20 = ssub.s32 %s14, 2
      %s21 = sadd.s32 %s14, 1
      %s22 = ssub.s32 %s14, %s21
      %p23 = scmp.eq.s32.totalorder %s22, 0
      %s25 = sadd.s32 %s24, 1
      %s26 = scalar_select %p23, %s24, %s25
      %p29 = pneg %p23
      %p30 = scmp.eq.s32.totalorder %s14, 1
      %p31 = por %p29, %p30
      %p32 = scmp.ne.s32.totalorder %s24, %s27
      %p33 = scmp.eq.s32.totalorder %s14, 0
      %p34 = por %p32, %p33
      %p35 = scmp.ne.s32.totalorder %s24, %s27
      %p36 = scmp.eq.s32.totalorder %s19, 1
      %p37 = por %p35, %p36
      %p38 = scmp.ne.s32.totalorder %s27, %s28
      %p39 = scmp.eq.s32.totalorder %s19, 0
      %p40 = por %p38, %p39
      %p41 = scmp.ne.s32.totalorder %s27, %s28
      %p42 = scmp.eq.s32.totalorder %s20, 1
      %p43 = por %p41, %p42
      %p45 = scmp.ne.s32.totalorder %s28, %s44
      %p46 = scmp.eq.s32.totalorder %s20, 0
      %p47 = por %p45, %p46
      %s48 = ssub.s32 %s14, %s21
      %p49 = scmp.eq.s32.totalorder %s48, 0
      %s51 = sadd.s32 %s50, 1
      %s52 = scalar_select %p49, %s50, %s51
      %p55 = pneg %p49
      %p56 = scmp.eq.s32.totalorder %s14, 1
      %p57 = por %p55, %p56
      %p58 = scmp.ne.s32.totalorder %s50, %s53
      %p59 = scmp.eq.s32.totalorder %s14, 0
      %p60 = por %p58, %p59
      %p61 = scmp.ne.s32.totalorder %s50, %s53
      %p62 = scmp.eq.s32.totalorder %s19, 1
      %p63 = por %p61, %p62
      %p64 = scmp.ne.s32.totalorder %s53, %s54
      %p65 = scmp.eq.s32.totalorder %s19, 0
      %p66 = por %p64, %p65
      %p67 = scmp.ne.s32.totalorder %s53, %s54
      %p68 = scmp.eq.s32.totalorder %s20, 1
      %p69 = por %p67, %p68
      %p71 = scmp.ne.s32.totalorder %s54, %s70
      %p72 = scmp.eq.s32.totalorder %s20, 0
      %p73 = por %p71, %p72
      %s75 = sadd.s32 %s74, 1
      %p78 = scmp.eq.s32.totalorder %s14, 1
      %p79 = scmp.ne.s32.totalorder %s74, %s76
      %p80 = scmp.eq.s32.totalorder %s14, 0
      %p81 = por %p79, %p80
      %p82 = scmp.ne.s32.totalorder %s74, %s76
      %p83 = scmp.eq.s32.totalorder %s19, 1
      %p84 = por %p82, %p83
      %p85 = scmp.ne.s32.totalorder %s76, %s77
      %p86 = scmp.eq.s32.totalorder %s19, 0
      %p87 = por %p85, %p86
      %p88 = scmp.ne.s32.totalorder %s76, %s77
      %p89 = scmp.eq.s32.totalorder %s20, 1
      %p90 = por %p88, %p89
      %p92 = scmp.ne.s32.totalorder %s77, %s91
      %p93 = scmp.eq.s32.totalorder %s20, 0
      %p94 = por %p92, %p93
      %s96 = sadd.s32 %s95, 1
      %p99 = scmp.eq.s32.totalorder %s14, 1
      %p100 = scmp.ne.s32.totalorder %s95, %s97
      %p101 = scmp.eq.s32.totalorder %s14, 0
      %p102 = por %p100, %p101
      %p103 = scmp.ne.s32.totalorder %s95, %s97
      %p104 = scmp.eq.s32.totalorder %s19, 1
      %p105 = por %p103, %p104
      %p106 = scmp.ne.s32.totalorder %s97, %s98
      %p107 = scmp.eq.s32.totalorder %s19, 0
      %p108 = por %p106, %p107
      %p109 = scmp.ne.s32.totalorder %s97, %s98
      %p110 = scmp.eq.s32.totalorder %s20, 1
      %p111 = por %p109, %p110
      %p113 = scmp.ne.s32.totalorder %s98, %s112
      %p114 = scmp.eq.s32.totalorder %s20, 0
      %p115 = por %p113, %p114
      %s117 = sadd.s32 %s116, 1
      %p120 = scmp.eq.s32.totalorder %s14, 1
      %p121 = scmp.ne.s32.totalorder %s116, %s118
      %p122 = scmp.eq.s32.totalorder %s14, 0
      %p123 = por %p121, %p122
      %p124 = scmp.ne.s32.totalorder %s116, %s118
      %p125 = scmp.eq.s32.totalorder %s19, 1
      %p126 = por %p124, %p125
      %p127 = scmp.ne.s32.totalorder %s118, %s119
      %p128 = scmp.eq.s32.totalorder %s19, 0
      %p129 = por %p127, %p128
      %p130 = scmp.ne.s32.totalorder %s118, %s119
      %p131 = scmp.eq.s32.totalorder %s20, 1
      %p132 = por %p130, %p131
      %p134 = scmp.ne.s32.totalorder %s119, %s133
      %p135 = scmp.eq.s32.totalorder %s20, 0
      %p136 = por %p134, %p135
      %s137 = ssub.s32 %s14, %s21
      %p138 = scmp.eq.s32.totalorder %s137, 0
      %s140 = sadd.s32 %s139, 1
      %s141 = scalar_select %p138, %s139, %s140
      %p144 = pneg %p138
      %p145 = scmp.eq.s32.totalorder %s14, 1
      %p146 = por %p144, %p145
      %p147 = scmp.ne.s32.totalorder %s139, %s142
      %p148 = scmp.eq.s32.totalorder %s14, 0
      %p149 = por %p147, %p148
      %p150 = scmp.ne.s32.totalorder %s139, %s142
      %p151 = scmp.eq.s32.totalorder %s19, 1
      %p152 = por %p150, %p151
      %p153 = scmp.ne.s32.totalorder %s142, %s143
      %p154 = scmp.eq.s32.totalorder %s19, 0
      %p155 = por %p153, %p154
      %p156 = scmp.ne.s32.totalorder %s142, %s143
      %p157 = scmp.eq.s32.totalorder %s20, 1
      %p158 = por %p156, %p157
      %p160 = scmp.ne.s32.totalorder %s143, %s159
      %p161 = scmp.eq.s32.totalorder %s20, 0
      %p162 = por %p160, %p161
      %p163 = scmp.le.s32.totalorder 1, %s14
      %p164 = scmp.lt.s32.totalorder %s14, 3
      %p165 = pnand %p163, %p164
      %p166 = pneg %p165
      // Predicated region
      $region9: #{tpu_custom_call.1} parent=5 // pred_check
        _
      $region10: #{tpu_custom_call.1} parent=5 // pred_check_branch
        %168 = sbr.rel (%p165) target = $region12
      $region11: #{tpu_custom_call.1} parent=5 // pred_region
        %s169 = ssub.s32 %s14, 1
        // Predicated region
        $region13: #{tpu_custom_call.1} parent=11 // pred_check
          %p170 = pneg %p87
        $region14: #{tpu_custom_call.1} parent=11 // pred_check_branch
          %172 = sbr.rel (%p170) target = $region16
        $region15: #{tpu_custom_call.1} parent=11 // pred_region
          _
        $region16: #{tpu_custom_call.1} parent=11 // pred_fallthru
          _
        // Predicated region
        $region17: #{tpu_custom_call.1} parent=11 // pred_check
          %p173 = pneg %p108
        $region18: #{tpu_custom_call.1} parent=11 // pred_check_branch
          %175 = sbr.rel (%p173) target = $region20
        $region19: #{tpu_custom_call.1} parent=11 // pred_region
          _
        $region20: #{tpu_custom_call.1} parent=11 // pred_fallthru
          _
        // Predicated region
        $region21: #{tpu_custom_call.1} parent=11 // pred_check
          %p176 = pneg %p129
        $region22: #{tpu_custom_call.1} parent=11 // pred_check_branch
          %178 = sbr.rel (%p176) target = $region24
        $region23: #{tpu_custom_call.1} parent=11 // pred_region
          _
        $region24: #{tpu_custom_call.1} parent=11 // pred_fallthru
          _
      $region12: #{tpu_custom_call.1} parent=5 // pred_fallthru
        _
      %p179 = scmp.lt.s32.totalorder %s14, 2
      // Predicated region
      $region25: #{tpu_custom_call.1} parent=5 // pred_check
        %p180 = pneg %p179
      $region26: #{tpu_custom_call.1} parent=5 // pred_check_branch
        %182 = sbr.rel (%p180) target = $region28
      $region27: #{tpu_custom_call.1} parent=5 // pred_region
        // Predicated region
        $region29: #{tpu_custom_call.1} parent=27 // pred_check
          %p183 = pneg %p34
        $region30: #{tpu_custom_call.1} parent=27 // pred_check_branch
          %185 = sbr.rel (%p183) target = $region32
        $region31: #{tpu_custom_call.1} parent=27 // pred_region
          %s186 = smul.u32 8, %s14
          %p187 = scmp.lt.s32.totalorder %s186, 15
          %s188 = scalar_select %p187, %s186, 15
          %s189 = smul.addr %s188, 16
          %s190 = smul.addr %s189, 8
          %s191 = scalar_lea.vmem %s0, %s190
          %s192 = smul.u32 8, %s14
        $region32: #{tpu_custom_call.1} parent=27 // pred_fallthru
          _
        // Predicated region
        $region33: #{tpu_custom_call.1} parent=27 // pred_check
          %p193 = pneg %p60
        $region34: #{tpu_custom_call.1} parent=27 // pred_check_branch
          %195 = sbr.rel (%p193) target = $region36
        $region35: #{tpu_custom_call.1} parent=27 // pred_region
          %p196 = scmp.lt.s32.totalorder %s14, 1
          %s197 = scalar_select %p196, %s14, 1
          %s198 = smul.addr %s197, 8
          %s199 = scalar_lea.vmem %s1, %s198
        $region36: #{tpu_custom_call.1} parent=27 // pred_fallthru
          _
      $region28: #{tpu_custom_call.1} parent=5 // pred_fallthru
        _
      %p200 = scmp.le.s32.totalorder 1, %s14
      %p201 = scmp.lt.s32.totalorder %s14, 3
      %p202 = pnand %p200, %p201
      %p203 = pneg %p202
      // Predicated region
      $region37: #{tpu_custom_call.1} parent=5 // pred_check
        _
      $region38: #{tpu_custom_call.1} parent=5 // pred_check_branch
        %205 = sbr.rel (%p202) target = $region40
      $region39: #{tpu_custom_call.1} parent=5 // pred_region
        %s206 = ssub.s32 %s14, 1
        %s207 = smul.u32 8, %s19
        %p208 = scmp.lt.s32.totalorder %s207, 15
        %s209 = scalar_select %p208, %s207, 15
        %s210 = smul.addr %s209, 16
        %s211 = smul.addr %s210, 8
        %s212 = scalar_lea.vmem %s0, %s211
        %p213 = pneg %p40
        %p214 = pneg %p37
        %p215 = scmp.lt.s32.totalorder %s19, 1
        %s216 = scalar_select %p215, %s19, 1
        %s217 = smul.addr %s216, 8
        %s218 = scalar_lea.vmem %s1, %s217
        %p219 = pneg %p66
        %p220 = pneg %p63
        %p221 = pneg %p87
        %p222 = pneg %p84
        %p223 = pneg %p108
        %p224 = pneg %p105
        %p225 = pneg %p129
        %p226 = pneg %p126
        %p227 = pneg %p155
        %p228 = pneg %p152
        %s229 = sand.u32 %s142, 1
        %s230 = scalar_lea.sflag [#allocation3], %s229
        %s231 = sand.u32 %s142, 1
        %s232 = smul.addr %s231, 8
        %s233 = scalar_lea.vmem [#allocation2], %s232
        %s234 = smul.u32 8, %s19
        %p235 = scmp.lt.s32.totalorder %s234, 15
        %s236 = scalar_select %p235, %s234, 15
        %s237 = smul.addr %s236, 16
        %s238 = smul.addr %s237, 8
        %s239 = scalar_lea.vmem %s0, %s238
        %s240 = smul.u32 8, %s19
        %p241 = scmp.lt.s32.totalorder %s19, 1
        %s242 = scalar_select %p241, %s19, 1
        %s243 = smul.addr %s242, 8
        %s244 = scalar_lea.vmem %s1, %s243
        %v245 = vld [vmem:[%s239] sm:$0xff]
        %v246 = vld [vmem:[%s239 + $0x8] sm:$0xff]
        %v247 = vld [vmem:[%s239 + $0x10] sm:$0xff]
        %v248 = vld [vmem:[%s239 + $0x18] sm:$0xff]
        %v249 = vld [vmem:[%s239 + $0x20] sm:$0xff]
        %v250 = vld [vmem:[%s239 + $0x28] sm:$0xff]
        %v251 = vld [vmem:[%s239 + $0x30] sm:$0xff]
        %v252 = vld [vmem:[%s239 + $0x38] sm:$0xff]
        %v253 = vld [vmem:[%s239 + $0x40] sm:$0xff]
        %v254 = vld [vmem:[%s239 + $0x48] sm:$0xff]
        %v255 = vld [vmem:[%s239 + $0x50] sm:$0xff]
        %v256 = vld [vmem:[%s239 + $0x58] sm:$0xff]
        %v257 = vld [vmem:[%s239 + $0x60] sm:$0xff]
        %v258 = vld [vmem:[%s239 + $0x68] sm:$0xff]
        %v259 = vld [vmem:[%s239 + $0x70] sm:$0xff]
        %v260 = vld [vmem:[%s239 + $0x78] sm:$0xff]
        %v261 = vld [vmem:[%s239 + $0x80] sm:$0xff]
        %v262 = vld [vmem:[%s239 + $0x88] sm:$0xff]
        %v263 = vld [vmem:[%s239 + $0x90] sm:$0xff]
        %v264 = vld [vmem:[%s239 + $0x98] sm:$0xff]
        %v265 = vld [vmem:[%s239 + $0xa0] sm:$0xff]
        %v266 = vld [vmem:[%s239 + $0xa8] sm:$0xff]
        %v267 = vld [vmem:[%s239 + $0xb0] sm:$0xff]
        %v268 = vld [vmem:[%s239 + $0xb8] sm:$0xff]
        %v269 = vld [vmem:[%s239 + $0xc0] sm:$0xff]
        %v270 = vld [vmem:[%s239 + $0xc8] sm:$0xff]
        %v271 = vld [vmem:[%s239 + $0xd0] sm:$0xff]
        %v272 = vld [vmem:[%s239 + $0xd8] sm:$0xff]
        %v273 = vld [vmem:[%s239 + $0xe0] sm:$0xff]
        %v274 = vld [vmem:[%s239 + $0xe8] sm:$0xff]
        %v275 = vld [vmem:[%s239 + $0xf0] sm:$0xff]
        %v276 = vld [vmem:[%s239 + $0xf8] sm:$0xff]
        %v277 = vld [vmem:[%s239 + $0x100] sm:$0xff]
        %v278 = vld [vmem:[%s239 + $0x108] sm:$0xff]
        %v279 = vld [vmem:[%s239 + $0x110] sm:$0xff]
        %v280 = vld [vmem:[%s239 + $0x118] sm:$0xff]
        %v281 = vld [vmem:[%s239 + $0x120] sm:$0xff]
        %v282 = vld [vmem:[%s239 + $0x128] sm:$0xff]
        %v283 = vld [vmem:[%s239 + $0x130] sm:$0xff]
        %v284 = vld [vmem:[%s239 + $0x138] sm:$0xff]
        %v285 = vld [vmem:[%s239 + $0x140] sm:$0xff]
        %v286 = vld [vmem:[%s239 + $0x148] sm:$0xff]
        %v287 = vld [vmem:[%s239 + $0x150] sm:$0xff]
        %v288 = vld [vmem:[%s239 + $0x158] sm:$0xff]
        %v289 = vld [vmem:[%s239 + $0x160] sm:$0xff]
        %v290 = vld [vmem:[%s239 + $0x168] sm:$0xff]
        %v291 = vld [vmem:[%s239 + $0x170] sm:$0xff]
        %v292 = vld [vmem:[%s239 + $0x178] sm:$0xff]
        %v293 = vld [vmem:[%s239 + $0x180] sm:$0xff]
        %v294 = vld [vmem:[%s239 + $0x188] sm:$0xff]
        %v295 = vld [vmem:[%s239 + $0x190] sm:$0xff]
        %v296 = vld [vmem:[%s239 + $0x198] sm:$0xff]
        %v297 = vld [vmem:[%s239 + $0x1a0] sm:$0xff]
        %v298 = vld [vmem:[%s239 + $0x1a8] sm:$0xff]
        %v299 = vld [vmem:[%s239 + $0x1b0] sm:$0xff]
        %v300 = vld [vmem:[%s239 + $0x1b8] sm:$0xff]
        %v301 = vld [vmem:[%s239 + $0x1c0] sm:$0xff]
        %v302 = vld [vmem:[%s239 + $0x1c8] sm:$0xff]
        %v303 = vld [vmem:[%s239 + $0x1d0] sm:$0xff]
        %v304 = vld [vmem:[%s239 + $0x1d8] sm:$0xff]
        %v305 = vld [vmem:[%s239 + $0x1e0] sm:$0xff]
        %v306 = vld [vmem:[%s239 + $0x1e8] sm:$0xff]
        %v307 = vld [vmem:[%s239 + $0x1f0] sm:$0xff]
        %v308 = vld [vmem:[%s239 + $0x1f8] sm:$0xff]
        %v309 = vld [vmem:[%s239 + $0x200] sm:$0xff]
        %v310 = vld [vmem:[%s239 + $0x208] sm:$0xff]
        %v311 = vld [vmem:[%s239 + $0x210] sm:$0xff]
        %v312 = vld [vmem:[%s239 + $0x218] sm:$0xff]
        %v313 = vld [vmem:[%s239 + $0x220] sm:$0xff]
        %v314 = vld [vmem:[%s239 + $0x228] sm:$0xff]
        %v315 = vld [vmem:[%s239 + $0x230] sm:$0xff]
        %v316 = vld [vmem:[%s239 + $0x238] sm:$0xff]
        %v317 = vld [vmem:[%s239 + $0x240] sm:$0xff]
        %v318 = vld [vmem:[%s239 + $0x248] sm:$0xff]
        %v319 = vld [vmem:[%s239 + $0x250] sm:$0xff]
        %v320 = vld [vmem:[%s239 + $0x258] sm:$0xff]
        %v321 = vld [vmem:[%s239 + $0x260] sm:$0xff]
        %v322 = vld [vmem:[%s239 + $0x268] sm:$0xff]
        %v323 = vld [vmem:[%s239 + $0x270] sm:$0xff]
        %v324 = vld [vmem:[%s239 + $0x278] sm:$0xff]
        %v325 = vld [vmem:[%s239 + $0x280] sm:$0xff]
        %v326 = vld [vmem:[%s239 + $0x288] sm:$0xff]
        %v327 = vld [vmem:[%s239 + $0x290] sm:$0xff]
        %v328 = vld [vmem:[%s239 + $0x298] sm:$0xff]
        %v329 = vld [vmem:[%s239 + $0x2a0] sm:$0xff]
        %v330 = vld [vmem:[%s239 + $0x2a8] sm:$0xff]
        %v331 = vld [vmem:[%s239 + $0x2b0] sm:$0xff]
        %v332 = vld [vmem:[%s239 + $0x2b8] sm:$0xff]
        %v333 = vld [vmem:[%s239 + $0x2c0] sm:$0xff]
        %v334 = vld [vmem:[%s239 + $0x2c8] sm:$0xff]
        %v335 = vld [vmem:[%s239 + $0x2d0] sm:$0xff]
        %v336 = vld [vmem:[%s239 + $0x2d8] sm:$0xff]
        %v337 = vld [vmem:[%s239 + $0x2e0] sm:$0xff]
        %v338 = vld [vmem:[%s239 + $0x2e8] sm:$0xff]
        %v339 = vld [vmem:[%s239 + $0x2f0] sm:$0xff]
        %v340 = vld [vmem:[%s239 + $0x2f8] sm:$0xff]
        %v341 = vld [vmem:[%s239 + $0x300] sm:$0xff]
        %v342 = vld [vmem:[%s239 + $0x308] sm:$0xff]
        %v343 = vld [vmem:[%s239 + $0x310] sm:$0xff]
        %v344 = vld [vmem:[%s239 + $0x318] sm:$0xff]
        %v345 = vld [vmem:[%s239 + $0x320] sm:$0xff]
        %v346 = vld [vmem:[%s239 + $0x328] sm:$0xff]
        %v347 = vld [vmem:[%s239 + $0x330] sm:$0xff]
        %v348 = vld [vmem:[%s239 + $0x338] sm:$0xff]
        %v349 = vld [vmem:[%s239 + $0x340] sm:$0xff]
        %v350 = vld [vmem:[%s239 + $0x348] sm:$0xff]
        %v351 = vld [vmem:[%s239 + $0x350] sm:$0xff]
        %v352 = vld [vmem:[%s239 + $0x358] sm:$0xff]
        %v353 = vld [vmem:[%s239 + $0x360] sm:$0xff]
        %v354 = vld [vmem:[%s239 + $0x368] sm:$0xff]
        %v355 = vld [vmem:[%s239 + $0x370] sm:$0xff]
        %v356 = vld [vmem:[%s239 + $0x378] sm:$0xff]
        %v357 = vld [vmem:[%s239 + $0x380] sm:$0xff]
        %v358 = vld [vmem:[%s239 + $0x388] sm:$0xff]
        %v359 = vld [vmem:[%s239 + $0x390] sm:$0xff]
        %v360 = vld [vmem:[%s239 + $0x398] sm:$0xff]
        %v361 = vld [vmem:[%s239 + $0x3a0] sm:$0xff]
        %v362 = vld [vmem:[%s239 + $0x3a8] sm:$0xff]
        %v363 = vld [vmem:[%s239 + $0x3b0] sm:$0xff]
        %v364 = vld [vmem:[%s239 + $0x3b8] sm:$0xff]
        %v365 = vld [vmem:[%s239 + $0x3c0] sm:$0xff]
        %v366 = vld [vmem:[%s239 + $0x3c8] sm:$0xff]
        %v367 = vld [vmem:[%s239 + $0x3d0] sm:$0xff]
        %v368 = vld [vmem:[%s239 + $0x3d8] sm:$0xff]
        %v369 = vld [vmem:[%s239 + $0x3e0] sm:$0xff]
        %v370 = vld [vmem:[%s239 + $0x3e8] sm:$0xff]
        %v371 = vld [vmem:[%s239 + $0x3f0] sm:$0xff]
        %v372 = vld [vmem:[%s239 + $0x3f8] sm:$0xff]
        %v373 = vld [vmem:[%s2] sm:$0xff]
        %v374 = vld [vmem:[%s2 + $0x8] sm:$0xff]
        %v375 = vld [vmem:[%s2 + $0x10] sm:$0xff]
        %v376 = vld [vmem:[%s2 + $0x18] sm:$0xff]
        %v377 = vld [vmem:[%s2 + $0x20] sm:$0xff]
        %v378 = vld [vmem:[%s2 + $0x28] sm:$0xff]
        %v379 = vld [vmem:[%s2 + $0x30] sm:$0xff]
        %v380 = vld [vmem:[%s2 + $0x38] sm:$0xff]
        %v381 = vld [vmem:[%s3] sm:$0x1]
        %v383 = vlaneseq
        %v384 = vshrl.u32 %v383, 7
        %v385 = vsub.s32 0, %v384
        %v386 = vrot.slane %v381, %v385
        %vm388 = vcmask 523264
        %v390 = vsel %vm388, %v245, 0
        %v393 = vsel %vm388, %v246, 0
        %v396 = vsel %vm388, %v247, 0
        %v399 = vsel %vm388, %v248, 0
        %v402 = vsel %vm388, %v249, 0
        %v405 = vsel %vm388, %v250, 0
        %v408 = vsel %vm388, %v251, 0
        %v411 = vsel %vm388, %v252, 0
        %v414 = vsel %vm388, %v253, 0
        %v417 = vsel %vm388, %v254, 0
        %v420 = vsel %vm388, %v255, 0
        %v423 = vsel %vm388, %v256, 0
        %v426 = vsel %vm388, %v257, 0
        %v429 = vsel %vm388, %v258, 0
        %v432 = vsel %vm388, %v259, 0
        %v435 = vsel %vm388, %v260, 0
        %v438 = vsel %vm388, %v261, 0
        %v441 = vsel %vm388, %v262, 0
        %v444 = vsel %vm388, %v263, 0
        %v447 = vsel %vm388, %v264, 0
        %v450 = vsel %vm388, %v265, 0
        %v453 = vsel %vm388, %v266, 0
        %v456 = vsel %vm388, %v267, 0
        %v459 = vsel %vm388, %v268, 0
        %v462 = vsel %vm388, %v269, 0
        %v465 = vsel %vm388, %v270, 0
        %v468 = vsel %vm388, %v271, 0
        %v471 = vsel %vm388, %v272, 0
        %v474 = vsel %vm388, %v273, 0
        %v477 = vsel %vm388, %v274, 0
        %v480 = vsel %vm388, %v275, 0
        %v483 = vsel %vm388, %v276, 0
        %v486 = vsel %vm388, %v277, 0
        %v489 = vsel %vm388, %v278, 0
        %v492 = vsel %vm388, %v279, 0
        %v495 = vsel %vm388, %v280, 0
        %v498 = vsel %vm388, %v281, 0
        %v501 = vsel %vm388, %v282, 0
        %v504 = vsel %vm388, %v283, 0
        %v507 = vsel %vm388, %v284, 0
        %v510 = vsel %vm388, %v285, 0
        %v513 = vsel %vm388, %v286, 0
        %v516 = vsel %vm388, %v287, 0
        %v519 = vsel %vm388, %v288, 0
        %v522 = vsel %vm388, %v289, 0
        %v525 = vsel %vm388, %v290, 0
        %v528 = vsel %vm388, %v291, 0
        %v531 = vsel %vm388, %v292, 0
        %v534 = vsel %vm388, %v293, 0
        %v537 = vsel %vm388, %v294, 0
        %v540 = vsel %vm388, %v295, 0
        %v543 = vsel %vm388, %v296, 0
        %v546 = vsel %vm388, %v297, 0
        %v549 = vsel %vm388, %v298, 0
        %v552 = vsel %vm388, %v299, 0
        %v555 = vsel %vm388, %v300, 0
        %v558 = vsel %vm388, %v301, 0
        %v561 = vsel %vm388, %v302, 0
        %v564 = vsel %vm388, %v303, 0
        %v567 = vsel %vm388, %v304, 0
        %v570 = vsel %vm388, %v305, 0
        %v573 = vsel %vm388, %v306, 0
        %v576 = vsel %vm388, %v307, 0
        %v579 = vsel %vm388, %v308, 0
        %v582 = vsel %vm388, %v309, 0
        %v585 = vsel %vm388, %v310, 0
        %v588 = vsel %vm388, %v311, 0
        %v591 = vsel %vm388, %v312, 0
        %v594 = vsel %vm388, %v313, 0
        %v597 = vsel %vm388, %v314, 0
        %v600 = vsel %vm388, %v315, 0
        %v603 = vsel %vm388, %v316, 0
        %v606 = vsel %vm388, %v317, 0
        %v609 = vsel %vm388, %v318, 0
        %v612 = vsel %vm388, %v319, 0
        %v615 = vsel %vm388, %v320, 0
        %v618 = vsel %vm388, %v321, 0
        %v621 = vsel %vm388, %v322, 0
        %v624 = vsel %vm388, %v323, 0
        %v627 = vsel %vm388, %v324, 0
        %v630 = vsel %vm388, %v325, 0
        %v633 = vsel %vm388, %v326, 0
        %v636 = vsel %vm388, %v327, 0
        %v639 = vsel %vm388, %v328, 0
        %v642 = vsel %vm388, %v329, 0
        %v645 = vsel %vm388, %v330, 0
        %v648 = vsel %vm388, %v331, 0
        %v651 = vsel %vm388, %v332, 0
        %v654 = vsel %vm388, %v333, 0
        %v657 = vsel %vm388, %v334, 0
        %v660 = vsel %vm388, %v335, 0
        %v663 = vsel %vm388, %v336, 0
        %v666 = vsel %vm388, %v337, 0
        %v669 = vsel %vm388, %v338, 0
        %v672 = vsel %vm388, %v339, 0
        %v675 = vsel %vm388, %v340, 0
        %v678 = vsel %vm388, %v341, 0
        %v681 = vsel %vm388, %v342, 0
        %v684 = vsel %vm388, %v343, 0
        %v687 = vsel %vm388, %v344, 0
        %v690 = vsel %vm388, %v345, 0
        %v693 = vsel %vm388, %v346, 0
        %v696 = vsel %vm388, %v347, 0
        %v699 = vsel %vm388, %v348, 0
        %v702 = vsel %vm388, %v349, 0
        %v705 = vsel %vm388, %v350, 0
        %v708 = vsel %vm388, %v351, 0
        %v711 = vsel %vm388, %v352, 0
        %v714 = vsel %vm388, %v353, 0
        %v717 = vsel %vm388, %v354, 0
        %v720 = vsel %vm388, %v355, 0
        %v723 = vsel %vm388, %v356, 0
        %v726 = vsel %vm388, %v357, 0
        %v729 = vsel %vm388, %v358, 0
        %v732 = vsel %vm388, %v359, 0
        %v735 = vsel %vm388, %v360, 0
        %v738 = vsel %vm388, %v361, 0
        %v741 = vsel %vm388, %v362, 0
        %v744 = vsel %vm388, %v363, 0
        %v747 = vsel %vm388, %v364, 0
        %v750 = vsel %vm388, %v365, 0
        %v753 = vsel %vm388, %v366, 0
        %v756 = vsel %vm388, %v367, 0
        %v759 = vsel %vm388, %v368, 0
        %v762 = vsel %vm388, %v369, 0
        %v765 = vsel %vm388, %v370, 0
        %v768 = vsel %vm388, %v371, 0
        %v771 = vsel %vm388, %v372, 0
        %773 = vmatprep.subr.mxu0 0.0
        %774 = vmatpush1.msra.mxu0 0.0
        %775 = vmatprep.subr.mxu0 0.0
        %776 = vmatpush1.msra.mxu0 0.0
        %777 = vmatprep.subr.mxu0 0.0
        %778 = vmatpush1.msra.mxu0 0.0
        %779 = vmatprep.subr.mxu0 0.0
        %780 = vmatpush1.msra.mxu0 0.0
        %781 = vmatprep.subr.mxu0 0.0
        %782 = vmatpush1.msra.mxu0 0.0
        %783 = vmatprep.subr.mxu0 0.0
        %784 = vmatpush1.msra.mxu0 0.0
        %785 = vmatprep.subr.mxu0 0.0
        %786 = vmatpush1.msra.mxu0 0.0
        %787 = vmatprep.subr.mxu0 0.0
        %788 = vmatpush1.msra.mxu0 0.0
        %789 = vmatprep.subr.mxu0 0.0
        %790 = vmatpush1.msra.mxu0 %v380
        %791 = vmatprep.subr.mxu0 0.0
        %792 = vmatpush1.msra.mxu0 %v379
        %793 = vmatprep.subr.mxu0 0.0
        %794 = vmatpush1.msra.mxu0 %v378
        %795 = vmatprep.subr.mxu0 0.0
        %796 = vmatpush1.msra.mxu0 %v377
        %797 = vmatprep.subr.mxu0 0.0
        %798 = vmatpush1.msra.mxu0 %v376
        %799 = vmatprep.subr.mxu0 0.0
        %800 = vmatpush1.msra.mxu0 %v375
        %801 = vmatprep.subr.mxu0 0.0
        %802 = vmatpush1.msra.mxu0 %v374
        %803 = vmatprep.subr.mxu0 0.0
        %804 = vmatpush1.msra.mxu0 %v373
        %805 = vmatprep.subr.mxu0 0.0
        %806 = vmatpush2.msra.mxu0 0.0
        %807 = vmatprep.subr.mxu0 0.0
        %808 = vmatpush2.msra.mxu0 0.0
        %809 = vmatprep.subr.mxu0 0.0
        %810 = vmatpush2.msra.mxu0 0.0
        %811 = vmatprep.subr.mxu0 0.0
        %812 = vmatpush2.msra.mxu0 0.0
        %813 = vmatprep.subr.mxu0 0.0
        %814 = vmatpush2.msra.mxu0 0.0
        %815 = vmatprep.subr.mxu0 0.0
        %816 = vmatpush2.msra.mxu0 0.0
        %817 = vmatprep.subr.mxu0 0.0
        %818 = vmatpush2.msra.mxu0 0.0
        %819 = vmatprep.subr.mxu0 0.0
        %820 = vmatpush2.msra.mxu0 0.0
        %821 = vmatprep.subr.mxu0 0.0
        %822 = vmatpush2.msra.mxu0 0.0
        %823 = vmatprep.subr.mxu0 0.0
        %824 = vmatpush2.msra.mxu0 0.0
        %825 = vmatprep.subr.mxu0 0.0
        %826 = vmatpush2.msra.mxu0 0.0
        %827 = vmatprep.subr.mxu0 0.0
        %828 = vmatpush2.msra.mxu0 0.0
        %829 = vmatprep.subr.mxu0 0.0
        %830 = vmatpush2.msra.mxu0 0.0
        %831 = vmatprep.subr.mxu0 0.0
        %832 = vmatpush2.msra.mxu0 0.0
        %833 = vmatprep.subr.mxu0 0.0
        %834 = vmatpush2.msra.mxu0 0.0
        %835 = vmatprep.subr.mxu0 0.0
        %836 = vmatpush2.msra.mxu0 0.0
        %837 = vmatprep.mubr.f32.mxu0 0.0
        %838 = vmatmul.mubr.f32.gmra.mxu0 %v390
        %v839 = vpop.f32.mrf.mxu0
        %v840 = vadd.f32 %v386, %v839
        %v841 = vpop.f32.mrf.mxu0
        %842 = vmatprep.mubr.f32.mxu0 0.0
        %843 = vmatmul.mubr.f32.gmra.mxu0 %v393
        %v844 = vpop.f32.mrf.mxu0
        %v845 = vadd.f32 %v386, %v844
        %v846 = vpop.f32.mrf.mxu0
        %847 = vmatprep.mubr.f32.mxu0 0.0
        %848 = vmatmul.mubr.f32.gmra.mxu0 %v396
        %v849 = vpop.f32.mrf.mxu0
        %v850 = vadd.f32 %v386, %v849
        %v851 = vpop.f32.mrf.mxu0
        %852 = vmatprep.mubr.f32.mxu0 0.0
        %853 = vmatmul.mubr.f32.gmra.mxu0 %v399
        %v854 = vpop.f32.mrf.mxu0
        %v855 = vadd.f32 %v386, %v854
        %v856 = vpop.f32.mrf.mxu0
        %857 = vmatprep.mubr.f32.mxu0 0.0
        %858 = vmatmul.mubr.f32.gmra.mxu0 %v402
        %v859 = vpop.f32.mrf.mxu0
        %v860 = vadd.f32 %v386, %v859
        %v861 = vpop.f32.mrf.mxu0
        %862 = vmatprep.mubr.f32.mxu0 0.0
        %863 = vmatmul.mubr.f32.gmra.mxu0 %v405
        %v864 = vpop.f32.mrf.mxu0
        %v865 = vadd.f32 %v386, %v864
        %v866 = vpop.f32.mrf.mxu0
        %867 = vmatprep.mubr.f32.mxu0 0.0
        %868 = vmatmul.mubr.f32.gmra.mxu0 %v408
        %v869 = vpop.f32.mrf.mxu0
        %v870 = vadd.f32 %v386, %v869
        %v871 = vpop.f32.mrf.mxu0
        %872 = vmatprep.mubr.f32.mxu0 0.0
        %873 = vmatmul.mubr.f32.gmra.mxu0 %v411
        %v874 = vpop.f32.mrf.mxu0
        %v875 = vadd.f32 %v386, %v874
        %v876 = vpop.f32.mrf.mxu0
        %877 = vmatprep.mubr.f32.mxu0 0.0
        %878 = vmatmul.mubr.f32.gmra.mxu0 %v414
        %v879 = vpop.f32.mrf.mxu0
        %v880 = vadd.f32 %v386, %v879
        %v881 = vpop.f32.mrf.mxu0
        %882 = vmatprep.mubr.f32.mxu0 0.0
        %883 = vmatmul.mubr.f32.gmra.mxu0 %v417
        %v884 = vpop.f32.mrf.mxu0
        %v885 = vadd.f32 %v386, %v884
        %v886 = vpop.f32.mrf.mxu0
        %887 = vmatprep.mubr.f32.mxu0 0.0
        %888 = vmatmul.mubr.f32.gmra.mxu0 %v420
        %v889 = vpop.f32.mrf.mxu0
        %v890 = vadd.f32 %v386, %v889
        %v891 = vpop.f32.mrf.mxu0
        %892 = vmatprep.mubr.f32.mxu0 0.0
        %893 = vmatmul.mubr.f32.gmra.mxu0 %v423
        %v894 = vpop.f32.mrf.mxu0
        %v895 = vadd.f32 %v386, %v894
        %v896 = vpop.f32.mrf.mxu0
        %897 = vmatprep.mubr.f32.mxu0 0.0
        %898 = vmatmul.mubr.f32.gmra.mxu0 %v426
        %v899 = vpop.f32.mrf.mxu0
        %v900 = vadd.f32 %v386, %v899
        %v901 = vpop.f32.mrf.mxu0
        %902 = vmatprep.mubr.f32.mxu0 0.0
        %903 = vmatmul.mubr.f32.gmra.mxu0 %v429
        %v904 = vpop.f32.mrf.mxu0
        %v905 = vadd.f32 %v386, %v904
        %v906 = vpop.f32.mrf.mxu0
        %907 = vmatprep.mubr.f32.mxu0 0.0
        %908 = vmatmul.mubr.f32.gmra.mxu0 %v432
        %v909 = vpop.f32.mrf.mxu0
        %v910 = vadd.f32 %v386, %v909
        %v911 = vpop.f32.mrf.mxu0
        %912 = vmatprep.mubr.f32.mxu0 0.0
        %913 = vmatmul.mubr.f32.gmra.mxu0 %v435
        %v914 = vpop.f32.mrf.mxu0
        %v915 = vadd.f32 %v386, %v914
        %v916 = vpop.f32.mrf.mxu0
        %917 = vmatprep.mubr.f32.mxu0 0.0
        %918 = vmatmul.mubr.f32.gmra.mxu0 %v438
        %v919 = vpop.f32.mrf.mxu0
        %v920 = vadd.f32 %v386, %v919
        %v921 = vpop.f32.mrf.mxu0
        %922 = vmatprep.mubr.f32.mxu0 0.0
        %923 = vmatmul.mubr.f32.gmra.mxu0 %v441
        %v924 = vpop.f32.mrf.mxu0
        %v925 = vadd.f32 %v386, %v924
        %v926 = vpop.f32.mrf.mxu0
        %927 = vmatprep.mubr.f32.mxu0 0.0
        %928 = vmatmul.mubr.f32.gmra.mxu0 %v444
        %v929 = vpop.f32.mrf.mxu0
        %v930 = vadd.f32 %v386, %v929
        %v931 = vpop.f32.mrf.mxu0
        %932 = vmatprep.mubr.f32.mxu0 0.0
        %933 = vmatmul.mubr.f32.gmra.mxu0 %v447
        %v934 = vpop.f32.mrf.mxu0
        %v935 = vadd.f32 %v386, %v934
        %v936 = vpop.f32.mrf.mxu0
        %937 = vmatprep.mubr.f32.mxu0 0.0
        %938 = vmatmul.mubr.f32.gmra.mxu0 %v450
        %v939 = vpop.f32.mrf.mxu0
        %v940 = vadd.f32 %v386, %v939
        %v941 = vpop.f32.mrf.mxu0
        %942 = vmatprep.mubr.f32.mxu0 0.0
        %943 = vmatmul.mubr.f32.gmra.mxu0 %v453
        %v944 = vpop.f32.mrf.mxu0
        %v945 = vadd.f32 %v386, %v944
        %v946 = vpop.f32.mrf.mxu0
        %947 = vmatprep.mubr.f32.mxu0 0.0
        %948 = vmatmul.mubr.f32.gmra.mxu0 %v456
        %v949 = vpop.f32.mrf.mxu0
        %v950 = vadd.f32 %v386, %v949
        %v951 = vpop.f32.mrf.mxu0
        %952 = vmatprep.mubr.f32.mxu0 0.0
        %953 = vmatmul.mubr.f32.gmra.mxu0 %v459
        %v954 = vpop.f32.mrf.mxu0
        %v955 = vadd.f32 %v386, %v954
        %v956 = vpop.f32.mrf.mxu0
        %957 = vmatprep.mubr.f32.mxu0 0.0
        %958 = vmatmul.mubr.f32.gmra.mxu0 %v462
        %v959 = vpop.f32.mrf.mxu0
        %v960 = vadd.f32 %v386, %v959
        %v961 = vpop.f32.mrf.mxu0
        %962 = vmatprep.mubr.f32.mxu0 0.0
        %963 = vmatmul.mubr.f32.gmra.mxu0 %v465
        %v964 = vpop.f32.mrf.mxu0
        %v965 = vadd.f32 %v386, %v964
        %v966 = vpop.f32.mrf.mxu0
        %967 = vmatprep.mubr.f32.mxu0 0.0
        %968 = vmatmul.mubr.f32.gmra.mxu0 %v468
        %v969 = vpop.f32.mrf.mxu0
        %v970 = vadd.f32 %v386, %v969
        %v971 = vpop.f32.mrf.mxu0
        %972 = vmatprep.mubr.f32.mxu0 0.0
        %973 = vmatmul.mubr.f32.gmra.mxu0 %v471
        %v974 = vpop.f32.mrf.mxu0
        %v975 = vadd.f32 %v386, %v974
        %v976 = vpop.f32.mrf.mxu0
        %977 = vmatprep.mubr.f32.mxu0 0.0
        %978 = vmatmul.mubr.f32.gmra.mxu0 %v474
        %v979 = vpop.f32.mrf.mxu0
        %v980 = vadd.f32 %v386, %v979
        %v981 = vpop.f32.mrf.mxu0
        %982 = vmatprep.mubr.f32.mxu0 0.0
        %983 = vmatmul.mubr.f32.gmra.mxu0 %v477
        %v984 = vpop.f32.mrf.mxu0
        %v985 = vadd.f32 %v386, %v984
        %v986 = vpop.f32.mrf.mxu0
        %987 = vmatprep.mubr.f32.mxu0 0.0
        %988 = vmatmul.mubr.f32.gmra.mxu0 %v480
        %v989 = vpop.f32.mrf.mxu0
        %v990 = vadd.f32 %v386, %v989
        %v991 = vpop.f32.mrf.mxu0
        %992 = vmatprep.mubr.f32.mxu0 0.0
        %993 = vmatmul.mubr.f32.gmra.mxu0 %v483
        %v994 = vpop.f32.mrf.mxu0
        %v995 = vadd.f32 %v386, %v994
        %v996 = vpop.f32.mrf.mxu0
        %997 = vmatprep.mubr.f32.mxu0 0.0
        %998 = vmatmul.mubr.f32.gmra.mxu0 %v486
        %v999 = vpop.f32.mrf.mxu0
        %v1000 = vadd.f32 %v386, %v999
        %v1001 = vpop.f32.mrf.mxu0
        %1002 = vmatprep.mubr.f32.mxu0 0.0
        %1003 = vmatmul.mubr.f32.gmra.mxu0 %v489
        %v1004 = vpop.f32.mrf.mxu0
        %v1005 = vadd.f32 %v386, %v1004
        %v1006 = vpop.f32.mrf.mxu0
        %1007 = vmatprep.mubr.f32.mxu0 0.0
        %1008 = vmatmul.mubr.f32.gmra.mxu0 %v492
        %v1009 = vpop.f32.mrf.mxu0
        %v1010 = vadd.f32 %v386, %v1009
        %v1011 = vpop.f32.mrf.mxu0
        %1012 = vmatprep.mubr.f32.mxu0 0.0
        %1013 = vmatmul.mubr.f32.gmra.mxu0 %v495
        %v1014 = vpop.f32.mrf.mxu0
        %v1015 = vadd.f32 %v386, %v1014
        %v1016 = vpop.f32.mrf.mxu0
        %1017 = vmatprep.mubr.f32.mxu0 0.0
        %1018 = vmatmul.mubr.f32.gmra.mxu0 %v498
        %v1019 = vpop.f32.mrf.mxu0
        %v1020 = vadd.f32 %v386, %v1019
        %v1021 = vpop.f32.mrf.mxu0
        %1022 = vmatprep.mubr.f32.mxu0 0.0
        %1023 = vmatmul.mubr.f32.gmra.mxu0 %v501
        %v1024 = vpop.f32.mrf.mxu0
        %v1025 = vadd.f32 %v386, %v1024
        %v1026 = vpop.f32.mrf.mxu0
        %1027 = vmatprep.mubr.f32.mxu0 0.0
        %1028 = vmatmul.mubr.f32.gmra.mxu0 %v504
        %v1029 = vpop.f32.mrf.mxu0
        %v1030 = vadd.f32 %v386, %v1029
        %v1031 = vpop.f32.mrf.mxu0
        %1032 = vmatprep.mubr.f32.mxu0 0.0
        %1033 = vmatmul.mubr.f32.gmra.mxu0 %v507
        %v1034 = vpop.f32.mrf.mxu0
        %v1035 = vadd.f32 %v386, %v1034
        %v1036 = vpop.f32.mrf.mxu0
        %1037 = vmatprep.mubr.f32.mxu0 0.0
        %1038 = vmatmul.mubr.f32.gmra.mxu0 %v510
        %v1039 = vpop.f32.mrf.mxu0
        %v1040 = vadd.f32 %v386, %v1039
        %v1041 = vpop.f32.mrf.mxu0
        %1042 = vmatprep.mubr.f32.mxu0 0.0
        %1043 = vmatmul.mubr.f32.gmra.mxu0 %v513
        %v1044 = vpop.f32.mrf.mxu0
        %v1045 = vadd.f32 %v386, %v1044
        %v1046 = vpop.f32.mrf.mxu0
        %1047 = vmatprep.mubr.f32.mxu0 0.0
        %1048 = vmatmul.mubr.f32.gmra.mxu0 %v516
        %v1049 = vpop.f32.mrf.mxu0
        %v1050 = vadd.f32 %v386, %v1049
        %v1051 = vpop.f32.mrf.mxu0
        %1052 = vmatprep.mubr.f32.mxu0 0.0
        %1053 = vmatmul.mubr.f32.gmra.mxu0 %v519
        %v1054 = vpop.f32.mrf.mxu0
        %v1055 = vadd.f32 %v386, %v1054
        %v1056 = vpop.f32.mrf.mxu0
        %1057 = vmatprep.mubr.f32.mxu0 0.0
        %1058 = vmatmul.mubr.f32.gmra.mxu0 %v522
        %v1059 = vpop.f32.mrf.mxu0
        %v1060 = vadd.f32 %v386, %v1059
        %v1061 = vpop.f32.mrf.mxu0
        %1062 = vmatprep.mubr.f32.mxu0 0.0
        %1063 = vmatmul.mubr.f32.gmra.mxu0 %v525
        %v1064 = vpop.f32.mrf.mxu0
        %v1065 = vadd.f32 %v386, %v1064
        %v1066 = vpop.f32.mrf.mxu0
        %1067 = vmatprep.mubr.f32.mxu0 0.0
        %1068 = vmatmul.mubr.f32.gmra.mxu0 %v528
        %v1069 = vpop.f32.mrf.mxu0
        %v1070 = vadd.f32 %v386, %v1069
        %v1071 = vpop.f32.mrf.mxu0
        %1072 = vmatprep.mubr.f32.mxu0 0.0
        %1073 = vmatmul.mubr.f32.gmra.mxu0 %v531
        %v1074 = vpop.f32.mrf.mxu0
        %v1075 = vadd.f32 %v386, %v1074
        %v1076 = vpop.f32.mrf.mxu0
        %1077 = vmatprep.mubr.f32.mxu0 0.0
        %1078 = vmatmul.mubr.f32.gmra.mxu0 %v534
        %v1079 = vpop.f32.mrf.mxu0
        %v1080 = vadd.f32 %v386, %v1079
        %v1081 = vpop.f32.mrf.mxu0
        %1082 = vmatprep.mubr.f32.mxu0 0.0
        %1083 = vmatmul.mubr.f32.gmra.mxu0 %v537
        %v1084 = vpop.f32.mrf.mxu0
        %v1085 = vadd.f32 %v386, %v1084
        %v1086 = vpop.f32.mrf.mxu0
        %1087 = vmatprep.mubr.f32.mxu0 0.0
        %1088 = vmatmul.mubr.f32.gmra.mxu0 %v540
        %v1089 = vpop.f32.mrf.mxu0
        %v1090 = vadd.f32 %v386, %v1089
        %v1091 = vpop.f32.mrf.mxu0
        %1092 = vmatprep.mubr.f32.mxu0 0.0
        %1093 = vmatmul.mubr.f32.gmra.mxu0 %v543
        %v1094 = vpop.f32.mrf.mxu0
        %v1095 = vadd.f32 %v386, %v1094
        %v1096 = vpop.f32.mrf.mxu0
        %1097 = vmatprep.mubr.f32.mxu0 0.0
        %1098 = vmatmul.mubr.f32.gmra.mxu0 %v546
        %v1099 = vpop.f32.mrf.mxu0
        %v1100 = vadd.f32 %v386, %v1099
        %v1101 = vpop.f32.mrf.mxu0
        %1102 = vmatprep.mubr.f32.mxu0 0.0
        %1103 = vmatmul.mubr.f32.gmra.mxu0 %v549
        %v1104 = vpop.f32.mrf.mxu0
        %v1105 = vadd.f32 %v386, %v1104
        %v1106 = vpop.f32.mrf.mxu0
        %1107 = vmatprep.mubr.f32.mxu0 0.0
        %1108 = vmatmul.mubr.f32.gmra.mxu0 %v552
        %v1109 = vpop.f32.mrf.mxu0
        %v1110 = vadd.f32 %v386, %v1109
        %v1111 = vpop.f32.mrf.mxu0
        %1112 = vmatprep.mubr.f32.mxu0 0.0
        %1113 = vmatmul.mubr.f32.gmra.mxu0 %v555
        %v1114 = vpop.f32.mrf.mxu0
        %v1115 = vadd.f32 %v386, %v1114
        %v1116 = vpop.f32.mrf.mxu0
        %1117 = vmatprep.mubr.f32.mxu0 0.0
        %1118 = vmatmul.mubr.f32.gmra.mxu0 %v558
        %v1119 = vpop.f32.mrf.mxu0
        %v1120 = vadd.f32 %v386, %v1119
        %v1121 = vpop.f32.mrf.mxu0
        %1122 = vmatprep.mubr.f32.mxu0 0.0
        %1123 = vmatmul.mubr.f32.gmra.mxu0 %v561
        %v1124 = vpop.f32.mrf.mxu0
        %v1125 = vadd.f32 %v386, %v1124
        %v1126 = vpop.f32.mrf.mxu0
        %1127 = vmatprep.mubr.f32.mxu0 0.0
        %1128 = vmatmul.mubr.f32.gmra.mxu0 %v564
        %v1129 = vpop.f32.mrf.mxu0
        %v1130 = vadd.f32 %v386, %v1129
        %v1131 = vpop.f32.mrf.mxu0
        %1132 = vmatprep.mubr.f32.mxu0 0.0
        %1133 = vmatmul.mubr.f32.gmra.mxu0 %v567
        %v1134 = vpop.f32.mrf.mxu0
        %v1135 = vadd.f32 %v386, %v1134
        %v1136 = vpop.f32.mrf.mxu0
        %1137 = vmatprep.mubr.f32.mxu0 0.0
        %1138 = vmatmul.mubr.f32.gmra.mxu0 %v570
        %v1139 = vpop.f32.mrf.mxu0
        %v1140 = vadd.f32 %v386, %v1139
        %v1141 = vpop.f32.mrf.mxu0
        %1142 = vmatprep.mubr.f32.mxu0 0.0
        %1143 = vmatmul.mubr.f32.gmra.mxu0 %v573
        %v1144 = vpop.f32.mrf.mxu0
        %v1145 = vadd.f32 %v386, %v1144
        %v1146 = vpop.f32.mrf.mxu0
        %1147 = vmatprep.mubr.f32.mxu0 0.0
        %1148 = vmatmul.mubr.f32.gmra.mxu0 %v576
        %v1149 = vpop.f32.mrf.mxu0
        %v1150 = vadd.f32 %v386, %v1149
        %v1151 = vpop.f32.mrf.mxu0
        %1152 = vmatprep.mubr.f32.mxu0 0.0
        %1153 = vmatmul.mubr.f32.gmra.mxu0 %v579
        %v1154 = vpop.f32.mrf.mxu0
        %v1155 = vadd.f32 %v386, %v1154
        %v1156 = vpop.f32.mrf.mxu0
        %1157 = vmatprep.mubr.f32.mxu0 0.0
        %1158 = vmatmul.mubr.f32.gmra.mxu0 %v582
        %v1159 = vpop.f32.mrf.mxu0
        %v1160 = vadd.f32 %v386, %v1159
        %v1161 = vpop.f32.mrf.mxu0
        %1162 = vmatprep.mubr.f32.mxu0 0.0
        %1163 = vmatmul.mubr.f32.gmra.mxu0 %v585
        %v1164 = vpop.f32.mrf.mxu0
        %v1165 = vadd.f32 %v386, %v1164
        %v1166 = vpop.f32.mrf.mxu0
        %1167 = vmatprep.mubr.f32.mxu0 0.0
        %1168 = vmatmul.mubr.f32.gmra.mxu0 %v588
        %v1169 = vpop.f32.mrf.mxu0
        %v1170 = vadd.f32 %v386, %v1169
        %v1171 = vpop.f32.mrf.mxu0
        %1172 = vmatprep.mubr.f32.mxu0 0.0
        %1173 = vmatmul.mubr.f32.gmra.mxu0 %v591
        %v1174 = vpop.f32.mrf.mxu0
        %v1175 = vadd.f32 %v386, %v1174
        %v1176 = vpop.f32.mrf.mxu0
        %1177 = vmatprep.mubr.f32.mxu0 0.0
        %1178 = vmatmul.mubr.f32.gmra.mxu0 %v594
        %v1179 = vpop.f32.mrf.mxu0
        %v1180 = vadd.f32 %v386, %v1179
        %v1181 = vpop.f32.mrf.mxu0
        %1182 = vmatprep.mubr.f32.mxu0 0.0
        %1183 = vmatmul.mubr.f32.gmra.mxu0 %v597
        %v1184 = vpop.f32.mrf.mxu0
        %v1185 = vadd.f32 %v386, %v1184
        %v1186 = vpop.f32.mrf.mxu0
        %1187 = vmatprep.mubr.f32.mxu0 0.0
        %1188 = vmatmul.mubr.f32.gmra.mxu0 %v600
        %v1189 = vpop.f32.mrf.mxu0
        %v1190 = vadd.f32 %v386, %v1189
        %v1191 = vpop.f32.mrf.mxu0
        %1192 = vmatprep.mubr.f32.mxu0 0.0
        %1193 = vmatmul.mubr.f32.gmra.mxu0 %v603
        %v1194 = vpop.f32.mrf.mxu0
        %v1195 = vadd.f32 %v386, %v1194
        %v1196 = vpop.f32.mrf.mxu0
        %1197 = vmatprep.mubr.f32.mxu0 0.0
        %1198 = vmatmul.mubr.f32.gmra.mxu0 %v606
        %v1199 = vpop.f32.mrf.mxu0
        %v1200 = vadd.f32 %v386, %v1199
        %v1201 = vpop.f32.mrf.mxu0
        %1202 = vmatprep.mubr.f32.mxu0 0.0
        %1203 = vmatmul.mubr.f32.gmra.mxu0 %v609
        %v1204 = vpop.f32.mrf.mxu0
        %v1205 = vadd.f32 %v386, %v1204
        %v1206 = vpop.f32.mrf.mxu0
        %1207 = vmatprep.mubr.f32.mxu0 0.0
        %1208 = vmatmul.mubr.f32.gmra.mxu0 %v612
        %v1209 = vpop.f32.mrf.mxu0
        %v1210 = vadd.f32 %v386, %v1209
        %v1211 = vpop.f32.mrf.mxu0
        %1212 = vmatprep.mubr.f32.mxu0 0.0
        %1213 = vmatmul.mubr.f32.gmra.mxu0 %v615
        %v1214 = vpop.f32.mrf.mxu0
        %v1215 = vadd.f32 %v386, %v1214
        %v1216 = vpop.f32.mrf.mxu0
        %1217 = vmatprep.mubr.f32.mxu0 0.0
        %1218 = vmatmul.mubr.f32.gmra.mxu0 %v618
        %v1219 = vpop.f32.mrf.mxu0
        %v1220 = vadd.f32 %v386, %v1219
        %v1221 = vpop.f32.mrf.mxu0
        %1222 = vmatprep.mubr.f32.mxu0 0.0
        %1223 = vmatmul.mubr.f32.gmra.mxu0 %v621
        %v1224 = vpop.f32.mrf.mxu0
        %v1225 = vadd.f32 %v386, %v1224
        %v1226 = vpop.f32.mrf.mxu0
        %1227 = vmatprep.mubr.f32.mxu0 0.0
        %1228 = vmatmul.mubr.f32.gmra.mxu0 %v624
        %v1229 = vpop.f32.mrf.mxu0
        %v1230 = vadd.f32 %v386, %v1229
        %v1231 = vpop.f32.mrf.mxu0
        %1232 = vmatprep.mubr.f32.mxu0 0.0
        %1233 = vmatmul.mubr.f32.gmra.mxu0 %v627
        %v1234 = vpop.f32.mrf.mxu0
        %v1235 = vadd.f32 %v386, %v1234
        %v1236 = vpop.f32.mrf.mxu0
        %1237 = vmatprep.mubr.f32.mxu0 0.0
        %1238 = vmatmul.mubr.f32.gmra.mxu0 %v630
        %v1239 = vpop.f32.mrf.mxu0
        %v1240 = vadd.f32 %v386, %v1239
        %v1241 = vpop.f32.mrf.mxu0
        %1242 = vmatprep.mubr.f32.mxu0 0.0
        %1243 = vmatmul.mubr.f32.gmra.mxu0 %v633
        %v1244 = vpop.f32.mrf.mxu0
        %v1245 = vadd.f32 %v386, %v1244
        %v1246 = vpop.f32.mrf.mxu0
        %1247 = vmatprep.mubr.f32.mxu0 0.0
        %1248 = vmatmul.mubr.f32.gmra.mxu0 %v636
        %v1249 = vpop.f32.mrf.mxu0
        %v1250 = vadd.f32 %v386, %v1249
        %v1251 = vpop.f32.mrf.mxu0
        %1252 = vmatprep.mubr.f32.mxu0 0.0
        %1253 = vmatmul.mubr.f32.gmra.mxu0 %v639
        %v1254 = vpop.f32.mrf.mxu0
        %v1255 = vadd.f32 %v386, %v1254
        %v1256 = vpop.f32.mrf.mxu0
        %1257 = vmatprep.mubr.f32.mxu0 0.0
        %1258 = vmatmul.mubr.f32.gmra.mxu0 %v642
        %v1259 = vpop.f32.mrf.mxu0
        %v1260 = vadd.f32 %v386, %v1259
        %v1261 = vpop.f32.mrf.mxu0
        %1262 = vmatprep.mubr.f32.mxu0 0.0
        %1263 = vmatmul.mubr.f32.gmra.mxu0 %v645
        %v1264 = vpop.f32.mrf.mxu0
        %v1265 = vadd.f32 %v386, %v1264
        %v1266 = vpop.f32.mrf.mxu0
        %1267 = vmatprep.mubr.f32.mxu0 0.0
        %1268 = vmatmul.mubr.f32.gmra.mxu0 %v648
        %v1269 = vpop.f32.mrf.mxu0
        %v1270 = vadd.f32 %v386, %v1269
        %v1271 = vpop.f32.mrf.mxu0
        %1272 = vmatprep.mubr.f32.mxu0 0.0
        %1273 = vmatmul.mubr.f32.gmra.mxu0 %v651
        %v1274 = vpop.f32.mrf.mxu0
        %v1275 = vadd.f32 %v386, %v1274
        %v1276 = vpop.f32.mrf.mxu0
        %1277 = vmatprep.mubr.f32.mxu0 0.0
        %1278 = vmatmul.mubr.f32.gmra.mxu0 %v654
        %v1279 = vpop.f32.mrf.mxu0
        %v1280 = vadd.f32 %v386, %v1279
        %v1281 = vpop.f32.mrf.mxu0
        %1282 = vmatprep.mubr.f32.mxu0 0.0
        %1283 = vmatmul.mubr.f32.gmra.mxu0 %v657
        %v1284 = vpop.f32.mrf.mxu0
        %v1285 = vadd.f32 %v386, %v1284
        %v1286 = vpop.f32.mrf.mxu0
        %1287 = vmatprep.mubr.f32.mxu0 0.0
        %1288 = vmatmul.mubr.f32.gmra.mxu0 %v660
        %v1289 = vpop.f32.mrf.mxu0
        %v1290 = vadd.f32 %v386, %v1289
        %v1291 = vpop.f32.mrf.mxu0
        %1292 = vmatprep.mubr.f32.mxu0 0.0
        %1293 = vmatmul.mubr.f32.gmra.mxu0 %v663
        %v1294 = vpop.f32.mrf.mxu0
        %v1295 = vadd.f32 %v386, %v1294
        %v1296 = vpop.f32.mrf.mxu0
        %1297 = vmatprep.mubr.f32.mxu0 0.0
        %1298 = vmatmul.mubr.f32.gmra.mxu0 %v666
        %v1299 = vpop.f32.mrf.mxu0
        %v1300 = vadd.f32 %v386, %v1299
        %v1301 = vpop.f32.mrf.mxu0
        %1302 = vmatprep.mubr.f32.mxu0 0.0
        %1303 = vmatmul.mubr.f32.gmra.mxu0 %v669
        %v1304 = vpop.f32.mrf.mxu0
        %v1305 = vadd.f32 %v386, %v1304
        %v1306 = vpop.f32.mrf.mxu0
        %1307 = vmatprep.mubr.f32.mxu0 0.0
        %1308 = vmatmul.mubr.f32.gmra.mxu0 %v672
        %v1309 = vpop.f32.mrf.mxu0
        %v1310 = vadd.f32 %v386, %v1309
        %v1311 = vpop.f32.mrf.mxu0
        %1312 = vmatprep.mubr.f32.mxu0 0.0
        %1313 = vmatmul.mubr.f32.gmra.mxu0 %v675
        %v1314 = vpop.f32.mrf.mxu0
        %v1315 = vadd.f32 %v386, %v1314
        %v1316 = vpop.f32.mrf.mxu0
        %1317 = vmatprep.mubr.f32.mxu0 0.0
        %1318 = vmatmul.mubr.f32.gmra.mxu0 %v678
        %v1319 = vpop.f32.mrf.mxu0
        %v1320 = vadd.f32 %v386, %v1319
        %v1321 = vpop.f32.mrf.mxu0
        %1322 = vmatprep.mubr.f32.mxu0 0.0
        %1323 = vmatmul.mubr.f32.gmra.mxu0 %v681
        %v1324 = vpop.f32.mrf.mxu0
        %v1325 = vadd.f32 %v386, %v1324
        %v1326 = vpop.f32.mrf.mxu0
        %1327 = vmatprep.mubr.f32.mxu0 0.0
        %1328 = vmatmul.mubr.f32.gmra.mxu0 %v684
        %v1329 = vpop.f32.mrf.mxu0
        %v1330 = vadd.f32 %v386, %v1329
        %v1331 = vpop.f32.mrf.mxu0
        %1332 = vmatprep.mubr.f32.mxu0 0.0
        %1333 = vmatmul.mubr.f32.gmra.mxu0 %v687
        %v1334 = vpop.f32.mrf.mxu0
        %v1335 = vadd.f32 %v386, %v1334
        %v1336 = vpop.f32.mrf.mxu0
        %1337 = vmatprep.mubr.f32.mxu0 0.0
        %1338 = vmatmul.mubr.f32.gmra.mxu0 %v690
        %v1339 = vpop.f32.mrf.mxu0
        %v1340 = vadd.f32 %v386, %v1339
        %v1341 = vpop.f32.mrf.mxu0
        %1342 = vmatprep.mubr.f32.mxu0 0.0
        %1343 = vmatmul.mubr.f32.gmra.mxu0 %v693
        %v1344 = vpop.f32.mrf.mxu0
        %v1345 = vadd.f32 %v386, %v1344
        %v1346 = vpop.f32.mrf.mxu0
        %1347 = vmatprep.mubr.f32.mxu0 0.0
        %1348 = vmatmul.mubr.f32.gmra.mxu0 %v696
        %v1349 = vpop.f32.mrf.mxu0
        %v1350 = vadd.f32 %v386, %v1349
        %v1351 = vpop.f32.mrf.mxu0
        %1352 = vmatprep.mubr.f32.mxu0 0.0
        %1353 = vmatmul.mubr.f32.gmra.mxu0 %v699
        %v1354 = vpop.f32.mrf.mxu0
        %v1355 = vadd.f32 %v386, %v1354
        %v1356 = vpop.f32.mrf.mxu0
        %1357 = vmatprep.mubr.f32.mxu0 0.0
        %1358 = vmatmul.mubr.f32.gmra.mxu0 %v702
        %v1359 = vpop.f32.mrf.mxu0
        %v1360 = vadd.f32 %v386, %v1359
        %v1361 = vpop.f32.mrf.mxu0
        %1362 = vmatprep.mubr.f32.mxu0 0.0
        %1363 = vmatmul.mubr.f32.gmra.mxu0 %v705
        %v1364 = vpop.f32.mrf.mxu0
        %v1365 = vadd.f32 %v386, %v1364
        %v1366 = vpop.f32.mrf.mxu0
        %1367 = vmatprep.mubr.f32.mxu0 0.0
        %1368 = vmatmul.mubr.f32.gmra.mxu0 %v708
        %v1369 = vpop.f32.mrf.mxu0
        %v1370 = vadd.f32 %v386, %v1369
        %v1371 = vpop.f32.mrf.mxu0
        %1372 = vmatprep.mubr.f32.mxu0 0.0
        %1373 = vmatmul.mubr.f32.gmra.mxu0 %v711
        %v1374 = vpop.f32.mrf.mxu0
        %v1375 = vadd.f32 %v386, %v1374
        %v1376 = vpop.f32.mrf.mxu0
        %1377 = vmatprep.mubr.f32.mxu0 0.0
        %1378 = vmatmul.mubr.f32.gmra.mxu0 %v714
        %v1379 = vpop.f32.mrf.mxu0
        %v1380 = vadd.f32 %v386, %v1379
        %v1381 = vpop.f32.mrf.mxu0
        %1382 = vmatprep.mubr.f32.mxu0 0.0
        %1383 = vmatmul.mubr.f32.gmra.mxu0 %v717
        %v1384 = vpop.f32.mrf.mxu0
        %v1385 = vadd.f32 %v386, %v1384
        %v1386 = vpop.f32.mrf.mxu0
        %1387 = vmatprep.mubr.f32.mxu0 0.0
        %1388 = vmatmul.mubr.f32.gmra.mxu0 %v720
        %v1389 = vpop.f32.mrf.mxu0
        %v1390 = vadd.f32 %v386, %v1389
        %v1391 = vpop.f32.mrf.mxu0
        %1392 = vmatprep.mubr.f32.mxu0 0.0
        %1393 = vmatmul.mubr.f32.gmra.mxu0 %v723
        %v1394 = vpop.f32.mrf.mxu0
        %v1395 = vadd.f32 %v386, %v1394
        %v1396 = vpop.f32.mrf.mxu0
        %1397 = vmatprep.mubr.f32.mxu0 0.0
        %1398 = vmatmul.mubr.f32.gmra.mxu0 %v726
        %v1399 = vpop.f32.mrf.mxu0
        %v1400 = vadd.f32 %v386, %v1399
        %v1401 = vpop.f32.mrf.mxu0
        %1402 = vmatprep.mubr.f32.mxu0 0.0
        %1403 = vmatmul.mubr.f32.gmra.mxu0 %v729
        %v1404 = vpop.f32.mrf.mxu0
        %v1405 = vadd.f32 %v386, %v1404
        %v1406 = vpop.f32.mrf.mxu0
        %1407 = vmatprep.mubr.f32.mxu0 0.0
        %1408 = vmatmul.mubr.f32.gmra.mxu0 %v732
        %v1409 = vpop.f32.mrf.mxu0
        %v1410 = vadd.f32 %v386, %v1409
        %v1411 = vpop.f32.mrf.mxu0
        %1412 = vmatprep.mubr.f32.mxu0 0.0
        %1413 = vmatmul.mubr.f32.gmra.mxu0 %v735
        %v1414 = vpop.f32.mrf.mxu0
        %v1415 = vadd.f32 %v386, %v1414
        %v1416 = vpop.f32.mrf.mxu0
        %1417 = vmatprep.mubr.f32.mxu0 0.0
        %1418 = vmatmul.mubr.f32.gmra.mxu0 %v738
        %v1419 = vpop.f32.mrf.mxu0
        %v1420 = vadd.f32 %v386, %v1419
        %v1421 = vpop.f32.mrf.mxu0
        %1422 = vmatprep.mubr.f32.mxu0 0.0
        %1423 = vmatmul.mubr.f32.gmra.mxu0 %v741
        %v1424 = vpop.f32.mrf.mxu0
        %v1425 = vadd.f32 %v386, %v1424
        %v1426 = vpop.f32.mrf.mxu0
        %1427 = vmatprep.mubr.f32.mxu0 0.0
        %1428 = vmatmul.mubr.f32.gmra.mxu0 %v744
        %v1429 = vpop.f32.mrf.mxu0
        %v1430 = vadd.f32 %v386, %v1429
        %v1431 = vpop.f32.mrf.mxu0
        %1432 = vmatprep.mubr.f32.mxu0 0.0
        %1433 = vmatmul.mubr.f32.gmra.mxu0 %v747
        %v1434 = vpop.f32.mrf.mxu0
        %v1435 = vadd.f32 %v386, %v1434
        %v1436 = vpop.f32.mrf.mxu0
        %1437 = vmatprep.mubr.f32.mxu0 0.0
        %1438 = vmatmul.mubr.f32.gmra.mxu0 %v750
        %v1439 = vpop.f32.mrf.mxu0
        %v1440 = vadd.f32 %v386, %v1439
        %v1441 = vpop.f32.mrf.mxu0
        %1442 = vmatprep.mubr.f32.mxu0 0.0
        %1443 = vmatmul.mubr.f32.gmra.mxu0 %v753
        %v1444 = vpop.f32.mrf.mxu0
        %v1445 = vadd.f32 %v386, %v1444
        %v1446 = vpop.f32.mrf.mxu0
        %1447 = vmatprep.mubr.f32.mxu0 0.0
        %1448 = vmatmul.mubr.f32.gmra.mxu0 %v756
        %v1449 = vpop.f32.mrf.mxu0
        %v1450 = vadd.f32 %v386, %v1449
        %v1451 = vpop.f32.mrf.mxu0
        %1452 = vmatprep.mubr.f32.mxu0 0.0
        %1453 = vmatmul.mubr.f32.gmra.mxu0 %v759
        %v1454 = vpop.f32.mrf.mxu0
        %v1455 = vadd.f32 %v386, %v1454
        %v1456 = vpop.f32.mrf.mxu0
        %1457 = vmatprep.mubr.f32.mxu0 0.0
        %1458 = vmatmul.mubr.f32.gmra.mxu0 %v762
        %v1459 = vpop.f32.mrf.mxu0
        %v1460 = vadd.f32 %v386, %v1459
        %v1461 = vpop.f32.mrf.mxu0
        %1462 = vmatprep.mubr.f32.mxu0 0.0
        %1463 = vmatmul.mubr.f32.gmra.mxu0 %v765
        %v1464 = vpop.f32.mrf.mxu0
        %v1465 = vadd.f32 %v386, %v1464
        %v1466 = vpop.f32.mrf.mxu0
        %1467 = vmatprep.mubr.f32.mxu0 0.0
        %1468 = vmatmul.mubr.f32.gmra.mxu0 %v768
        %v1469 = vpop.f32.mrf.mxu0
        %v1470 = vadd.f32 %v386, %v1469
        %v1471 = vpop.f32.mrf.mxu0
        %1472 = vmatprep.mubr.f32.mxu0 0.0
        %1473 = vmatmul.mubr.f32.gmra.mxu0 %v771
        %v1474 = vpop.f32.mrf.mxu0
        %v1475 = vadd.f32 %v386, %v1474
        %v1476 = vpop.f32.mrf.mxu0
        %1477 = vdwg.mxu0
        %v1478 = vmax.f32 %v840, 0.0
        %v1479 = vmax.f32 %v845, 0.0
        %v1480 = vmax.f32 %v850, 0.0
        %v1481 = vmax.f32 %v855, 0.0
        %v1482 = vmax.f32 %v860, 0.0
        %v1483 = vmax.f32 %v865, 0.0
        %v1484 = vmax.f32 %v870, 0.0
        %v1485 = vmax.f32 %v875, 0.0
        %v1486 = vmax.f32 %v880, 0.0
        %v1487 = vmax.f32 %v885, 0.0
        %v1488 = vmax.f32 %v890, 0.0
        %v1489 = vmax.f32 %v895, 0.0
        %v1490 = vmax.f32 %v900, 0.0
        %v1491 = vmax.f32 %v905, 0.0
        %v1492 = vmax.f32 %v910, 0.0
        %v1493 = vmax.f32 %v915, 0.0
        %v1494 = vmax.f32 %v920, 0.0
        %v1495 = vmax.f32 %v925, 0.0
        %v1496 = vmax.f32 %v930, 0.0
        %v1497 = vmax.f32 %v935, 0.0
        %v1498 = vmax.f32 %v940, 0.0
        %v1499 = vmax.f32 %v945, 0.0
        %v1500 = vmax.f32 %v950, 0.0
        %v1501 = vmax.f32 %v955, 0.0
        %v1502 = vmax.f32 %v960, 0.0
        %v1503 = vmax.f32 %v965, 0.0
        %v1504 = vmax.f32 %v970, 0.0
        %v1505 = vmax.f32 %v975, 0.0
        %v1506 = vmax.f32 %v980, 0.0
        %v1507 = vmax.f32 %v985, 0.0
        %v1508 = vmax.f32 %v990, 0.0
        %v1509 = vmax.f32 %v995, 0.0
        %v1510 = vmax.f32 %v1000, 0.0
        %v1511 = vmax.f32 %v1005, 0.0
        %v1512 = vmax.f32 %v1010, 0.0
        %v1513 = vmax.f32 %v1015, 0.0
        %v1514 = vmax.f32 %v1020, 0.0
        %v1515 = vmax.f32 %v1025, 0.0
        %v1516 = vmax.f32 %v1030, 0.0
        %v1517 = vmax.f32 %v1035, 0.0
        %v1518 = vmax.f32 %v1040, 0.0
        %v1519 = vmax.f32 %v1045, 0.0
        %v1520 = vmax.f32 %v1050, 0.0
        %v1521 = vmax.f32 %v1055, 0.0
        %v1522 = vmax.f32 %v1060, 0.0
        %v1523 = vmax.f32 %v1065, 0.0
        %v1524 = vmax.f32 %v1070, 0.0
        %v1525 = vmax.f32 %v1075, 0.0
        %v1526 = vmax.f32 %v1080, 0.0
        %v1527 = vmax.f32 %v1085, 0.0
        %v1528 = vmax.f32 %v1090, 0.0
        %v1529 = vmax.f32 %v1095, 0.0
        %v1530 = vmax.f32 %v1100, 0.0
        %v1531 = vmax.f32 %v1105, 0.0
        %v1532 = vmax.f32 %v1110, 0.0
        %v1533 = vmax.f32 %v1115, 0.0
        %v1534 = vmax.f32 %v1120, 0.0
        %v1535 = vmax.f32 %v1125, 0.0
        %v1536 = vmax.f32 %v1130, 0.0
        %v1537 = vmax.f32 %v1135, 0.0
        %v1538 = vmax.f32 %v1140, 0.0
        %v1539 = vmax.f32 %v1145, 0.0
        %v1540 = vmax.f32 %v1150, 0.0
        %v1541 = vmax.f32 %v1155, 0.0
        %v1542 = vmax.f32 %v1160, 0.0
        %v1543 = vmax.f32 %v1165, 0.0
        %v1544 = vmax.f32 %v1170, 0.0
        %v1545 = vmax.f32 %v1175, 0.0
        %v1546 = vmax.f32 %v1180, 0.0
        %v1547 = vmax.f32 %v1185, 0.0
        %v1548 = vmax.f32 %v1190, 0.0
        %v1549 = vmax.f32 %v1195, 0.0
        %v1550 = vmax.f32 %v1200, 0.0
        %v1551 = vmax.f32 %v1205, 0.0
        %v1552 = vmax.f32 %v1210, 0.0
        %v1553 = vmax.f32 %v1215, 0.0
        %v1554 = vmax.f32 %v1220, 0.0
        %v1555 = vmax.f32 %v1225, 0.0
        %v1556 = vmax.f32 %v1230, 0.0
        %v1557 = vmax.f32 %v1235, 0.0
        %v1558 = vmax.f32 %v1240, 0.0
        %v1559 = vmax.f32 %v1245, 0.0
        %v1560 = vmax.f32 %v1250, 0.0
        %v1561 = vmax.f32 %v1255, 0.0
        %v1562 = vmax.f32 %v1260, 0.0
        %v1563 = vmax.f32 %v1265, 0.0
        %v1564 = vmax.f32 %v1270, 0.0
        %v1565 = vmax.f32 %v1275, 0.0
        %v1566 = vmax.f32 %v1280, 0.0
        %v1567 = vmax.f32 %v1285, 0.0
        %v1568 = vmax.f32 %v1290, 0.0
        %v1569 = vmax.f32 %v1295, 0.0
        %v1570 = vmax.f32 %v1300, 0.0
        %v1571 = vmax.f32 %v1305, 0.0
        %v1572 = vmax.f32 %v1310, 0.0
        %v1573 = vmax.f32 %v1315, 0.0
        %v1574 = vmax.f32 %v1320, 0.0
        %v1575 = vmax.f32 %v1325, 0.0
        %v1576 = vmax.f32 %v1330, 0.0
        %v1577 = vmax.f32 %v1335, 0.0
        %v1578 = vmax.f32 %v1340, 0.0
        %v1579 = vmax.f32 %v1345, 0.0
        %v1580 = vmax.f32 %v1350, 0.0
        %v1581 = vmax.f32 %v1355, 0.0
        %v1582 = vmax.f32 %v1360, 0.0
        %v1583 = vmax.f32 %v1365, 0.0
        %v1584 = vmax.f32 %v1370, 0.0
        %v1585 = vmax.f32 %v1375, 0.0
        %v1586 = vmax.f32 %v1380, 0.0
        %v1587 = vmax.f32 %v1385, 0.0
        %v1588 = vmax.f32 %v1390, 0.0
        %v1589 = vmax.f32 %v1395, 0.0
        %v1590 = vmax.f32 %v1400, 0.0
        %v1591 = vmax.f32 %v1405, 0.0
        %v1592 = vmax.f32 %v1410, 0.0
        %v1593 = vmax.f32 %v1415, 0.0
        %v1594 = vmax.f32 %v1420, 0.0
        %v1595 = vmax.f32 %v1425, 0.0
        %v1596 = vmax.f32 %v1430, 0.0
        %v1597 = vmax.f32 %v1435, 0.0
        %v1598 = vmax.f32 %v1440, 0.0
        %v1599 = vmax.f32 %v1445, 0.0
        %v1600 = vmax.f32 %v1450, 0.0
        %v1601 = vmax.f32 %v1455, 0.0
        %v1602 = vmax.f32 %v1460, 0.0
        %v1603 = vmax.f32 %v1465, 0.0
        %v1604 = vmax.f32 %v1470, 0.0
        %v1605 = vmax.f32 %v1475, 0.0
        %v1606 = vld [vmem:[%s4] sm:$0x1]
        %v1608 = vlaneseq
        %v1609 = vshrl.u32 %v1608, 7
        %v1610 = vsub.s32 0, %v1609
        %v1611 = vrot.slane %v1606, %v1610
        %v1613 = vmul.f32 %v1478, %v1611
        %v1614 = vmul.f32 %v1479, %v1611
        %v1615 = vmul.f32 %v1480, %v1611
        %v1616 = vmul.f32 %v1481, %v1611
        %v1617 = vmul.f32 %v1482, %v1611
        %v1618 = vmul.f32 %v1483, %v1611
        %v1619 = vmul.f32 %v1484, %v1611
        %v1620 = vmul.f32 %v1485, %v1611
        %v1621 = vmul.f32 %v1486, %v1611
        %v1622 = vmul.f32 %v1487, %v1611
        %v1623 = vmul.f32 %v1488, %v1611
        %v1624 = vmul.f32 %v1489, %v1611
        %v1625 = vmul.f32 %v1490, %v1611
        %v1626 = vmul.f32 %v1491, %v1611
        %v1627 = vmul.f32 %v1492, %v1611
        %v1628 = vmul.f32 %v1493, %v1611
        %v1629 = vmul.f32 %v1494, %v1611
        %v1630 = vmul.f32 %v1495, %v1611
        %v1631 = vmul.f32 %v1496, %v1611
        %v1632 = vmul.f32 %v1497, %v1611
        %v1633 = vmul.f32 %v1498, %v1611
        %v1634 = vmul.f32 %v1499, %v1611
        %v1635 = vmul.f32 %v1500, %v1611
        %v1636 = vmul.f32 %v1501, %v1611
        %v1637 = vmul.f32 %v1502, %v1611
        %v1638 = vmul.f32 %v1503, %v1611
        %v1639 = vmul.f32 %v1504, %v1611
        %v1640 = vmul.f32 %v1505, %v1611
        %v1641 = vmul.f32 %v1506, %v1611
        %v1642 = vmul.f32 %v1507, %v1611
        %v1643 = vmul.f32 %v1508, %v1611
        %v1644 = vmul.f32 %v1509, %v1611
        %v1645 = vmul.f32 %v1510, %v1611
        %v1646 = vmul.f32 %v1511, %v1611
        %v1647 = vmul.f32 %v1512, %v1611
        %v1648 = vmul.f32 %v1513, %v1611
        %v1649 = vmul.f32 %v1514, %v1611
        %v1650 = vmul.f32 %v1515, %v1611
        %v1651 = vmul.f32 %v1516, %v1611
        %v1652 = vmul.f32 %v1517, %v1611
        %v1653 = vmul.f32 %v1518, %v1611
        %v1654 = vmul.f32 %v1519, %v1611
        %v1655 = vmul.f32 %v1520, %v1611
        %v1656 = vmul.f32 %v1521, %v1611
        %v1657 = vmul.f32 %v1522, %v1611
        %v1658 = vmul.f32 %v1523, %v1611
        %v1659 = vmul.f32 %v1524, %v1611
        %v1660 = vmul.f32 %v1525, %v1611
        %v1661 = vmul.f32 %v1526, %v1611
        %v1662 = vmul.f32 %v1527, %v1611
        %v1663 = vmul.f32 %v1528, %v1611
        %v1664 = vmul.f32 %v1529, %v1611
        %v1665 = vmul.f32 %v1530, %v1611
        %v1666 = vmul.f32 %v1531, %v1611
        %v1667 = vmul.f32 %v1532, %v1611
        %v1668 = vmul.f32 %v1533, %v1611
        %v1669 = vmul.f32 %v1534, %v1611
        %v1670 = vmul.f32 %v1535, %v1611
        %v1671 = vmul.f32 %v1536, %v1611
        %v1672 = vmul.f32 %v1537, %v1611
        %v1673 = vmul.f32 %v1538, %v1611
        %v1674 = vmul.f32 %v1539, %v1611
        %v1675 = vmul.f32 %v1540, %v1611
        %v1676 = vmul.f32 %v1541, %v1611
        %v1677 = vmul.f32 %v1542, %v1611
        %v1678 = vmul.f32 %v1543, %v1611
        %v1679 = vmul.f32 %v1544, %v1611
        %v1680 = vmul.f32 %v1545, %v1611
        %v1681 = vmul.f32 %v1546, %v1611
        %v1682 = vmul.f32 %v1547, %v1611
        %v1683 = vmul.f32 %v1548, %v1611
        %v1684 = vmul.f32 %v1549, %v1611
        %v1685 = vmul.f32 %v1550, %v1611
        %v1686 = vmul.f32 %v1551, %v1611
        %v1687 = vmul.f32 %v1552, %v1611
        %v1688 = vmul.f32 %v1553, %v1611
        %v1689 = vmul.f32 %v1554, %v1611
        %v1690 = vmul.f32 %v1555, %v1611
        %v1691 = vmul.f32 %v1556, %v1611
        %v1692 = vmul.f32 %v1557, %v1611
        %v1693 = vmul.f32 %v1558, %v1611
        %v1694 = vmul.f32 %v1559, %v1611
        %v1695 = vmul.f32 %v1560, %v1611
        %v1696 = vmul.f32 %v1561, %v1611
        %v1697 = vmul.f32 %v1562, %v1611
        %v1698 = vmul.f32 %v1563, %v1611
        %v1699 = vmul.f32 %v1564, %v1611
        %v1700 = vmul.f32 %v1565, %v1611
        %v1701 = vmul.f32 %v1566, %v1611
        %v1702 = vmul.f32 %v1567, %v1611
        %v1703 = vmul.f32 %v1568, %v1611
        %v1704 = vmul.f32 %v1569, %v1611
        %v1705 = vmul.f32 %v1570, %v1611
        %v1706 = vmul.f32 %v1571, %v1611
        %v1707 = vmul.f32 %v1572, %v1611
        %v1708 = vmul.f32 %v1573, %v1611
        %v1709 = vmul.f32 %v1574, %v1611
        %v1710 = vmul.f32 %v1575, %v1611
        %v1711 = vmul.f32 %v1576, %v1611
        %v1712 = vmul.f32 %v1577, %v1611
        %v1713 = vmul.f32 %v1578, %v1611
        %v1714 = vmul.f32 %v1579, %v1611
        %v1715 = vmul.f32 %v1580, %v1611
        %v1716 = vmul.f32 %v1581, %v1611
        %v1717 = vmul.f32 %v1582, %v1611
        %v1718 = vmul.f32 %v1583, %v1611
        %v1719 = vmul.f32 %v1584, %v1611
        %v1720 = vmul.f32 %v1585, %v1611
        %v1721 = vmul.f32 %v1586, %v1611
        %v1722 = vmul.f32 %v1587, %v1611
        %v1723 = vmul.f32 %v1588, %v1611
        %v1724 = vmul.f32 %v1589, %v1611
        %v1725 = vmul.f32 %v1590, %v1611
        %v1726 = vmul.f32 %v1591, %v1611
        %v1727 = vmul.f32 %v1592, %v1611
        %v1728 = vmul.f32 %v1593, %v1611
        %v1729 = vmul.f32 %v1594, %v1611
        %v1730 = vmul.f32 %v1595, %v1611
        %v1731 = vmul.f32 %v1596, %v1611
        %v1732 = vmul.f32 %v1597, %v1611
        %v1733 = vmul.f32 %v1598, %v1611
        %v1734 = vmul.f32 %v1599, %v1611
        %v1735 = vmul.f32 %v1600, %v1611
        %v1736 = vmul.f32 %v1601, %v1611
        %v1737 = vmul.f32 %v1602, %v1611
        %v1738 = vmul.f32 %v1603, %v1611
        %v1739 = vmul.f32 %v1604, %v1611
        %v1740 = vmul.f32 %v1605, %v1611
        %vm1741 = vcmask 261120
        %v1742 = vsel %vm1741, %v1613, 0.0
        %1743 = vadd.xlane.f32.xlu0 %v1742
        %v1744 = vpop.xlane.xlu0 %1743
        %v1745 = vsel %vm1741, %v1614, 0.0
        %1746 = vadd.xlane.f32.xlu0 %v1745
        %v1747 = vpop.xlane.xlu0 %1746
        %v1748 = vsel %vm1741, %v1615, 0.0
        %1749 = vadd.xlane.f32.xlu0 %v1748
        %v1750 = vpop.xlane.xlu0 %1749
        %v1751 = vsel %vm1741, %v1616, 0.0
        %1752 = vadd.xlane.f32.xlu0 %v1751
        %v1753 = vpop.xlane.xlu0 %1752
        %v1754 = vsel %vm1741, %v1617, 0.0
        %1755 = vadd.xlane.f32.xlu0 %v1754
        %v1756 = vpop.xlane.xlu0 %1755
        %v1757 = vsel %vm1741, %v1618, 0.0
        %1758 = vadd.xlane.f32.xlu0 %v1757
        %v1759 = vpop.xlane.xlu0 %1758
        %v1760 = vsel %vm1741, %v1619, 0.0
        %1761 = vadd.xlane.f32.xlu0 %v1760
        %v1762 = vpop.xlane.xlu0 %1761
        %v1763 = vsel %vm1741, %v1620, 0.0
        %1764 = vadd.xlane.f32.xlu0 %v1763
        %v1765 = vpop.xlane.xlu0 %1764
        %v1766 = vsel %vm1741, %v1621, 0.0
        %1767 = vadd.xlane.f32.xlu0 %v1766
        %v1768 = vpop.xlane.xlu0 %1767
        %v1769 = vsel %vm1741, %v1622, 0.0
        %1770 = vadd.xlane.f32.xlu0 %v1769
        %v1771 = vpop.xlane.xlu0 %1770
        %v1772 = vsel %vm1741, %v1623, 0.0
        %1773 = vadd.xlane.f32.xlu0 %v1772
        %v1774 = vpop.xlane.xlu0 %1773
        %v1775 = vsel %vm1741, %v1624, 0.0
        %1776 = vadd.xlane.f32.xlu0 %v1775
        %v1777 = vpop.xlane.xlu0 %1776
        %v1778 = vsel %vm1741, %v1625, 0.0
        %1779 = vadd.xlane.f32.xlu0 %v1778
        %v1780 = vpop.xlane.xlu0 %1779
        %v1781 = vsel %vm1741, %v1626, 0.0
        %1782 = vadd.xlane.f32.xlu0 %v1781
        %v1783 = vpop.xlane.xlu0 %1782
        %v1784 = vsel %vm1741, %v1627, 0.0
        %1785 = vadd.xlane.f32.xlu0 %v1784
        %v1786 = vpop.xlane.xlu0 %1785
        %v1787 = vsel %vm1741, %v1628, 0.0
        %1788 = vadd.xlane.f32.xlu0 %v1787
        %v1789 = vpop.xlane.xlu0 %1788
        %v1790 = vsel %vm1741, %v1629, 0.0
        %1791 = vadd.xlane.f32.xlu0 %v1790
        %v1792 = vpop.xlane.xlu0 %1791
        %v1793 = vsel %vm1741, %v1630, 0.0
        %1794 = vadd.xlane.f32.xlu0 %v1793
        %v1795 = vpop.xlane.xlu0 %1794
        %v1796 = vsel %vm1741, %v1631, 0.0
        %1797 = vadd.xlane.f32.xlu0 %v1796
        %v1798 = vpop.xlane.xlu0 %1797
        %v1799 = vsel %vm1741, %v1632, 0.0
        %1800 = vadd.xlane.f32.xlu0 %v1799
        %v1801 = vpop.xlane.xlu0 %1800
        %v1802 = vsel %vm1741, %v1633, 0.0
        %1803 = vadd.xlane.f32.xlu0 %v1802
        %v1804 = vpop.xlane.xlu0 %1803
        %v1805 = vsel %vm1741, %v1634, 0.0
        %1806 = vadd.xlane.f32.xlu0 %v1805
        %v1807 = vpop.xlane.xlu0 %1806
        %v1808 = vsel %vm1741, %v1635, 0.0
        %1809 = vadd.xlane.f32.xlu0 %v1808
        %v1810 = vpop.xlane.xlu0 %1809
        %v1811 = vsel %vm1741, %v1636, 0.0
        %1812 = vadd.xlane.f32.xlu0 %v1811
        %v1813 = vpop.xlane.xlu0 %1812
        %v1814 = vsel %vm1741, %v1637, 0.0
        %1815 = vadd.xlane.f32.xlu0 %v1814
        %v1816 = vpop.xlane.xlu0 %1815
        %v1817 = vsel %vm1741, %v1638, 0.0
        %1818 = vadd.xlane.f32.xlu0 %v1817
        %v1819 = vpop.xlane.xlu0 %1818
        %v1820 = vsel %vm1741, %v1639, 0.0
        %1821 = vadd.xlane.f32.xlu0 %v1820
        %v1822 = vpop.xlane.xlu0 %1821
        %v1823 = vsel %vm1741, %v1640, 0.0
        %1824 = vadd.xlane.f32.xlu0 %v1823
        %v1825 = vpop.xlane.xlu0 %1824
        %v1826 = vsel %vm1741, %v1641, 0.0
        %1827 = vadd.xlane.f32.xlu0 %v1826
        %v1828 = vpop.xlane.xlu0 %1827
        %v1829 = vsel %vm1741, %v1642, 0.0
        %1830 = vadd.xlane.f32.xlu0 %v1829
        %v1831 = vpop.xlane.xlu0 %1830
        %v1832 = vsel %vm1741, %v1643, 0.0
        %1833 = vadd.xlane.f32.xlu0 %v1832
        %v1834 = vpop.xlane.xlu0 %1833
        %v1835 = vsel %vm1741, %v1644, 0.0
        %1836 = vadd.xlane.f32.xlu0 %v1835
        %v1837 = vpop.xlane.xlu0 %1836
        %v1838 = vsel %vm1741, %v1645, 0.0
        %1839 = vadd.xlane.f32.xlu0 %v1838
        %v1840 = vpop.xlane.xlu0 %1839
        %v1841 = vsel %vm1741, %v1646, 0.0
        %1842 = vadd.xlane.f32.xlu0 %v1841
        %v1843 = vpop.xlane.xlu0 %1842
        %v1844 = vsel %vm1741, %v1647, 0.0
        %1845 = vadd.xlane.f32.xlu0 %v1844
        %v1846 = vpop.xlane.xlu0 %1845
        %v1847 = vsel %vm1741, %v1648, 0.0
        %1848 = vadd.xlane.f32.xlu0 %v1847
        %v1849 = vpop.xlane.xlu0 %1848
        %v1850 = vsel %vm1741, %v1649, 0.0
        %1851 = vadd.xlane.f32.xlu0 %v1850
        %v1852 = vpop.xlane.xlu0 %1851
        %v1853 = vsel %vm1741, %v1650, 0.0
        %1854 = vadd.xlane.f32.xlu0 %v1853
        %v1855 = vpop.xlane.xlu0 %1854
        %v1856 = vsel %vm1741, %v1651, 0.0
        %1857 = vadd.xlane.f32.xlu0 %v1856
        %v1858 = vpop.xlane.xlu0 %1857
        %v1859 = vsel %vm1741, %v1652, 0.0
        %1860 = vadd.xlane.f32.xlu0 %v1859
        %v1861 = vpop.xlane.xlu0 %1860
        %v1862 = vsel %vm1741, %v1653, 0.0
        %1863 = vadd.xlane.f32.xlu0 %v1862
        %v1864 = vpop.xlane.xlu0 %1863
        %v1865 = vsel %vm1741, %v1654, 0.0
        %1866 = vadd.xlane.f32.xlu0 %v1865
        %v1867 = vpop.xlane.xlu0 %1866
        %v1868 = vsel %vm1741, %v1655, 0.0
        %1869 = vadd.xlane.f32.xlu0 %v1868
        %v1870 = vpop.xlane.xlu0 %1869
        %v1871 = vsel %vm1741, %v1656, 0.0
        %1872 = vadd.xlane.f32.xlu0 %v1871
        %v1873 = vpop.xlane.xlu0 %1872
        %v1874 = vsel %vm1741, %v1657, 0.0
        %1875 = vadd.xlane.f32.xlu0 %v1874
        %v1876 = vpop.xlane.xlu0 %1875
        %v1877 = vsel %vm1741, %v1658, 0.0
        %1878 = vadd.xlane.f32.xlu0 %v1877
        %v1879 = vpop.xlane.xlu0 %1878
        %v1880 = vsel %vm1741, %v1659, 0.0
        %1881 = vadd.xlane.f32.xlu0 %v1880
        %v1882 = vpop.xlane.xlu0 %1881
        %v1883 = vsel %vm1741, %v1660, 0.0
        %1884 = vadd.xlane.f32.xlu0 %v1883
        %v1885 = vpop.xlane.xlu0 %1884
        %v1886 = vsel %vm1741, %v1661, 0.0
        %1887 = vadd.xlane.f32.xlu0 %v1886
        %v1888 = vpop.xlane.xlu0 %1887
        %v1889 = vsel %vm1741, %v1662, 0.0
        %1890 = vadd.xlane.f32.xlu0 %v1889
        %v1891 = vpop.xlane.xlu0 %1890
        %v1892 = vsel %vm1741, %v1663, 0.0
        %1893 = vadd.xlane.f32.xlu0 %v1892
        %v1894 = vpop.xlane.xlu0 %1893
        %v1895 = vsel %vm1741, %v1664, 0.0
        %1896 = vadd.xlane.f32.xlu0 %v1895
        %v1897 = vpop.xlane.xlu0 %1896
        %v1898 = vsel %vm1741, %v1665, 0.0
        %1899 = vadd.xlane.f32.xlu0 %v1898
        %v1900 = vpop.xlane.xlu0 %1899
        %v1901 = vsel %vm1741, %v1666, 0.0
        %1902 = vadd.xlane.f32.xlu0 %v1901
        %v1903 = vpop.xlane.xlu0 %1902
        %v1904 = vsel %vm1741, %v1667, 0.0
        %1905 = vadd.xlane.f32.xlu0 %v1904
        %v1906 = vpop.xlane.xlu0 %1905
        %v1907 = vsel %vm1741, %v1668, 0.0
        %1908 = vadd.xlane.f32.xlu0 %v1907
        %v1909 = vpop.xlane.xlu0 %1908
        %v1910 = vsel %vm1741, %v1669, 0.0
        %1911 = vadd.xlane.f32.xlu0 %v1910
        %v1912 = vpop.xlane.xlu0 %1911
        %v1913 = vsel %vm1741, %v1670, 0.0
        %1914 = vadd.xlane.f32.xlu0 %v1913
        %v1915 = vpop.xlane.xlu0 %1914
        %v1916 = vsel %vm1741, %v1671, 0.0
        %1917 = vadd.xlane.f32.xlu0 %v1916
        %v1918 = vpop.xlane.xlu0 %1917
        %v1919 = vsel %vm1741, %v1672, 0.0
        %1920 = vadd.xlane.f32.xlu0 %v1919
        %v1921 = vpop.xlane.xlu0 %1920
        %v1922 = vsel %vm1741, %v1673, 0.0
        %1923 = vadd.xlane.f32.xlu0 %v1922
        %v1924 = vpop.xlane.xlu0 %1923
        %v1925 = vsel %vm1741, %v1674, 0.0
        %1926 = vadd.xlane.f32.xlu0 %v1925
        %v1927 = vpop.xlane.xlu0 %1926
        %v1928 = vsel %vm1741, %v1675, 0.0
        %1929 = vadd.xlane.f32.xlu0 %v1928
        %v1930 = vpop.xlane.xlu0 %1929
        %v1931 = vsel %vm1741, %v1676, 0.0
        %1932 = vadd.xlane.f32.xlu0 %v1931
        %v1933 = vpop.xlane.xlu0 %1932
        %v1934 = vsel %vm1741, %v1677, 0.0
        %1935 = vadd.xlane.f32.xlu0 %v1934
        %v1936 = vpop.xlane.xlu0 %1935
        %v1937 = vsel %vm1741, %v1678, 0.0
        %1938 = vadd.xlane.f32.xlu0 %v1937
        %v1939 = vpop.xlane.xlu0 %1938
        %v1940 = vsel %vm1741, %v1679, 0.0
        %1941 = vadd.xlane.f32.xlu0 %v1940
        %v1942 = vpop.xlane.xlu0 %1941
        %v1943 = vsel %vm1741, %v1680, 0.0
        %1944 = vadd.xlane.f32.xlu0 %v1943
        %v1945 = vpop.xlane.xlu0 %1944
        %v1946 = vsel %vm1741, %v1681, 0.0
        %1947 = vadd.xlane.f32.xlu0 %v1946
        %v1948 = vpop.xlane.xlu0 %1947
        %v1949 = vsel %vm1741, %v1682, 0.0
        %1950 = vadd.xlane.f32.xlu0 %v1949
        %v1951 = vpop.xlane.xlu0 %1950
        %v1952 = vsel %vm1741, %v1683, 0.0
        %1953 = vadd.xlane.f32.xlu0 %v1952
        %v1954 = vpop.xlane.xlu0 %1953
        %v1955 = vsel %vm1741, %v1684, 0.0
        %1956 = vadd.xlane.f32.xlu0 %v1955
        %v1957 = vpop.xlane.xlu0 %1956
        %v1958 = vsel %vm1741, %v1685, 0.0
        %1959 = vadd.xlane.f32.xlu0 %v1958
        %v1960 = vpop.xlane.xlu0 %1959
        %v1961 = vsel %vm1741, %v1686, 0.0
        %1962 = vadd.xlane.f32.xlu0 %v1961
        %v1963 = vpop.xlane.xlu0 %1962
        %v1964 = vsel %vm1741, %v1687, 0.0
        %1965 = vadd.xlane.f32.xlu0 %v1964
        %v1966 = vpop.xlane.xlu0 %1965
        %v1967 = vsel %vm1741, %v1688, 0.0
        %1968 = vadd.xlane.f32.xlu0 %v1967
        %v1969 = vpop.xlane.xlu0 %1968
        %v1970 = vsel %vm1741, %v1689, 0.0
        %1971 = vadd.xlane.f32.xlu0 %v1970
        %v1972 = vpop.xlane.xlu0 %1971
        %v1973 = vsel %vm1741, %v1690, 0.0
        %1974 = vadd.xlane.f32.xlu0 %v1973
        %v1975 = vpop.xlane.xlu0 %1974
        %v1976 = vsel %vm1741, %v1691, 0.0
        %1977 = vadd.xlane.f32.xlu0 %v1976
        %v1978 = vpop.xlane.xlu0 %1977
        %v1979 = vsel %vm1741, %v1692, 0.0
        %1980 = vadd.xlane.f32.xlu0 %v1979
        %v1981 = vpop.xlane.xlu0 %1980
        %v1982 = vsel %vm1741, %v1693, 0.0
        %1983 = vadd.xlane.f32.xlu0 %v1982
        %v1984 = vpop.xlane.xlu0 %1983
        %v1985 = vsel %vm1741, %v1694, 0.0
        %1986 = vadd.xlane.f32.xlu0 %v1985
        %v1987 = vpop.xlane.xlu0 %1986
        %v1988 = vsel %vm1741, %v1695, 0.0
        %1989 = vadd.xlane.f32.xlu0 %v1988
        %v1990 = vpop.xlane.xlu0 %1989
        %v1991 = vsel %vm1741, %v1696, 0.0
        %1992 = vadd.xlane.f32.xlu0 %v1991
        %v1993 = vpop.xlane.xlu0 %1992
        %v1994 = vsel %vm1741, %v1697, 0.0
        %1995 = vadd.xlane.f32.xlu0 %v1994
        %v1996 = vpop.xlane.xlu0 %1995
        %v1997 = vsel %vm1741, %v1698, 0.0
        %1998 = vadd.xlane.f32.xlu0 %v1997
        %v1999 = vpop.xlane.xlu0 %1998
        %v2000 = vsel %vm1741, %v1699, 0.0
        %2001 = vadd.xlane.f32.xlu0 %v2000
        %v2002 = vpop.xlane.xlu0 %2001
        %v2003 = vsel %vm1741, %v1700, 0.0
        %2004 = vadd.xlane.f32.xlu0 %v2003
        %v2005 = vpop.xlane.xlu0 %2004
        %v2006 = vsel %vm1741, %v1701, 0.0
        %2007 = vadd.xlane.f32.xlu0 %v2006
        %v2008 = vpop.xlane.xlu0 %2007
        %v2009 = vsel %vm1741, %v1702, 0.0
        %2010 = vadd.xlane.f32.xlu0 %v2009
        %v2011 = vpop.xlane.xlu0 %2010
        %v2012 = vsel %vm1741, %v1703, 0.0
        %2013 = vadd.xlane.f32.xlu0 %v2012
        %v2014 = vpop.xlane.xlu0 %2013
        %v2015 = vsel %vm1741, %v1704, 0.0
        %2016 = vadd.xlane.f32.xlu0 %v2015
        %v2017 = vpop.xlane.xlu0 %2016
        %v2018 = vsel %vm1741, %v1705, 0.0
        %2019 = vadd.xlane.f32.xlu0 %v2018
        %v2020 = vpop.xlane.xlu0 %2019
        %v2021 = vsel %vm1741, %v1706, 0.0
        %2022 = vadd.xlane.f32.xlu0 %v2021
        %v2023 = vpop.xlane.xlu0 %2022
        %v2024 = vsel %vm1741, %v1707, 0.0
        %2025 = vadd.xlane.f32.xlu0 %v2024
        %v2026 = vpop.xlane.xlu0 %2025
        %v2027 = vsel %vm1741, %v1708, 0.0
        %2028 = vadd.xlane.f32.xlu0 %v2027
        %v2029 = vpop.xlane.xlu0 %2028
        %v2030 = vsel %vm1741, %v1709, 0.0
        %2031 = vadd.xlane.f32.xlu0 %v2030
        %v2032 = vpop.xlane.xlu0 %2031
        %v2033 = vsel %vm1741, %v1710, 0.0
        %2034 = vadd.xlane.f32.xlu0 %v2033
        %v2035 = vpop.xlane.xlu0 %2034
        %v2036 = vsel %vm1741, %v1711, 0.0
        %2037 = vadd.xlane.f32.xlu0 %v2036
        %v2038 = vpop.xlane.xlu0 %2037
        %v2039 = vsel %vm1741, %v1712, 0.0
        %2040 = vadd.xlane.f32.xlu0 %v2039
        %v2041 = vpop.xlane.xlu0 %2040
        %v2042 = vsel %vm1741, %v1713, 0.0
        %2043 = vadd.xlane.f32.xlu0 %v2042
        %v2044 = vpop.xlane.xlu0 %2043
        %v2045 = vsel %vm1741, %v1714, 0.0
        %2046 = vadd.xlane.f32.xlu0 %v2045
        %v2047 = vpop.xlane.xlu0 %2046
        %v2048 = vsel %vm1741, %v1715, 0.0
        %2049 = vadd.xlane.f32.xlu0 %v2048
        %v2050 = vpop.xlane.xlu0 %2049
        %v2051 = vsel %vm1741, %v1716, 0.0
        %2052 = vadd.xlane.f32.xlu0 %v2051
        %v2053 = vpop.xlane.xlu0 %2052
        %v2054 = vsel %vm1741, %v1717, 0.0
        %2055 = vadd.xlane.f32.xlu0 %v2054
        %v2056 = vpop.xlane.xlu0 %2055
        %v2057 = vsel %vm1741, %v1718, 0.0
        %2058 = vadd.xlane.f32.xlu0 %v2057
        %v2059 = vpop.xlane.xlu0 %2058
        %v2060 = vsel %vm1741, %v1719, 0.0
        %2061 = vadd.xlane.f32.xlu0 %v2060
        %v2062 = vpop.xlane.xlu0 %2061
        %v2063 = vsel %vm1741, %v1720, 0.0
        %2064 = vadd.xlane.f32.xlu0 %v2063
        %v2065 = vpop.xlane.xlu0 %2064
        %v2066 = vsel %vm1741, %v1721, 0.0
        %2067 = vadd.xlane.f32.xlu0 %v2066
        %v2068 = vpop.xlane.xlu0 %2067
        %v2069 = vsel %vm1741, %v1722, 0.0
        %2070 = vadd.xlane.f32.xlu0 %v2069
        %v2071 = vpop.xlane.xlu0 %2070
        %v2072 = vsel %vm1741, %v1723, 0.0
        %2073 = vadd.xlane.f32.xlu0 %v2072
        %v2074 = vpop.xlane.xlu0 %2073
        %v2075 = vsel %vm1741, %v1724, 0.0
        %2076 = vadd.xlane.f32.xlu0 %v2075
        %v2077 = vpop.xlane.xlu0 %2076
        %v2078 = vsel %vm1741, %v1725, 0.0
        %2079 = vadd.xlane.f32.xlu0 %v2078
        %v2080 = vpop.xlane.xlu0 %2079
        %v2081 = vsel %vm1741, %v1726, 0.0
        %2082 = vadd.xlane.f32.xlu0 %v2081
        %v2083 = vpop.xlane.xlu0 %2082
        %v2084 = vsel %vm1741, %v1727, 0.0
        %2085 = vadd.xlane.f32.xlu0 %v2084
        %v2086 = vpop.xlane.xlu0 %2085
        %v2087 = vsel %vm1741, %v1728, 0.0
        %2088 = vadd.xlane.f32.xlu0 %v2087
        %v2089 = vpop.xlane.xlu0 %2088
        %v2090 = vsel %vm1741, %v1729, 0.0
        %2091 = vadd.xlane.f32.xlu0 %v2090
        %v2092 = vpop.xlane.xlu0 %2091
        %v2093 = vsel %vm1741, %v1730, 0.0
        %2094 = vadd.xlane.f32.xlu0 %v2093
        %v2095 = vpop.xlane.xlu0 %2094
        %v2096 = vsel %vm1741, %v1731, 0.0
        %2097 = vadd.xlane.f32.xlu0 %v2096
        %v2098 = vpop.xlane.xlu0 %2097
        %v2099 = vsel %vm1741, %v1732, 0.0
        %2100 = vadd.xlane.f32.xlu0 %v2099
        %v2101 = vpop.xlane.xlu0 %2100
        %v2102 = vsel %vm1741, %v1733, 0.0
        %2103 = vadd.xlane.f32.xlu0 %v2102
        %v2104 = vpop.xlane.xlu0 %2103
        %v2105 = vsel %vm1741, %v1734, 0.0
        %2106 = vadd.xlane.f32.xlu0 %v2105
        %v2107 = vpop.xlane.xlu0 %2106
        %v2108 = vsel %vm1741, %v1735, 0.0
        %2109 = vadd.xlane.f32.xlu0 %v2108
        %v2110 = vpop.xlane.xlu0 %2109
        %v2111 = vsel %vm1741, %v1736, 0.0
        %2112 = vadd.xlane.f32.xlu0 %v2111
        %v2113 = vpop.xlane.xlu0 %2112
        %v2114 = vsel %vm1741, %v1737, 0.0
        %2115 = vadd.xlane.f32.xlu0 %v2114
        %v2116 = vpop.xlane.xlu0 %2115
        %v2117 = vsel %vm1741, %v1738, 0.0
        %2118 = vadd.xlane.f32.xlu0 %v2117
        %v2119 = vpop.xlane.xlu0 %2118
        %v2120 = vsel %vm1741, %v1739, 0.0
        %2121 = vadd.xlane.f32.xlu0 %v2120
        %v2122 = vpop.xlane.xlu0 %2121
        %v2123 = vsel %vm1741, %v1740, 0.0
        %2124 = vadd.xlane.f32.xlu0 %v2123
        %v2125 = vpop.xlane.xlu0 %2124
        %v2126 = vld [vmem:[%s244] sm:$0xff]
        %v2128 = vlaneseq
        %v2129 = vshrl.u32 %v2128, 7
        %v2130 = vsub.s32 0, %v2129
        %v2131 = vrot.slane %v2126, %v2130
        %2133 = vbcast.lane.b32.xlu0 %v2131, 256
        %v2134 = vpop.permute.xlu0 %2133
        %s2136 = sor.u32 256, 8
        %2137 = vbcast.lane.b32.xlu0 %v2131, %s2136
        %v2138 = vpop.permute.xlu0 %2137
        %s2140 = sor.u32 256, 16
        %2141 = vbcast.lane.b32.xlu0 %v2131, %s2140
        %v2142 = vpop.permute.xlu0 %2141
        %s2144 = sor.u32 256, 24
        %2145 = vbcast.lane.b32.xlu0 %v2131, %s2144
        %v2146 = vpop.permute.xlu0 %2145
        %s2148 = sor.u32 256, 32
        %2149 = vbcast.lane.b32.xlu0 %v2131, %s2148
        %v2150 = vpop.permute.xlu0 %2149
        %s2152 = sor.u32 256, 40
        %2153 = vbcast.lane.b32.xlu0 %v2131, %s2152
        %v2154 = vpop.permute.xlu0 %2153
        %s2156 = sor.u32 256, 48
        %2157 = vbcast.lane.b32.xlu0 %v2131, %s2156
        %v2158 = vpop.permute.xlu0 %2157
        %s2160 = sor.u32 256, 56
        %2161 = vbcast.lane.b32.xlu0 %v2131, %s2160
        %v2162 = vpop.permute.xlu0 %2161
        %s2164 = sor.u32 256, 64
        %2165 = vbcast.lane.b32.xlu0 %v2131, %s2164
        %v2166 = vpop.permute.xlu0 %2165
        %s2168 = sor.u32 256, 72
        %2169 = vbcast.lane.b32.xlu0 %v2131, %s2168
        %v2170 = vpop.permute.xlu0 %2169
        %s2172 = sor.u32 256, 80
        %2173 = vbcast.lane.b32.xlu0 %v2131, %s2172
        %v2174 = vpop.permute.xlu0 %2173
        %s2176 = sor.u32 256, 88
        %2177 = vbcast.lane.b32.xlu0 %v2131, %s2176
        %v2178 = vpop.permute.xlu0 %2177
        %s2180 = sor.u32 256, 96
        %2181 = vbcast.lane.b32.xlu0 %v2131, %s2180
        %v2182 = vpop.permute.xlu0 %2181
        %s2184 = sor.u32 256, 104
        %2185 = vbcast.lane.b32.xlu0 %v2131, %s2184
        %v2186 = vpop.permute.xlu0 %2185
        %s2188 = sor.u32 256, 112
        %2189 = vbcast.lane.b32.xlu0 %v2131, %s2188
        %v2190 = vpop.permute.xlu0 %2189
        %s2192 = sor.u32 256, 120
        %2193 = vbcast.lane.b32.xlu0 %v2131, %s2192
        %v2194 = vpop.permute.xlu0 %2193
        %v2195 = vlaneseq
        %v2196 = vshrl.u32 %v2195, 7
        %v2197 = vsub.s32 1, %v2196
        %v2198 = vrot.slane %v2126, %v2197
        %2200 = vbcast.lane.b32.xlu0 %v2198, 256
        %v2201 = vpop.permute.xlu0 %2200
        %s2203 = sor.u32 256, 8
        %2204 = vbcast.lane.b32.xlu0 %v2198, %s2203
        %v2205 = vpop.permute.xlu0 %2204
        %s2207 = sor.u32 256, 16
        %2208 = vbcast.lane.b32.xlu0 %v2198, %s2207
        %v2209 = vpop.permute.xlu0 %2208
        %s2211 = sor.u32 256, 24
        %2212 = vbcast.lane.b32.xlu0 %v2198, %s2211
        %v2213 = vpop.permute.xlu0 %2212
        %s2215 = sor.u32 256, 32
        %2216 = vbcast.lane.b32.xlu0 %v2198, %s2215
        %v2217 = vpop.permute.xlu0 %2216
        %s2219 = sor.u32 256, 40
        %2220 = vbcast.lane.b32.xlu0 %v2198, %s2219
        %v2221 = vpop.permute.xlu0 %2220
        %s2223 = sor.u32 256, 48
        %2224 = vbcast.lane.b32.xlu0 %v2198, %s2223
        %v2225 = vpop.permute.xlu0 %2224
        %s2227 = sor.u32 256, 56
        %2228 = vbcast.lane.b32.xlu0 %v2198, %s2227
        %v2229 = vpop.permute.xlu0 %2228
        %s2231 = sor.u32 256, 64
        %2232 = vbcast.lane.b32.xlu0 %v2198, %s2231
        %v2233 = vpop.permute.xlu0 %2232
        %s2235 = sor.u32 256, 72
        %2236 = vbcast.lane.b32.xlu0 %v2198, %s2235
        %v2237 = vpop.permute.xlu0 %2236
        %s2239 = sor.u32 256, 80
        %2240 = vbcast.lane.b32.xlu0 %v2198, %s2239
        %v2241 = vpop.permute.xlu0 %2240
        %s2243 = sor.u32 256, 88
        %2244 = vbcast.lane.b32.xlu0 %v2198, %s2243
        %v2245 = vpop.permute.xlu0 %2244
        %s2247 = sor.u32 256, 96
        %2248 = vbcast.lane.b32.xlu0 %v2198, %s2247
        %v2249 = vpop.permute.xlu0 %2248
        %s2251 = sor.u32 256, 104
        %2252 = vbcast.lane.b32.xlu0 %v2198, %s2251
        %v2253 = vpop.permute.xlu0 %2252
        %s2255 = sor.u32 256, 112
        %2256 = vbcast.lane.b32.xlu0 %v2198, %s2255
        %v2257 = vpop.permute.xlu0 %2256
        %s2259 = sor.u32 256, 120
        %2260 = vbcast.lane.b32.xlu0 %v2198, %s2259
        %v2261 = vpop.permute.xlu0 %2260
        %v2262 = vlaneseq
        %v2263 = vshrl.u32 %v2262, 7
        %v2264 = vsub.s32 2, %v2263
        %v2265 = vrot.slane %v2126, %v2264
        %2267 = vbcast.lane.b32.xlu0 %v2265, 256
        %v2268 = vpop.permute.xlu0 %2267
        %s2270 = sor.u32 256, 8
        %2271 = vbcast.lane.b32.xlu0 %v2265, %s2270
        %v2272 = vpop.permute.xlu0 %2271
        %s2274 = sor.u32 256, 16
        %2275 = vbcast.lane.b32.xlu0 %v2265, %s2274
        %v2276 = vpop.permute.xlu0 %2275
        %s2278 = sor.u32 256, 24
        %2279 = vbcast.lane.b32.xlu0 %v2265, %s2278
        %v2280 = vpop.permute.xlu0 %2279
        %s2282 = sor.u32 256, 32
        %2283 = vbcast.lane.b32.xlu0 %v2265, %s2282
        %v2284 = vpop.permute.xlu0 %2283
        %s2286 = sor.u32 256, 40
        %2287 = vbcast.lane.b32.xlu0 %v2265, %s2286
        %v2288 = vpop.permute.xlu0 %2287
        %s2290 = sor.u32 256, 48
        %2291 = vbcast.lane.b32.xlu0 %v2265, %s2290
        %v2292 = vpop.permute.xlu0 %2291
        %s2294 = sor.u32 256, 56
        %2295 = vbcast.lane.b32.xlu0 %v2265, %s2294
        %v2296 = vpop.permute.xlu0 %2295
        %s2298 = sor.u32 256, 64
        %2299 = vbcast.lane.b32.xlu0 %v2265, %s2298
        %v2300 = vpop.permute.xlu0 %2299
        %s2302 = sor.u32 256, 72
        %2303 = vbcast.lane.b32.xlu0 %v2265, %s2302
        %v2304 = vpop.permute.xlu0 %2303
        %s2306 = sor.u32 256, 80
        %2307 = vbcast.lane.b32.xlu0 %v2265, %s2306
        %v2308 = vpop.permute.xlu0 %2307
        %s2310 = sor.u32 256, 88
        %2311 = vbcast.lane.b32.xlu0 %v2265, %s2310
        %v2312 = vpop.permute.xlu0 %2311
        %s2314 = sor.u32 256, 96
        %2315 = vbcast.lane.b32.xlu0 %v2265, %s2314
        %v2316 = vpop.permute.xlu0 %2315
        %s2318 = sor.u32 256, 104
        %2319 = vbcast.lane.b32.xlu0 %v2265, %s2318
        %v2320 = vpop.permute.xlu0 %2319
        %s2322 = sor.u32 256, 112
        %2323 = vbcast.lane.b32.xlu0 %v2265, %s2322
        %v2324 = vpop.permute.xlu0 %2323
        %s2326 = sor.u32 256, 120
        %2327 = vbcast.lane.b32.xlu0 %v2265, %s2326
        %v2328 = vpop.permute.xlu0 %2327
        %v2329 = vlaneseq
        %v2330 = vshrl.u32 %v2329, 7
        %v2331 = vsub.s32 3, %v2330
        %v2332 = vrot.slane %v2126, %v2331
        %2334 = vbcast.lane.b32.xlu0 %v2332, 256
        %v2335 = vpop.permute.xlu0 %2334
        %s2337 = sor.u32 256, 8
        %2338 = vbcast.lane.b32.xlu0 %v2332, %s2337
        %v2339 = vpop.permute.xlu0 %2338
        %s2341 = sor.u32 256, 16
        %2342 = vbcast.lane.b32.xlu0 %v2332, %s2341
        %v2343 = vpop.permute.xlu0 %2342
        %s2345 = sor.u32 256, 24
        %2346 = vbcast.lane.b32.xlu0 %v2332, %s2345
        %v2347 = vpop.permute.xlu0 %2346
        %s2349 = sor.u32 256, 32
        %2350 = vbcast.lane.b32.xlu0 %v2332, %s2349
        %v2351 = vpop.permute.xlu0 %2350
        %s2353 = sor.u32 256, 40
        %2354 = vbcast.lane.b32.xlu0 %v2332, %s2353
        %v2355 = vpop.permute.xlu0 %2354
        %s2357 = sor.u32 256, 48
        %2358 = vbcast.lane.b32.xlu0 %v2332, %s2357
        %v2359 = vpop.permute.xlu0 %2358
        %s2361 = sor.u32 256, 56
        %2362 = vbcast.lane.b32.xlu0 %v2332, %s2361
        %v2363 = vpop.permute.xlu0 %2362
        %s2365 = sor.u32 256, 64
        %2366 = vbcast.lane.b32.xlu0 %v2332, %s2365
        %v2367 = vpop.permute.xlu0 %2366
        %s2369 = sor.u32 256, 72
        %2370 = vbcast.lane.b32.xlu0 %v2332, %s2369
        %v2371 = vpop.permute.xlu0 %2370
        %s2373 = sor.u32 256, 80
        %2374 = vbcast.lane.b32.xlu0 %v2332, %s2373
        %v2375 = vpop.permute.xlu0 %2374
        %s2377 = sor.u32 256, 88
        %2378 = vbcast.lane.b32.xlu0 %v2332, %s2377
        %v2379 = vpop.permute.xlu0 %2378
        %s2381 = sor.u32 256, 96
        %2382 = vbcast.lane.b32.xlu0 %v2332, %s2381
        %v2383 = vpop.permute.xlu0 %2382
        %s2385 = sor.u32 256, 104
        %2386 = vbcast.lane.b32.xlu0 %v2332, %s2385
        %v2387 = vpop.permute.xlu0 %2386
        %s2389 = sor.u32 256, 112
        %2390 = vbcast.lane.b32.xlu0 %v2332, %s2389
        %v2391 = vpop.permute.xlu0 %2390
        %s2393 = sor.u32 256, 120
        %2394 = vbcast.lane.b32.xlu0 %v2332, %s2393
        %v2395 = vpop.permute.xlu0 %2394
        %v2396 = vlaneseq
        %v2397 = vshrl.u32 %v2396, 7
        %v2398 = vsub.s32 4, %v2397
        %v2399 = vrot.slane %v2126, %v2398
        %2401 = vbcast.lane.b32.xlu0 %v2399, 256
        %v2402 = vpop.permute.xlu0 %2401
        %s2404 = sor.u32 256, 8
        %2405 = vbcast.lane.b32.xlu0 %v2399, %s2404
        %v2406 = vpop.permute.xlu0 %2405
        %s2408 = sor.u32 256, 16
        %2409 = vbcast.lane.b32.xlu0 %v2399, %s2408
        %v2410 = vpop.permute.xlu0 %2409
        %s2412 = sor.u32 256, 24
        %2413 = vbcast.lane.b32.xlu0 %v2399, %s2412
        %v2414 = vpop.permute.xlu0 %2413
        %s2416 = sor.u32 256, 32
        %2417 = vbcast.lane.b32.xlu0 %v2399, %s2416
        %v2418 = vpop.permute.xlu0 %2417
        %s2420 = sor.u32 256, 40
        %2421 = vbcast.lane.b32.xlu0 %v2399, %s2420
        %v2422 = vpop.permute.xlu0 %2421
        %s2424 = sor.u32 256, 48
        %2425 = vbcast.lane.b32.xlu0 %v2399, %s2424
        %v2426 = vpop.permute.xlu0 %2425
        %s2428 = sor.u32 256, 56
        %2429 = vbcast.lane.b32.xlu0 %v2399, %s2428
        %v2430 = vpop.permute.xlu0 %2429
        %s2432 = sor.u32 256, 64
        %2433 = vbcast.lane.b32.xlu0 %v2399, %s2432
        %v2434 = vpop.permute.xlu0 %2433
        %s2436 = sor.u32 256, 72
        %2437 = vbcast.lane.b32.xlu0 %v2399, %s2436
        %v2438 = vpop.permute.xlu0 %2437
        %s2440 = sor.u32 256, 80
        %2441 = vbcast.lane.b32.xlu0 %v2399, %s2440
        %v2442 = vpop.permute.xlu0 %2441
        %s2444 = sor.u32 256, 88
        %2445 = vbcast.lane.b32.xlu0 %v2399, %s2444
        %v2446 = vpop.permute.xlu0 %2445
        %s2448 = sor.u32 256, 96
        %2449 = vbcast.lane.b32.xlu0 %v2399, %s2448
        %v2450 = vpop.permute.xlu0 %2449
        %s2452 = sor.u32 256, 104
        %2453 = vbcast.lane.b32.xlu0 %v2399, %s2452
        %v2454 = vpop.permute.xlu0 %2453
        %s2456 = sor.u32 256, 112
        %2457 = vbcast.lane.b32.xlu0 %v2399, %s2456
        %v2458 = vpop.permute.xlu0 %2457
        %s2460 = sor.u32 256, 120
        %2461 = vbcast.lane.b32.xlu0 %v2399, %s2460
        %v2462 = vpop.permute.xlu0 %2461
        %v2463 = vlaneseq
        %v2464 = vshrl.u32 %v2463, 7
        %v2465 = vsub.s32 5, %v2464
        %v2466 = vrot.slane %v2126, %v2465
        %2468 = vbcast.lane.b32.xlu0 %v2466, 256
        %v2469 = vpop.permute.xlu0 %2468
        %s2471 = sor.u32 256, 8
        %2472 = vbcast.lane.b32.xlu0 %v2466, %s2471
        %v2473 = vpop.permute.xlu0 %2472
        %s2475 = sor.u32 256, 16
        %2476 = vbcast.lane.b32.xlu0 %v2466, %s2475
        %v2477 = vpop.permute.xlu0 %2476
        %s2479 = sor.u32 256, 24
        %2480 = vbcast.lane.b32.xlu0 %v2466, %s2479
        %v2481 = vpop.permute.xlu0 %2480
        %s2483 = sor.u32 256, 32
        %2484 = vbcast.lane.b32.xlu0 %v2466, %s2483
        %v2485 = vpop.permute.xlu0 %2484
        %s2487 = sor.u32 256, 40
        %2488 = vbcast.lane.b32.xlu0 %v2466, %s2487
        %v2489 = vpop.permute.xlu0 %2488
        %s2491 = sor.u32 256, 48
        %2492 = vbcast.lane.b32.xlu0 %v2466, %s2491
        %v2493 = vpop.permute.xlu0 %2492
        %s2495 = sor.u32 256, 56
        %2496 = vbcast.lane.b32.xlu0 %v2466, %s2495
        %v2497 = vpop.permute.xlu0 %2496
        %s2499 = sor.u32 256, 64
        %2500 = vbcast.lane.b32.xlu0 %v2466, %s2499
        %v2501 = vpop.permute.xlu0 %2500
        %s2503 = sor.u32 256, 72
        %2504 = vbcast.lane.b32.xlu0 %v2466, %s2503
        %v2505 = vpop.permute.xlu0 %2504
        %s2507 = sor.u32 256, 80
        %2508 = vbcast.lane.b32.xlu0 %v2466, %s2507
        %v2509 = vpop.permute.xlu0 %2508
        %s2511 = sor.u32 256, 88
        %2512 = vbcast.lane.b32.xlu0 %v2466, %s2511
        %v2513 = vpop.permute.xlu0 %2512
        %s2515 = sor.u32 256, 96
        %2516 = vbcast.lane.b32.xlu0 %v2466, %s2515
        %v2517 = vpop.permute.xlu0 %2516
        %s2519 = sor.u32 256, 104
        %2520 = vbcast.lane.b32.xlu0 %v2466, %s2519
        %v2521 = vpop.permute.xlu0 %2520
        %s2523 = sor.u32 256, 112
        %2524 = vbcast.lane.b32.xlu0 %v2466, %s2523
        %v2525 = vpop.permute.xlu0 %2524
        %s2527 = sor.u32 256, 120
        %2528 = vbcast.lane.b32.xlu0 %v2466, %s2527
        %v2529 = vpop.permute.xlu0 %2528
        %v2530 = vlaneseq
        %v2531 = vshrl.u32 %v2530, 7
        %v2532 = vsub.s32 6, %v2531
        %v2533 = vrot.slane %v2126, %v2532
        %2535 = vbcast.lane.b32.xlu0 %v2533, 256
        %v2536 = vpop.permute.xlu0 %2535
        %s2538 = sor.u32 256, 8
        %2539 = vbcast.lane.b32.xlu0 %v2533, %s2538
        %v2540 = vpop.permute.xlu0 %2539
        %s2542 = sor.u32 256, 16
        %2543 = vbcast.lane.b32.xlu0 %v2533, %s2542
        %v2544 = vpop.permute.xlu0 %2543
        %s2546 = sor.u32 256, 24
        %2547 = vbcast.lane.b32.xlu0 %v2533, %s2546
        %v2548 = vpop.permute.xlu0 %2547
        %s2550 = sor.u32 256, 32
        %2551 = vbcast.lane.b32.xlu0 %v2533, %s2550
        %v2552 = vpop.permute.xlu0 %2551
        %s2554 = sor.u32 256, 40
        %2555 = vbcast.lane.b32.xlu0 %v2533, %s2554
        %v2556 = vpop.permute.xlu0 %2555
        %s2558 = sor.u32 256, 48
        %2559 = vbcast.lane.b32.xlu0 %v2533, %s2558
        %v2560 = vpop.permute.xlu0 %2559
        %s2562 = sor.u32 256, 56
        %2563 = vbcast.lane.b32.xlu0 %v2533, %s2562
        %v2564 = vpop.permute.xlu0 %2563
        %s2566 = sor.u32 256, 64
        %2567 = vbcast.lane.b32.xlu0 %v2533, %s2566
        %v2568 = vpop.permute.xlu0 %2567
        %s2570 = sor.u32 256, 72
        %2571 = vbcast.lane.b32.xlu0 %v2533, %s2570
        %v2572 = vpop.permute.xlu0 %2571
        %s2574 = sor.u32 256, 80
        %2575 = vbcast.lane.b32.xlu0 %v2533, %s2574
        %v2576 = vpop.permute.xlu0 %2575
        %s2578 = sor.u32 256, 88
        %2579 = vbcast.lane.b32.xlu0 %v2533, %s2578
        %v2580 = vpop.permute.xlu0 %2579
        %s2582 = sor.u32 256, 96
        %2583 = vbcast.lane.b32.xlu0 %v2533, %s2582
        %v2584 = vpop.permute.xlu0 %2583
        %s2586 = sor.u32 256, 104
        %2587 = vbcast.lane.b32.xlu0 %v2533, %s2586
        %v2588 = vpop.permute.xlu0 %2587
        %s2590 = sor.u32 256, 112
        %2591 = vbcast.lane.b32.xlu0 %v2533, %s2590
        %v2592 = vpop.permute.xlu0 %2591
        %s2594 = sor.u32 256, 120
        %2595 = vbcast.lane.b32.xlu0 %v2533, %s2594
        %v2596 = vpop.permute.xlu0 %2595
        %v2597 = vlaneseq
        %v2598 = vshrl.u32 %v2597, 7
        %v2599 = vsub.s32 7, %v2598
        %v2600 = vrot.slane %v2126, %v2599
        %2602 = vbcast.lane.b32.xlu0 %v2600, 256
        %v2603 = vpop.permute.xlu0 %2602
        %s2605 = sor.u32 256, 8
        %2606 = vbcast.lane.b32.xlu0 %v2600, %s2605
        %v2607 = vpop.permute.xlu0 %2606
        %s2609 = sor.u32 256, 16
        %2610 = vbcast.lane.b32.xlu0 %v2600, %s2609
        %v2611 = vpop.permute.xlu0 %2610
        %s2613 = sor.u32 256, 24
        %2614 = vbcast.lane.b32.xlu0 %v2600, %s2613
        %v2615 = vpop.permute.xlu0 %2614
        %s2617 = sor.u32 256, 32
        %2618 = vbcast.lane.b32.xlu0 %v2600, %s2617
        %v2619 = vpop.permute.xlu0 %2618
        %s2621 = sor.u32 256, 40
        %2622 = vbcast.lane.b32.xlu0 %v2600, %s2621
        %v2623 = vpop.permute.xlu0 %2622
        %s2625 = sor.u32 256, 48
        %2626 = vbcast.lane.b32.xlu0 %v2600, %s2625
        %v2627 = vpop.permute.xlu0 %2626
        %s2629 = sor.u32 256, 56
        %2630 = vbcast.lane.b32.xlu0 %v2600, %s2629
        %v2631 = vpop.permute.xlu0 %2630
        %s2633 = sor.u32 256, 64
        %2634 = vbcast.lane.b32.xlu0 %v2600, %s2633
        %v2635 = vpop.permute.xlu0 %2634
        %s2637 = sor.u32 256, 72
        %2638 = vbcast.lane.b32.xlu0 %v2600, %s2637
        %v2639 = vpop.permute.xlu0 %2638
        %s2641 = sor.u32 256, 80
        %2642 = vbcast.lane.b32.xlu0 %v2600, %s2641
        %v2643 = vpop.permute.xlu0 %2642
        %s2645 = sor.u32 256, 88
        %2646 = vbcast.lane.b32.xlu0 %v2600, %s2645
        %v2647 = vpop.permute.xlu0 %2646
        %s2649 = sor.u32 256, 96
        %2650 = vbcast.lane.b32.xlu0 %v2600, %s2649
        %v2651 = vpop.permute.xlu0 %2650
        %s2653 = sor.u32 256, 104
        %2654 = vbcast.lane.b32.xlu0 %v2600, %s2653
        %v2655 = vpop.permute.xlu0 %2654
        %s2657 = sor.u32 256, 112
        %2658 = vbcast.lane.b32.xlu0 %v2600, %s2657
        %v2659 = vpop.permute.xlu0 %2658
        %s2661 = sor.u32 256, 120
        %2662 = vbcast.lane.b32.xlu0 %v2600, %s2661
        %v2663 = vpop.permute.xlu0 %2662
        %v2792 = vadd.f32 %v1744, %v2134
        %v2793 = vadd.f32 %v1747, %v2138
        %v2794 = vadd.f32 %v1750, %v2142
        %v2795 = vadd.f32 %v1753, %v2146
        %v2796 = vadd.f32 %v1756, %v2150
        %v2797 = vadd.f32 %v1759, %v2154
        %v2798 = vadd.f32 %v1762, %v2158
        %v2799 = vadd.f32 %v1765, %v2162
        %v2800 = vadd.f32 %v1768, %v2166
        %v2801 = vadd.f32 %v1771, %v2170
        %v2802 = vadd.f32 %v1774, %v2174
        %v2803 = vadd.f32 %v1777, %v2178
        %v2804 = vadd.f32 %v1780, %v2182
        %v2805 = vadd.f32 %v1783, %v2186
        %v2806 = vadd.f32 %v1786, %v2190
        %v2807 = vadd.f32 %v1789, %v2194
        %v2808 = vadd.f32 %v1792, %v2201
        %v2809 = vadd.f32 %v1795, %v2205
        %v2810 = vadd.f32 %v1798, %v2209
        %v2811 = vadd.f32 %v1801, %v2213
        %v2812 = vadd.f32 %v1804, %v2217
        %v2813 = vadd.f32 %v1807, %v2221
        %v2814 = vadd.f32 %v1810, %v2225
        %v2815 = vadd.f32 %v1813, %v2229
        %v2816 = vadd.f32 %v1816, %v2233
        %v2817 = vadd.f32 %v1819, %v2237
        %v2818 = vadd.f32 %v1822, %v2241
        %v2819 = vadd.f32 %v1825, %v2245
        %v2820 = vadd.f32 %v1828, %v2249
        %v2821 = vadd.f32 %v1831, %v2253
        %v2822 = vadd.f32 %v1834, %v2257
        %v2823 = vadd.f32 %v1837, %v2261
        %v2824 = vadd.f32 %v1840, %v2268
        %v2825 = vadd.f32 %v1843, %v2272
        %v2826 = vadd.f32 %v1846, %v2276
        %v2827 = vadd.f32 %v1849, %v2280
        %v2828 = vadd.f32 %v1852, %v2284
        %v2829 = vadd.f32 %v1855, %v2288
        %v2830 = vadd.f32 %v1858, %v2292
        %v2831 = vadd.f32 %v1861, %v2296
        %v2832 = vadd.f32 %v1864, %v2300
        %v2833 = vadd.f32 %v1867, %v2304
        %v2834 = vadd.f32 %v1870, %v2308
        %v2835 = vadd.f32 %v1873, %v2312
        %v2836 = vadd.f32 %v1876, %v2316
        %v2837 = vadd.f32 %v1879, %v2320
        %v2838 = vadd.f32 %v1882, %v2324
        %v2839 = vadd.f32 %v1885, %v2328
        %v2840 = vadd.f32 %v1888, %v2335
        %v2841 = vadd.f32 %v1891, %v2339
        %v2842 = vadd.f32 %v1894, %v2343
        %v2843 = vadd.f32 %v1897, %v2347
        %v2844 = vadd.f32 %v1900, %v2351
        %v2845 = vadd.f32 %v1903, %v2355
        %v2846 = vadd.f32 %v1906, %v2359
        %v2847 = vadd.f32 %v1909, %v2363
        %v2848 = vadd.f32 %v1912, %v2367
        %v2849 = vadd.f32 %v1915, %v2371
        %v2850 = vadd.f32 %v1918, %v2375
        %v2851 = vadd.f32 %v1921, %v2379
        %v2852 = vadd.f32 %v1924, %v2383
        %v2853 = vadd.f32 %v1927, %v2387
        %v2854 = vadd.f32 %v1930, %v2391
        %v2855 = vadd.f32 %v1933, %v2395
        %v2856 = vadd.f32 %v1936, %v2402
        %v2857 = vadd.f32 %v1939, %v2406
        %v2858 = vadd.f32 %v1942, %v2410
        %v2859 = vadd.f32 %v1945, %v2414
        %v2860 = vadd.f32 %v1948, %v2418
        %v2861 = vadd.f32 %v1951, %v2422
        %v2862 = vadd.f32 %v1954, %v2426
        %v2863 = vadd.f32 %v1957, %v2430
        %v2864 = vadd.f32 %v1960, %v2434
        %v2865 = vadd.f32 %v1963, %v2438
        %v2866 = vadd.f32 %v1966, %v2442
        %v2867 = vadd.f32 %v1969, %v2446
        %v2868 = vadd.f32 %v1972, %v2450
        %v2869 = vadd.f32 %v1975, %v2454
        %v2870 = vadd.f32 %v1978, %v2458
        %v2871 = vadd.f32 %v1981, %v2462
        %v2872 = vadd.f32 %v1984, %v2469
        %v2873 = vadd.f32 %v1987, %v2473
        %v2874 = vadd.f32 %v1990, %v2477
        %v2875 = vadd.f32 %v1993, %v2481
        %v2876 = vadd.f32 %v1996, %v2485
        %v2877 = vadd.f32 %v1999, %v2489
        %v2878 = vadd.f32 %v2002, %v2493
        %v2879 = vadd.f32 %v2005, %v2497
        %v2880 = vadd.f32 %v2008, %v2501
        %v2881 = vadd.f32 %v2011, %v2505
        %v2882 = vadd.f32 %v2014, %v2509
        %v2883 = vadd.f32 %v2017, %v2513
        %v2884 = vadd.f32 %v2020, %v2517
        %v2885 = vadd.f32 %v2023, %v2521
        %v2886 = vadd.f32 %v2026, %v2525
        %v2887 = vadd.f32 %v2029, %v2529
        %v2888 = vadd.f32 %v2032, %v2536
        %v2889 = vadd.f32 %v2035, %v2540
        %v2890 = vadd.f32 %v2038, %v2544
        %v2891 = vadd.f32 %v2041, %v2548
        %v2892 = vadd.f32 %v2044, %v2552
        %v2893 = vadd.f32 %v2047, %v2556
        %v2894 = vadd.f32 %v2050, %v2560
        %v2895 = vadd.f32 %v2053, %v2564
        %v2896 = vadd.f32 %v2056, %v2568
        %v2897 = vadd.f32 %v2059, %v2572
        %v2898 = vadd.f32 %v2062, %v2576
        %v2899 = vadd.f32 %v2065, %v2580
        %v2900 = vadd.f32 %v2068, %v2584
        %v2901 = vadd.f32 %v2071, %v2588
        %v2902 = vadd.f32 %v2074, %v2592
        %v2903 = vadd.f32 %v2077, %v2596
        %v2904 = vadd.f32 %v2080, %v2603
        %v2905 = vadd.f32 %v2083, %v2607
        %v2906 = vadd.f32 %v2086, %v2611
        %v2907 = vadd.f32 %v2089, %v2615
        %v2908 = vadd.f32 %v2092, %v2619
        %v2909 = vadd.f32 %v2095, %v2623
        %v2910 = vadd.f32 %v2098, %v2627
        %v2911 = vadd.f32 %v2101, %v2631
        %v2912 = vadd.f32 %v2104, %v2635
        %v2913 = vadd.f32 %v2107, %v2639
        %v2914 = vadd.f32 %v2110, %v2643
        %v2915 = vadd.f32 %v2113, %v2647
        %v2916 = vadd.f32 %v2116, %v2651
        %v2917 = vadd.f32 %v2119, %v2655
        %v2918 = vadd.f32 %v2122, %v2659
        %v2919 = vadd.f32 %v2125, %v2663
        %3048 = vset.pattern.permute.xlu0 0
        %3049 = vperm.xlu0 %3048, %v2792
        %v3050 = vpop.permute.xlu0 %3049
        %3051 = vset.pattern.permute.xlu0 0
        %3052 = vperm.xlu0 %3051, %v2793
        %v3053 = vpop.permute.xlu0 %3052
        %3054 = vset.pattern.permute.xlu0 0
        %3055 = vperm.xlu0 %3054, %v2794
        %v3056 = vpop.permute.xlu0 %3055
        %3057 = vset.pattern.permute.xlu0 0
        %3058 = vperm.xlu0 %3057, %v2795
        %v3059 = vpop.permute.xlu0 %3058
        %3060 = vset.pattern.permute.xlu0 0
        %3061 = vperm.xlu0 %3060, %v2796
        %v3062 = vpop.permute.xlu0 %3061
        %3063 = vset.pattern.permute.xlu0 0
        %3064 = vperm.xlu0 %3063, %v2797
        %v3065 = vpop.permute.xlu0 %3064
        %3066 = vset.pattern.permute.xlu0 0
        %3067 = vperm.xlu0 %3066, %v2798
        %v3068 = vpop.permute.xlu0 %3067
        %3069 = vset.pattern.permute.xlu0 0
        %3070 = vperm.xlu0 %3069, %v2799
        %v3071 = vpop.permute.xlu0 %3070
        %3072 = vset.pattern.permute.xlu0 0
        %3073 = vperm.xlu0 %3072, %v2800
        %v3074 = vpop.permute.xlu0 %3073
        %3075 = vset.pattern.permute.xlu0 0
        %3076 = vperm.xlu0 %3075, %v2801
        %v3077 = vpop.permute.xlu0 %3076
        %3078 = vset.pattern.permute.xlu0 0
        %3079 = vperm.xlu0 %3078, %v2802
        %v3080 = vpop.permute.xlu0 %3079
        %3081 = vset.pattern.permute.xlu0 0
        %3082 = vperm.xlu0 %3081, %v2803
        %v3083 = vpop.permute.xlu0 %3082
        %3084 = vset.pattern.permute.xlu0 0
        %3085 = vperm.xlu0 %3084, %v2804
        %v3086 = vpop.permute.xlu0 %3085
        %3087 = vset.pattern.permute.xlu0 0
        %3088 = vperm.xlu0 %3087, %v2805
        %v3089 = vpop.permute.xlu0 %3088
        %3090 = vset.pattern.permute.xlu0 0
        %3091 = vperm.xlu0 %3090, %v2806
        %v3092 = vpop.permute.xlu0 %3091
        %3093 = vset.pattern.permute.xlu0 0
        %3094 = vperm.xlu0 %3093, %v2807
        %v3095 = vpop.permute.xlu0 %3094
        %3096 = vset.pattern.permute.xlu0 0
        %3097 = vperm.xlu0 %3096, %v2808
        %v3098 = vpop.permute.xlu0 %3097
        %3099 = vset.pattern.permute.xlu0 0
        %3100 = vperm.xlu0 %3099, %v2809
        %v3101 = vpop.permute.xlu0 %3100
        %3102 = vset.pattern.permute.xlu0 0
        %3103 = vperm.xlu0 %3102, %v2810
        %v3104 = vpop.permute.xlu0 %3103
        %3105 = vset.pattern.permute.xlu0 0
        %3106 = vperm.xlu0 %3105, %v2811
        %v3107 = vpop.permute.xlu0 %3106
        %3108 = vset.pattern.permute.xlu0 0
        %3109 = vperm.xlu0 %3108, %v2812
        %v3110 = vpop.permute.xlu0 %3109
        %3111 = vset.pattern.permute.xlu0 0
        %3112 = vperm.xlu0 %3111, %v2813
        %v3113 = vpop.permute.xlu0 %3112
        %3114 = vset.pattern.permute.xlu0 0
        %3115 = vperm.xlu0 %3114, %v2814
        %v3116 = vpop.permute.xlu0 %3115
        %3117 = vset.pattern.permute.xlu0 0
        %3118 = vperm.xlu0 %3117, %v2815
        %v3119 = vpop.permute.xlu0 %3118
        %3120 = vset.pattern.permute.xlu0 0
        %3121 = vperm.xlu0 %3120, %v2816
        %v3122 = vpop.permute.xlu0 %3121
        %3123 = vset.pattern.permute.xlu0 0
        %3124 = vperm.xlu0 %3123, %v2817
        %v3125 = vpop.permute.xlu0 %3124
        %3126 = vset.pattern.permute.xlu0 0
        %3127 = vperm.xlu0 %3126, %v2818
        %v3128 = vpop.permute.xlu0 %3127
        %3129 = vset.pattern.permute.xlu0 0
        %3130 = vperm.xlu0 %3129, %v2819
        %v3131 = vpop.permute.xlu0 %3130
        %3132 = vset.pattern.permute.xlu0 0
        %3133 = vperm.xlu0 %3132, %v2820
        %v3134 = vpop.permute.xlu0 %3133
        %3135 = vset.pattern.permute.xlu0 0
        %3136 = vperm.xlu0 %3135, %v2821
        %v3137 = vpop.permute.xlu0 %3136
        %3138 = vset.pattern.permute.xlu0 0
        %3139 = vperm.xlu0 %3138, %v2822
        %v3140 = vpop.permute.xlu0 %3139
        %3141 = vset.pattern.permute.xlu0 0
        %3142 = vperm.xlu0 %3141, %v2823
        %v3143 = vpop.permute.xlu0 %3142
        %3144 = vset.pattern.permute.xlu0 0
        %3145 = vperm.xlu0 %3144, %v2824
        %v3146 = vpop.permute.xlu0 %3145
        %3147 = vset.pattern.permute.xlu0 0
        %3148 = vperm.xlu0 %3147, %v2825
        %v3149 = vpop.permute.xlu0 %3148
        %3150 = vset.pattern.permute.xlu0 0
        %3151 = vperm.xlu0 %3150, %v2826
        %v3152 = vpop.permute.xlu0 %3151
        %3153 = vset.pattern.permute.xlu0 0
        %3154 = vperm.xlu0 %3153, %v2827
        %v3155 = vpop.permute.xlu0 %3154
        %3156 = vset.pattern.permute.xlu0 0
        %3157 = vperm.xlu0 %3156, %v2828
        %v3158 = vpop.permute.xlu0 %3157
        %3159 = vset.pattern.permute.xlu0 0
        %3160 = vperm.xlu0 %3159, %v2829
        %v3161 = vpop.permute.xlu0 %3160
        %3162 = vset.pattern.permute.xlu0 0
        %3163 = vperm.xlu0 %3162, %v2830
        %v3164 = vpop.permute.xlu0 %3163
        %3165 = vset.pattern.permute.xlu0 0
        %3166 = vperm.xlu0 %3165, %v2831
        %v3167 = vpop.permute.xlu0 %3166
        %3168 = vset.pattern.permute.xlu0 0
        %3169 = vperm.xlu0 %3168, %v2832
        %v3170 = vpop.permute.xlu0 %3169
        %3171 = vset.pattern.permute.xlu0 0
        %3172 = vperm.xlu0 %3171, %v2833
        %v3173 = vpop.permute.xlu0 %3172
        %3174 = vset.pattern.permute.xlu0 0
        %3175 = vperm.xlu0 %3174, %v2834
        %v3176 = vpop.permute.xlu0 %3175
        %3177 = vset.pattern.permute.xlu0 0
        %3178 = vperm.xlu0 %3177, %v2835
        %v3179 = vpop.permute.xlu0 %3178
        %3180 = vset.pattern.permute.xlu0 0
        %3181 = vperm.xlu0 %3180, %v2836
        %v3182 = vpop.permute.xlu0 %3181
        %3183 = vset.pattern.permute.xlu0 0
        %3184 = vperm.xlu0 %3183, %v2837
        %v3185 = vpop.permute.xlu0 %3184
        %3186 = vset.pattern.permute.xlu0 0
        %3187 = vperm.xlu0 %3186, %v2838
        %v3188 = vpop.permute.xlu0 %3187
        %3189 = vset.pattern.permute.xlu0 0
        %3190 = vperm.xlu0 %3189, %v2839
        %v3191 = vpop.permute.xlu0 %3190
        %3192 = vset.pattern.permute.xlu0 0
        %3193 = vperm.xlu0 %3192, %v2840
        %v3194 = vpop.permute.xlu0 %3193
        %3195 = vset.pattern.permute.xlu0 0
        %3196 = vperm.xlu0 %3195, %v2841
        %v3197 = vpop.permute.xlu0 %3196
        %3198 = vset.pattern.permute.xlu0 0
        %3199 = vperm.xlu0 %3198, %v2842
        %v3200 = vpop.permute.xlu0 %3199
        %3201 = vset.pattern.permute.xlu0 0
        %3202 = vperm.xlu0 %3201, %v2843
        %v3203 = vpop.permute.xlu0 %3202
        %3204 = vset.pattern.permute.xlu0 0
        %3205 = vperm.xlu0 %3204, %v2844
        %v3206 = vpop.permute.xlu0 %3205
        %3207 = vset.pattern.permute.xlu0 0
        %3208 = vperm.xlu0 %3207, %v2845
        %v3209 = vpop.permute.xlu0 %3208
        %3210 = vset.pattern.permute.xlu0 0
        %3211 = vperm.xlu0 %3210, %v2846
        %v3212 = vpop.permute.xlu0 %3211
        %3213 = vset.pattern.permute.xlu0 0
        %3214 = vperm.xlu0 %3213, %v2847
        %v3215 = vpop.permute.xlu0 %3214
        %3216 = vset.pattern.permute.xlu0 0
        %3217 = vperm.xlu0 %3216, %v2848
        %v3218 = vpop.permute.xlu0 %3217
        %3219 = vset.pattern.permute.xlu0 0
        %3220 = vperm.xlu0 %3219, %v2849
        %v3221 = vpop.permute.xlu0 %3220
        %3222 = vset.pattern.permute.xlu0 0
        %3223 = vperm.xlu0 %3222, %v2850
        %v3224 = vpop.permute.xlu0 %3223
        %3225 = vset.pattern.permute.xlu0 0
        %3226 = vperm.xlu0 %3225, %v2851
        %v3227 = vpop.permute.xlu0 %3226
        %3228 = vset.pattern.permute.xlu0 0
        %3229 = vperm.xlu0 %3228, %v2852
        %v3230 = vpop.permute.xlu0 %3229
        %3231 = vset.pattern.permute.xlu0 0
        %3232 = vperm.xlu0 %3231, %v2853
        %v3233 = vpop.permute.xlu0 %3232
        %3234 = vset.pattern.permute.xlu0 0
        %3235 = vperm.xlu0 %3234, %v2854
        %v3236 = vpop.permute.xlu0 %3235
        %3237 = vset.pattern.permute.xlu0 0
        %3238 = vperm.xlu0 %3237, %v2855
        %v3239 = vpop.permute.xlu0 %3238
        %3240 = vset.pattern.permute.xlu0 0
        %3241 = vperm.xlu0 %3240, %v2856
        %v3242 = vpop.permute.xlu0 %3241
        %3243 = vset.pattern.permute.xlu0 0
        %3244 = vperm.xlu0 %3243, %v2857
        %v3245 = vpop.permute.xlu0 %3244
        %3246 = vset.pattern.permute.xlu0 0
        %3247 = vperm.xlu0 %3246, %v2858
        %v3248 = vpop.permute.xlu0 %3247
        %3249 = vset.pattern.permute.xlu0 0
        %3250 = vperm.xlu0 %3249, %v2859
        %v3251 = vpop.permute.xlu0 %3250
        %3252 = vset.pattern.permute.xlu0 0
        %3253 = vperm.xlu0 %3252, %v2860
        %v3254 = vpop.permute.xlu0 %3253
        %3255 = vset.pattern.permute.xlu0 0
        %3256 = vperm.xlu0 %3255, %v2861
        %v3257 = vpop.permute.xlu0 %3256
        %3258 = vset.pattern.permute.xlu0 0
        %3259 = vperm.xlu0 %3258, %v2862
        %v3260 = vpop.permute.xlu0 %3259
        %3261 = vset.pattern.permute.xlu0 0
        %3262 = vperm.xlu0 %3261, %v2863
        %v3263 = vpop.permute.xlu0 %3262
        %3264 = vset.pattern.permute.xlu0 0
        %3265 = vperm.xlu0 %3264, %v2864
        %v3266 = vpop.permute.xlu0 %3265
        %3267 = vset.pattern.permute.xlu0 0
        %3268 = vperm.xlu0 %3267, %v2865
        %v3269 = vpop.permute.xlu0 %3268
        %3270 = vset.pattern.permute.xlu0 0
        %3271 = vperm.xlu0 %3270, %v2866
        %v3272 = vpop.permute.xlu0 %3271
        %3273 = vset.pattern.permute.xlu0 0
        %3274 = vperm.xlu0 %3273, %v2867
        %v3275 = vpop.permute.xlu0 %3274
        %3276 = vset.pattern.permute.xlu0 0
        %3277 = vperm.xlu0 %3276, %v2868
        %v3278 = vpop.permute.xlu0 %3277
        %3279 = vset.pattern.permute.xlu0 0
        %3280 = vperm.xlu0 %3279, %v2869
        %v3281 = vpop.permute.xlu0 %3280
        %3282 = vset.pattern.permute.xlu0 0
        %3283 = vperm.xlu0 %3282, %v2870
        %v3284 = vpop.permute.xlu0 %3283
        %3285 = vset.pattern.permute.xlu0 0
        %3286 = vperm.xlu0 %3285, %v2871
        %v3287 = vpop.permute.xlu0 %3286
        %3288 = vset.pattern.permute.xlu0 0
        %3289 = vperm.xlu0 %3288, %v2872
        %v3290 = vpop.permute.xlu0 %3289
        %3291 = vset.pattern.permute.xlu0 0
        %3292 = vperm.xlu0 %3291, %v2873
        %v3293 = vpop.permute.xlu0 %3292
        %3294 = vset.pattern.permute.xlu0 0
        %3295 = vperm.xlu0 %3294, %v2874
        %v3296 = vpop.permute.xlu0 %3295
        %3297 = vset.pattern.permute.xlu0 0
        %3298 = vperm.xlu0 %3297, %v2875
        %v3299 = vpop.permute.xlu0 %3298
        %3300 = vset.pattern.permute.xlu0 0
        %3301 = vperm.xlu0 %3300, %v2876
        %v3302 = vpop.permute.xlu0 %3301
        %3303 = vset.pattern.permute.xlu0 0
        %3304 = vperm.xlu0 %3303, %v2877
        %v3305 = vpop.permute.xlu0 %3304
        %3306 = vset.pattern.permute.xlu0 0
        %3307 = vperm.xlu0 %3306, %v2878
        %v3308 = vpop.permute.xlu0 %3307
        %3309 = vset.pattern.permute.xlu0 0
        %3310 = vperm.xlu0 %3309, %v2879
        %v3311 = vpop.permute.xlu0 %3310
        %3312 = vset.pattern.permute.xlu0 0
        %3313 = vperm.xlu0 %3312, %v2880
        %v3314 = vpop.permute.xlu0 %3313
        %3315 = vset.pattern.permute.xlu0 0
        %3316 = vperm.xlu0 %3315, %v2881
        %v3317 = vpop.permute.xlu0 %3316
        %3318 = vset.pattern.permute.xlu0 0
        %3319 = vperm.xlu0 %3318, %v2882
        %v3320 = vpop.permute.xlu0 %3319
        %3321 = vset.pattern.permute.xlu0 0
        %3322 = vperm.xlu0 %3321, %v2883
        %v3323 = vpop.permute.xlu0 %3322
        %3324 = vset.pattern.permute.xlu0 0
        %3325 = vperm.xlu0 %3324, %v2884
        %v3326 = vpop.permute.xlu0 %3325
        %3327 = vset.pattern.permute.xlu0 0
        %3328 = vperm.xlu0 %3327, %v2885
        %v3329 = vpop.permute.xlu0 %3328
        %3330 = vset.pattern.permute.xlu0 0
        %3331 = vperm.xlu0 %3330, %v2886
        %v3332 = vpop.permute.xlu0 %3331
        %3333 = vset.pattern.permute.xlu0 0
        %3334 = vperm.xlu0 %3333, %v2887
        %v3335 = vpop.permute.xlu0 %3334
        %3336 = vset.pattern.permute.xlu0 0
        %3337 = vperm.xlu0 %3336, %v2888
        %v3338 = vpop.permute.xlu0 %3337
        %3339 = vset.pattern.permute.xlu0 0
        %3340 = vperm.xlu0 %3339, %v2889
        %v3341 = vpop.permute.xlu0 %3340
        %3342 = vset.pattern.permute.xlu0 0
        %3343 = vperm.xlu0 %3342, %v2890
        %v3344 = vpop.permute.xlu0 %3343
        %3345 = vset.pattern.permute.xlu0 0
        %3346 = vperm.xlu0 %3345, %v2891
        %v3347 = vpop.permute.xlu0 %3346
        %3348 = vset.pattern.permute.xlu0 0
        %3349 = vperm.xlu0 %3348, %v2892
        %v3350 = vpop.permute.xlu0 %3349
        %3351 = vset.pattern.permute.xlu0 0
        %3352 = vperm.xlu0 %3351, %v2893
        %v3353 = vpop.permute.xlu0 %3352
        %3354 = vset.pattern.permute.xlu0 0
        %3355 = vperm.xlu0 %3354, %v2894
        %v3356 = vpop.permute.xlu0 %3355
        %3357 = vset.pattern.permute.xlu0 0
        %3358 = vperm.xlu0 %3357, %v2895
        %v3359 = vpop.permute.xlu0 %3358
        %3360 = vset.pattern.permute.xlu0 0
        %3361 = vperm.xlu0 %3360, %v2896
        %v3362 = vpop.permute.xlu0 %3361
        %3363 = vset.pattern.permute.xlu0 0
        %3364 = vperm.xlu0 %3363, %v2897
        %v3365 = vpop.permute.xlu0 %3364
        %3366 = vset.pattern.permute.xlu0 0
        %3367 = vperm.xlu0 %3366, %v2898
        %v3368 = vpop.permute.xlu0 %3367
        %3369 = vset.pattern.permute.xlu0 0
        %3370 = vperm.xlu0 %3369, %v2899
        %v3371 = vpop.permute.xlu0 %3370
        %3372 = vset.pattern.permute.xlu0 0
        %3373 = vperm.xlu0 %3372, %v2900
        %v3374 = vpop.permute.xlu0 %3373
        %3375 = vset.pattern.permute.xlu0 0
        %3376 = vperm.xlu0 %3375, %v2901
        %v3377 = vpop.permute.xlu0 %3376
        %3378 = vset.pattern.permute.xlu0 0
        %3379 = vperm.xlu0 %3378, %v2902
        %v3380 = vpop.permute.xlu0 %3379
        %3381 = vset.pattern.permute.xlu0 0
        %3382 = vperm.xlu0 %3381, %v2903
        %v3383 = vpop.permute.xlu0 %3382
        %3384 = vset.pattern.permute.xlu0 0
        %3385 = vperm.xlu0 %3384, %v2904
        %v3386 = vpop.permute.xlu0 %3385
        %3387 = vset.pattern.permute.xlu0 0
        %3388 = vperm.xlu0 %3387, %v2905
        %v3389 = vpop.permute.xlu0 %3388
        %3390 = vset.pattern.permute.xlu0 0
        %3391 = vperm.xlu0 %3390, %v2906
        %v3392 = vpop.permute.xlu0 %3391
        %3393 = vset.pattern.permute.xlu0 0
        %3394 = vperm.xlu0 %3393, %v2907
        %v3395 = vpop.permute.xlu0 %3394
        %3396 = vset.pattern.permute.xlu0 0
        %3397 = vperm.xlu0 %3396, %v2908
        %v3398 = vpop.permute.xlu0 %3397
        %3399 = vset.pattern.permute.xlu0 0
        %3400 = vperm.xlu0 %3399, %v2909
        %v3401 = vpop.permute.xlu0 %3400
        %3402 = vset.pattern.permute.xlu0 0
        %3403 = vperm.xlu0 %3402, %v2910
        %v3404 = vpop.permute.xlu0 %3403
        %3405 = vset.pattern.permute.xlu0 0
        %3406 = vperm.xlu0 %3405, %v2911
        %v3407 = vpop.permute.xlu0 %3406
        %3408 = vset.pattern.permute.xlu0 0
        %3409 = vperm.xlu0 %3408, %v2912
        %v3410 = vpop.permute.xlu0 %3409
        %3411 = vset.pattern.permute.xlu0 0
        %3412 = vperm.xlu0 %3411, %v2913
        %v3413 = vpop.permute.xlu0 %3412
        %3414 = vset.pattern.permute.xlu0 0
        %3415 = vperm.xlu0 %3414, %v2914
        %v3416 = vpop.permute.xlu0 %3415
        %3417 = vset.pattern.permute.xlu0 0
        %3418 = vperm.xlu0 %3417, %v2915
        %v3419 = vpop.permute.xlu0 %3418
        %3420 = vset.pattern.permute.xlu0 0
        %3421 = vperm.xlu0 %3420, %v2916
        %v3422 = vpop.permute.xlu0 %3421
        %3423 = vset.pattern.permute.xlu0 0
        %3424 = vperm.xlu0 %3423, %v2917
        %v3425 = vpop.permute.xlu0 %3424
        %3426 = vset.pattern.permute.xlu0 0
        %3427 = vperm.xlu0 %3426, %v2918
        %v3428 = vpop.permute.xlu0 %3427
        %3429 = vset.pattern.permute.xlu0 0
        %3430 = vperm.xlu0 %3429, %v2919
        %v3431 = vpop.permute.xlu0 %3430
        %v3432 = vlaneseq
        %v3433 = vand.u32 %v3432, 127
        %v3434 = vlaneseq
        %v3435 = vshrl.u32 %v3434, 7
        %v3436 = vsub.s32 %v3433, %v3435
        %v3437 = vrot.slane %v3050, %v3436
        %v3438 = vadd.s32 %v3433, 4294967288
        %v3439 = vlaneseq
        %v3440 = vshrl.u32 %v3439, 7
        %v3441 = vsub.s32 %v3438, %v3440
        %v3442 = vrot.slane %v3053, %v3441
        %vm3443 = vcmask 130112
        %v3444 = vsel %vm3443, %v3442, %v3437
        %v3445 = vadd.s32 %v3433, 4294967280
        %v3446 = vlaneseq
        %v3447 = vshrl.u32 %v3446, 7
        %v3448 = vsub.s32 %v3445, %v3447
        %v3449 = vrot.slane %v3056, %v3448
        %vm3450 = vcmask 195712
        %v3451 = vsel %vm3450, %v3449, %v3444
        %v3452 = vadd.s32 %v3433, 4294967272
        %v3453 = vlaneseq
        %v3454 = vshrl.u32 %v3453, 7
        %v3455 = vsub.s32 %v3452, %v3454
        %v3456 = vrot.slane %v3059, %v3455
        %vm3457 = vcmask 261312
        %v3458 = vsel %vm3457, %v3456, %v3451
        %v3459 = vadd.s32 %v3433, 4294967264
        %v3460 = vlaneseq
        %v3461 = vshrl.u32 %v3460, 7
        %v3462 = vsub.s32 %v3459, %v3461
        %v3463 = vrot.slane %v3062, %v3462
        %vm3464 = vcmask 326912
        %v3465 = vsel %vm3464, %v3463, %v3458
        %v3466 = vadd.s32 %v3433, 4294967256
        %v3467 = vlaneseq
        %v3468 = vshrl.u32 %v3467, 7
        %v3469 = vsub.s32 %v3466, %v3468
        %v3470 = vrot.slane %v3065, %v3469
        %vm3471 = vcmask 392512
        %v3472 = vsel %vm3471, %v3470, %v3465
        %v3473 = vadd.s32 %v3433, 4294967248
        %v3474 = vlaneseq
        %v3475 = vshrl.u32 %v3474, 7
        %v3476 = vsub.s32 %v3473, %v3475
        %v3477 = vrot.slane %v3068, %v3476
        %vm3478 = vcmask 458112
        %v3479 = vsel %vm3478, %v3477, %v3472
        %v3480 = vadd.s32 %v3433, 4294967240
        %v3481 = vlaneseq
        %v3482 = vshrl.u32 %v3481, 7
        %v3483 = vsub.s32 %v3480, %v3482
        %v3484 = vrot.slane %v3071, %v3483
        %vm3485 = vcmask 523712
        %v3486 = vsel %vm3485, %v3484, %v3479
        %v3487 = vadd.s32 %v3433, 4294967232
        %v3488 = vlaneseq
        %v3489 = vshrl.u32 %v3488, 7
        %v3490 = vsub.s32 %v3487, %v3489
        %v3491 = vrot.slane %v3074, %v3490
        %vm3492 = vcmask 589312
        %v3493 = vsel %vm3492, %v3491, %v3486
        %v3494 = vadd.s32 %v3433, 4294967224
        %v3495 = vlaneseq
        %v3496 = vshrl.u32 %v3495, 7
        %v3497 = vsub.s32 %v3494, %v3496
        %v3498 = vrot.slane %v3077, %v3497
        %vm3499 = vcmask 654912
        %v3500 = vsel %vm3499, %v3498, %v3493
        %v3501 = vadd.s32 %v3433, 4294967216
        %v3502 = vlaneseq
        %v3503 = vshrl.u32 %v3502, 7
        %v3504 = vsub.s32 %v3501, %v3503
        %v3505 = vrot.slane %v3080, %v3504
        %vm3506 = vcmask 720512
        %v3507 = vsel %vm3506, %v3505, %v3500
        %v3508 = vadd.s32 %v3433, 4294967208
        %v3509 = vlaneseq
        %v3510 = vshrl.u32 %v3509, 7
        %v3511 = vsub.s32 %v3508, %v3510
        %v3512 = vrot.slane %v3083, %v3511
        %vm3513 = vcmask 786112
        %v3514 = vsel %vm3513, %v3512, %v3507
        %v3515 = vadd.s32 %v3433, 4294967200
        %v3516 = vlaneseq
        %v3517 = vshrl.u32 %v3516, 7
        %v3518 = vsub.s32 %v3515, %v3517
        %v3519 = vrot.slane %v3086, %v3518
        %vm3520 = vcmask 851712
        %v3521 = vsel %vm3520, %v3519, %v3514
        %v3522 = vadd.s32 %v3433, 4294967192
        %v3523 = vlaneseq
        %v3524 = vshrl.u32 %v3523, 7
        %v3525 = vsub.s32 %v3522, %v3524
        %v3526 = vrot.slane %v3089, %v3525
        %vm3527 = vcmask 917312
        %v3528 = vsel %vm3527, %v3526, %v3521
        %v3529 = vadd.s32 %v3433, 4294967184
        %v3530 = vlaneseq
        %v3531 = vshrl.u32 %v3530, 7
        %v3532 = vsub.s32 %v3529, %v3531
        %v3533 = vrot.slane %v3092, %v3532
        %vm3534 = vcmask 982912
        %v3535 = vsel %vm3534, %v3533, %v3528
        %v3536 = vadd.s32 %v3433, 4294967176
        %v3537 = vlaneseq
        %v3538 = vshrl.u32 %v3537, 7
        %v3539 = vsub.s32 %v3536, %v3538
        %v3540 = vrot.slane %v3095, %v3539
        %vm3541 = vcmask 1048512
        %v3542 = vsel %vm3541, %v3540, %v3535
        %v3543 = vlaneseq
        %v3544 = vshrl.u32 %v3543, 7
        %v3545 = vsub.s32 %v3433, %v3544
        %v3546 = vrot.slane %v3098, %v3545
        %v3547 = vlaneseq
        %v3548 = vshrl.u32 %v3547, 7
        %v3549 = vsub.s32 %v3438, %v3548
        %v3550 = vrot.slane %v3101, %v3549
        %v3551 = vsel %vm3443, %v3550, %v3546
        %v3552 = vlaneseq
        %v3553 = vshrl.u32 %v3552, 7
        %v3554 = vsub.s32 %v3445, %v3553
        %v3555 = vrot.slane %v3104, %v3554
        %v3556 = vsel %vm3450, %v3555, %v3551
        %v3557 = vlaneseq
        %v3558 = vshrl.u32 %v3557, 7
        %v3559 = vsub.s32 %v3452, %v3558
        %v3560 = vrot.slane %v3107, %v3559
        %v3561 = vsel %vm3457, %v3560, %v3556
        %v3562 = vlaneseq
        %v3563 = vshrl.u32 %v3562, 7
        %v3564 = vsub.s32 %v3459, %v3563
        %v3565 = vrot.slane %v3110, %v3564
        %v3566 = vsel %vm3464, %v3565, %v3561
        %v3567 = vlaneseq
        %v3568 = vshrl.u32 %v3567, 7
        %v3569 = vsub.s32 %v3466, %v3568
        %v3570 = vrot.slane %v3113, %v3569
        %v3571 = vsel %vm3471, %v3570, %v3566
        %v3572 = vlaneseq
        %v3573 = vshrl.u32 %v3572, 7
        %v3574 = vsub.s32 %v3473, %v3573
        %v3575 = vrot.slane %v3116, %v3574
        %v3576 = vsel %vm3478, %v3575, %v3571
        %v3577 = vlaneseq
        %v3578 = vshrl.u32 %v3577, 7
        %v3579 = vsub.s32 %v3480, %v3578
        %v3580 = vrot.slane %v3119, %v3579
        %v3581 = vsel %vm3485, %v3580, %v3576
        %v3582 = vlaneseq
        %v3583 = vshrl.u32 %v3582, 7
        %v3584 = vsub.s32 %v3487, %v3583
        %v3585 = vrot.slane %v3122, %v3584
        %v3586 = vsel %vm3492, %v3585, %v3581
        %v3587 = vlaneseq
        %v3588 = vshrl.u32 %v3587, 7
        %v3589 = vsub.s32 %v3494, %v3588
        %v3590 = vrot.slane %v3125, %v3589
        %v3591 = vsel %vm3499, %v3590, %v3586
        %v3592 = vlaneseq
        %v3593 = vshrl.u32 %v3592, 7
        %v3594 = vsub.s32 %v3501, %v3593
        %v3595 = vrot.slane %v3128, %v3594
        %v3596 = vsel %vm3506, %v3595, %v3591
        %v3597 = vlaneseq
        %v3598 = vshrl.u32 %v3597, 7
        %v3599 = vsub.s32 %v3508, %v3598
        %v3600 = vrot.slane %v3131, %v3599
        %v3601 = vsel %vm3513, %v3600, %v3596
        %v3602 = vlaneseq
        %v3603 = vshrl.u32 %v3602, 7
        %v3604 = vsub.s32 %v3515, %v3603
        %v3605 = vrot.slane %v3134, %v3604
        %v3606 = vsel %vm3520, %v3605, %v3601
        %v3607 = vlaneseq
        %v3608 = vshrl.u32 %v3607, 7
        %v3609 = vsub.s32 %v3522, %v3608
        %v3610 = vrot.slane %v3137, %v3609
        %v3611 = vsel %vm3527, %v3610, %v3606
        %v3612 = vlaneseq
        %v3613 = vshrl.u32 %v3612, 7
        %v3614 = vsub.s32 %v3529, %v3613
        %v3615 = vrot.slane %v3140, %v3614
        %v3616 = vsel %vm3534, %v3615, %v3611
        %v3617 = vlaneseq
        %v3618 = vshrl.u32 %v3617, 7
        %v3619 = vsub.s32 %v3536, %v3618
        %v3620 = vrot.slane %v3143, %v3619
        %v3621 = vsel %vm3541, %v3620, %v3616
        %v3622 = vlaneseq
        %v3623 = vshrl.u32 %v3622, 7
        %v3624 = vsub.s32 %v3433, %v3623
        %v3625 = vrot.slane %v3146, %v3624
        %v3626 = vlaneseq
        %v3627 = vshrl.u32 %v3626, 7
        %v3628 = vsub.s32 %v3438, %v3627
        %v3629 = vrot.slane %v3149, %v3628
        %v3630 = vsel %vm3443, %v3629, %v3625
        %v3631 = vlaneseq
        %v3632 = vshrl.u32 %v3631, 7
        %v3633 = vsub.s32 %v3445, %v3632
        %v3634 = vrot.slane %v3152, %v3633
        %v3635 = vsel %vm3450, %v3634, %v3630
        %v3636 = vlaneseq
        %v3637 = vshrl.u32 %v3636, 7
        %v3638 = vsub.s32 %v3452, %v3637
        %v3639 = vrot.slane %v3155, %v3638
        %v3640 = vsel %vm3457, %v3639, %v3635
        %v3641 = vlaneseq
        %v3642 = vshrl.u32 %v3641, 7
        %v3643 = vsub.s32 %v3459, %v3642
        %v3644 = vrot.slane %v3158, %v3643
        %v3645 = vsel %vm3464, %v3644, %v3640
        %v3646 = vlaneseq
        %v3647 = vshrl.u32 %v3646, 7
        %v3648 = vsub.s32 %v3466, %v3647
        %v3649 = vrot.slane %v3161, %v3648
        %v3650 = vsel %vm3471, %v3649, %v3645
        %v3651 = vlaneseq
        %v3652 = vshrl.u32 %v3651, 7
        %v3653 = vsub.s32 %v3473, %v3652
        %v3654 = vrot.slane %v3164, %v3653
        %v3655 = vsel %vm3478, %v3654, %v3650
        %v3656 = vlaneseq
        %v3657 = vshrl.u32 %v3656, 7
        %v3658 = vsub.s32 %v3480, %v3657
        %v3659 = vrot.slane %v3167, %v3658
        %v3660 = vsel %vm3485, %v3659, %v3655
        %v3661 = vlaneseq
        %v3662 = vshrl.u32 %v3661, 7
        %v3663 = vsub.s32 %v3487, %v3662
        %v3664 = vrot.slane %v3170, %v3663
        %v3665 = vsel %vm3492, %v3664, %v3660
        %v3666 = vlaneseq
        %v3667 = vshrl.u32 %v3666, 7
        %v3668 = vsub.s32 %v3494, %v3667
        %v3669 = vrot.slane %v3173, %v3668
        %v3670 = vsel %vm3499, %v3669, %v3665
        %v3671 = vlaneseq
        %v3672 = vshrl.u32 %v3671, 7
        %v3673 = vsub.s32 %v3501, %v3672
        %v3674 = vrot.slane %v3176, %v3673
        %v3675 = vsel %vm3506, %v3674, %v3670
        %v3676 = vlaneseq
        %v3677 = vshrl.u32 %v3676, 7
        %v3678 = vsub.s32 %v3508, %v3677
        %v3679 = vrot.slane %v3179, %v3678
        %v3680 = vsel %vm3513, %v3679, %v3675
        %v3681 = vlaneseq
        %v3682 = vshrl.u32 %v3681, 7
        %v3683 = vsub.s32 %v3515, %v3682
        %v3684 = vrot.slane %v3182, %v3683
        %v3685 = vsel %vm3520, %v3684, %v3680
        %v3686 = vlaneseq
        %v3687 = vshrl.u32 %v3686, 7
        %v3688 = vsub.s32 %v3522, %v3687
        %v3689 = vrot.slane %v3185, %v3688
        %v3690 = vsel %vm3527, %v3689, %v3685
        %v3691 = vlaneseq
        %v3692 = vshrl.u32 %v3691, 7
        %v3693 = vsub.s32 %v3529, %v3692
        %v3694 = vrot.slane %v3188, %v3693
        %v3695 = vsel %vm3534, %v3694, %v3690
        %v3696 = vlaneseq
        %v3697 = vshrl.u32 %v3696, 7
        %v3698 = vsub.s32 %v3536, %v3697
        %v3699 = vrot.slane %v3191, %v3698
        %v3700 = vsel %vm3541, %v3699, %v3695
        %v3701 = vlaneseq
        %v3702 = vshrl.u32 %v3701, 7
        %v3703 = vsub.s32 %v3433, %v3702
        %v3704 = vrot.slane %v3194, %v3703
        %v3705 = vlaneseq
        %v3706 = vshrl.u32 %v3705, 7
        %v3707 = vsub.s32 %v3438, %v3706
        %v3708 = vrot.slane %v3197, %v3707
        %v3709 = vsel %vm3443, %v3708, %v3704
        %v3710 = vlaneseq
        %v3711 = vshrl.u32 %v3710, 7
        %v3712 = vsub.s32 %v3445, %v3711
        %v3713 = vrot.slane %v3200, %v3712
        %v3714 = vsel %vm3450, %v3713, %v3709
        %v3715 = vlaneseq
        %v3716 = vshrl.u32 %v3715, 7
        %v3717 = vsub.s32 %v3452, %v3716
        %v3718 = vrot.slane %v3203, %v3717
        %v3719 = vsel %vm3457, %v3718, %v3714
        %v3720 = vlaneseq
        %v3721 = vshrl.u32 %v3720, 7
        %v3722 = vsub.s32 %v3459, %v3721
        %v3723 = vrot.slane %v3206, %v3722
        %v3724 = vsel %vm3464, %v3723, %v3719
        %v3725 = vlaneseq
        %v3726 = vshrl.u32 %v3725, 7
        %v3727 = vsub.s32 %v3466, %v3726
        %v3728 = vrot.slane %v3209, %v3727
        %v3729 = vsel %vm3471, %v3728, %v3724
        %v3730 = vlaneseq
        %v3731 = vshrl.u32 %v3730, 7
        %v3732 = vsub.s32 %v3473, %v3731
        %v3733 = vrot.slane %v3212, %v3732
        %v3734 = vsel %vm3478, %v3733, %v3729
        %v3735 = vlaneseq
        %v3736 = vshrl.u32 %v3735, 7
        %v3737 = vsub.s32 %v3480, %v3736
        %v3738 = vrot.slane %v3215, %v3737
        %v3739 = vsel %vm3485, %v3738, %v3734
        %v3740 = vlaneseq
        %v3741 = vshrl.u32 %v3740, 7
        %v3742 = vsub.s32 %v3487, %v3741
        %v3743 = vrot.slane %v3218, %v3742
        %v3744 = vsel %vm3492, %v3743, %v3739
        %v3745 = vlaneseq
        %v3746 = vshrl.u32 %v3745, 7
        %v3747 = vsub.s32 %v3494, %v3746
        %v3748 = vrot.slane %v3221, %v3747
        %v3749 = vsel %vm3499, %v3748, %v3744
        %v3750 = vlaneseq
        %v3751 = vshrl.u32 %v3750, 7
        %v3752 = vsub.s32 %v3501, %v3751
        %v3753 = vrot.slane %v3224, %v3752
        %v3754 = vsel %vm3506, %v3753, %v3749
        %v3755 = vlaneseq
        %v3756 = vshrl.u32 %v3755, 7
        %v3757 = vsub.s32 %v3508, %v3756
        %v3758 = vrot.slane %v3227, %v3757
        %v3759 = vsel %vm3513, %v3758, %v3754
        %v3760 = vlaneseq
        %v3761 = vshrl.u32 %v3760, 7
        %v3762 = vsub.s32 %v3515, %v3761
        %v3763 = vrot.slane %v3230, %v3762
        %v3764 = vsel %vm3520, %v3763, %v3759
        %v3765 = vlaneseq
        %v3766 = vshrl.u32 %v3765, 7
        %v3767 = vsub.s32 %v3522, %v3766
        %v3768 = vrot.slane %v3233, %v3767
        %v3769 = vsel %vm3527, %v3768, %v3764
        %v3770 = vlaneseq
        %v3771 = vshrl.u32 %v3770, 7
        %v3772 = vsub.s32 %v3529, %v3771
        %v3773 = vrot.slane %v3236, %v3772
        %v3774 = vsel %vm3534, %v3773, %v3769
        %v3775 = vlaneseq
        %v3776 = vshrl.u32 %v3775, 7
        %v3777 = vsub.s32 %v3536, %v3776
        %v3778 = vrot.slane %v3239, %v3777
        %v3779 = vsel %vm3541, %v3778, %v3774
        %v3780 = vlaneseq
        %v3781 = vshrl.u32 %v3780, 7
        %v3782 = vsub.s32 %v3433, %v3781
        %v3783 = vrot.slane %v3242, %v3782
        %v3784 = vlaneseq
        %v3785 = vshrl.u32 %v3784, 7
        %v3786 = vsub.s32 %v3438, %v3785
        %v3787 = vrot.slane %v3245, %v3786
        %v3788 = vsel %vm3443, %v3787, %v3783
        %v3789 = vlaneseq
        %v3790 = vshrl.u32 %v3789, 7
        %v3791 = vsub.s32 %v3445, %v3790
        %v3792 = vrot.slane %v3248, %v3791
        %v3793 = vsel %vm3450, %v3792, %v3788
        %v3794 = vlaneseq
        %v3795 = vshrl.u32 %v3794, 7
        %v3796 = vsub.s32 %v3452, %v3795
        %v3797 = vrot.slane %v3251, %v3796
        %v3798 = vsel %vm3457, %v3797, %v3793
        %v3799 = vlaneseq
        %v3800 = vshrl.u32 %v3799, 7
        %v3801 = vsub.s32 %v3459, %v3800
        %v3802 = vrot.slane %v3254, %v3801
        %v3803 = vsel %vm3464, %v3802, %v3798
        %v3804 = vlaneseq
        %v3805 = vshrl.u32 %v3804, 7
        %v3806 = vsub.s32 %v3466, %v3805
        %v3807 = vrot.slane %v3257, %v3806
        %v3808 = vsel %vm3471, %v3807, %v3803
        %v3809 = vlaneseq
        %v3810 = vshrl.u32 %v3809, 7
        %v3811 = vsub.s32 %v3473, %v3810
        %v3812 = vrot.slane %v3260, %v3811
        %v3813 = vsel %vm3478, %v3812, %v3808
        %v3814 = vlaneseq
        %v3815 = vshrl.u32 %v3814, 7
        %v3816 = vsub.s32 %v3480, %v3815
        %v3817 = vrot.slane %v3263, %v3816
        %v3818 = vsel %vm3485, %v3817, %v3813
        %v3819 = vlaneseq
        %v3820 = vshrl.u32 %v3819, 7
        %v3821 = vsub.s32 %v3487, %v3820
        %v3822 = vrot.slane %v3266, %v3821
        %v3823 = vsel %vm3492, %v3822, %v3818
        %v3824 = vlaneseq
        %v3825 = vshrl.u32 %v3824, 7
        %v3826 = vsub.s32 %v3494, %v3825
        %v3827 = vrot.slane %v3269, %v3826
        %v3828 = vsel %vm3499, %v3827, %v3823
        %v3829 = vlaneseq
        %v3830 = vshrl.u32 %v3829, 7
        %v3831 = vsub.s32 %v3501, %v3830
        %v3832 = vrot.slane %v3272, %v3831
        %v3833 = vsel %vm3506, %v3832, %v3828
        %v3834 = vlaneseq
        %v3835 = vshrl.u32 %v3834, 7
        %v3836 = vsub.s32 %v3508, %v3835
        %v3837 = vrot.slane %v3275, %v3836
        %v3838 = vsel %vm3513, %v3837, %v3833
        %v3839 = vlaneseq
        %v3840 = vshrl.u32 %v3839, 7
        %v3841 = vsub.s32 %v3515, %v3840
        %v3842 = vrot.slane %v3278, %v3841
        %v3843 = vsel %vm3520, %v3842, %v3838
        %v3844 = vlaneseq
        %v3845 = vshrl.u32 %v3844, 7
        %v3846 = vsub.s32 %v3522, %v3845
        %v3847 = vrot.slane %v3281, %v3846
        %v3848 = vsel %vm3527, %v3847, %v3843
        %v3849 = vlaneseq
        %v3850 = vshrl.u32 %v3849, 7
        %v3851 = vsub.s32 %v3529, %v3850
        %v3852 = vrot.slane %v3284, %v3851
        %v3853 = vsel %vm3534, %v3852, %v3848
        %v3854 = vlaneseq
        %v3855 = vshrl.u32 %v3854, 7
        %v3856 = vsub.s32 %v3536, %v3855
        %v3857 = vrot.slane %v3287, %v3856
        %v3858 = vsel %vm3541, %v3857, %v3853
        %v3859 = vlaneseq
        %v3860 = vshrl.u32 %v3859, 7
        %v3861 = vsub.s32 %v3433, %v3860
        %v3862 = vrot.slane %v3290, %v3861
        %v3863 = vlaneseq
        %v3864 = vshrl.u32 %v3863, 7
        %v3865 = vsub.s32 %v3438, %v3864
        %v3866 = vrot.slane %v3293, %v3865
        %v3867 = vsel %vm3443, %v3866, %v3862
        %v3868 = vlaneseq
        %v3869 = vshrl.u32 %v3868, 7
        %v3870 = vsub.s32 %v3445, %v3869
        %v3871 = vrot.slane %v3296, %v3870
        %v3872 = vsel %vm3450, %v3871, %v3867
        %v3873 = vlaneseq
        %v3874 = vshrl.u32 %v3873, 7
        %v3875 = vsub.s32 %v3452, %v3874
        %v3876 = vrot.slane %v3299, %v3875
        %v3877 = vsel %vm3457, %v3876, %v3872
        %v3878 = vlaneseq
        %v3879 = vshrl.u32 %v3878, 7
        %v3880 = vsub.s32 %v3459, %v3879
        %v3881 = vrot.slane %v3302, %v3880
        %v3882 = vsel %vm3464, %v3881, %v3877
        %v3883 = vlaneseq
        %v3884 = vshrl.u32 %v3883, 7
        %v3885 = vsub.s32 %v3466, %v3884
        %v3886 = vrot.slane %v3305, %v3885
        %v3887 = vsel %vm3471, %v3886, %v3882
        %v3888 = vlaneseq
        %v3889 = vshrl.u32 %v3888, 7
        %v3890 = vsub.s32 %v3473, %v3889
        %v3891 = vrot.slane %v3308, %v3890
        %v3892 = vsel %vm3478, %v3891, %v3887
        %v3893 = vlaneseq
        %v3894 = vshrl.u32 %v3893, 7
        %v3895 = vsub.s32 %v3480, %v3894
        %v3896 = vrot.slane %v3311, %v3895
        %v3897 = vsel %vm3485, %v3896, %v3892
        %v3898 = vlaneseq
        %v3899 = vshrl.u32 %v3898, 7
        %v3900 = vsub.s32 %v3487, %v3899
        %v3901 = vrot.slane %v3314, %v3900
        %v3902 = vsel %vm3492, %v3901, %v3897
        %v3903 = vlaneseq
        %v3904 = vshrl.u32 %v3903, 7
        %v3905 = vsub.s32 %v3494, %v3904
        %v3906 = vrot.slane %v3317, %v3905
        %v3907 = vsel %vm3499, %v3906, %v3902
        %v3908 = vlaneseq
        %v3909 = vshrl.u32 %v3908, 7
        %v3910 = vsub.s32 %v3501, %v3909
        %v3911 = vrot.slane %v3320, %v3910
        %v3912 = vsel %vm3506, %v3911, %v3907
        %v3913 = vlaneseq
        %v3914 = vshrl.u32 %v3913, 7
        %v3915 = vsub.s32 %v3508, %v3914
        %v3916 = vrot.slane %v3323, %v3915
        %v3917 = vsel %vm3513, %v3916, %v3912
        %v3918 = vlaneseq
        %v3919 = vshrl.u32 %v3918, 7
        %v3920 = vsub.s32 %v3515, %v3919
        %v3921 = vrot.slane %v3326, %v3920
        %v3922 = vsel %vm3520, %v3921, %v3917
        %v3923 = vlaneseq
        %v3924 = vshrl.u32 %v3923, 7
        %v3925 = vsub.s32 %v3522, %v3924
        %v3926 = vrot.slane %v3329, %v3925
        %v3927 = vsel %vm3527, %v3926, %v3922
        %v3928 = vlaneseq
        %v3929 = vshrl.u32 %v3928, 7
        %v3930 = vsub.s32 %v3529, %v3929
        %v3931 = vrot.slane %v3332, %v3930
        %v3932 = vsel %vm3534, %v3931, %v3927
        %v3933 = vlaneseq
        %v3934 = vshrl.u32 %v3933, 7
        %v3935 = vsub.s32 %v3536, %v3934
        %v3936 = vrot.slane %v3335, %v3935
        %v3937 = vsel %vm3541, %v3936, %v3932
        %v3938 = vlaneseq
        %v3939 = vshrl.u32 %v3938, 7
        %v3940 = vsub.s32 %v3433, %v3939
        %v3941 = vrot.slane %v3338, %v3940
        %v3942 = vlaneseq
        %v3943 = vshrl.u32 %v3942, 7
        %v3944 = vsub.s32 %v3438, %v3943
        %v3945 = vrot.slane %v3341, %v3944
        %v3946 = vsel %vm3443, %v3945, %v3941
        %v3947 = vlaneseq
        %v3948 = vshrl.u32 %v3947, 7
        %v3949 = vsub.s32 %v3445, %v3948
        %v3950 = vrot.slane %v3344, %v3949
        %v3951 = vsel %vm3450, %v3950, %v3946
        %v3952 = vlaneseq
        %v3953 = vshrl.u32 %v3952, 7
        %v3954 = vsub.s32 %v3452, %v3953
        %v3955 = vrot.slane %v3347, %v3954
        %v3956 = vsel %vm3457, %v3955, %v3951
        %v3957 = vlaneseq
        %v3958 = vshrl.u32 %v3957, 7
        %v3959 = vsub.s32 %v3459, %v3958
        %v3960 = vrot.slane %v3350, %v3959
        %v3961 = vsel %vm3464, %v3960, %v3956
        %v3962 = vlaneseq
        %v3963 = vshrl.u32 %v3962, 7
        %v3964 = vsub.s32 %v3466, %v3963
        %v3965 = vrot.slane %v3353, %v3964
        %v3966 = vsel %vm3471, %v3965, %v3961
        %v3967 = vlaneseq
        %v3968 = vshrl.u32 %v3967, 7
        %v3969 = vsub.s32 %v3473, %v3968
        %v3970 = vrot.slane %v3356, %v3969
        %v3971 = vsel %vm3478, %v3970, %v3966
        %v3972 = vlaneseq
        %v3973 = vshrl.u32 %v3972, 7
        %v3974 = vsub.s32 %v3480, %v3973
        %v3975 = vrot.slane %v3359, %v3974
        %v3976 = vsel %vm3485, %v3975, %v3971
        %v3977 = vlaneseq
        %v3978 = vshrl.u32 %v3977, 7
        %v3979 = vsub.s32 %v3487, %v3978
        %v3980 = vrot.slane %v3362, %v3979
        %v3981 = vsel %vm3492, %v3980, %v3976
        %v3982 = vlaneseq
        %v3983 = vshrl.u32 %v3982, 7
        %v3984 = vsub.s32 %v3494, %v3983
        %v3985 = vrot.slane %v3365, %v3984
        %v3986 = vsel %vm3499, %v3985, %v3981
        %v3987 = vlaneseq
        %v3988 = vshrl.u32 %v3987, 7
        %v3989 = vsub.s32 %v3501, %v3988
        %v3990 = vrot.slane %v3368, %v3989
        %v3991 = vsel %vm3506, %v3990, %v3986
        %v3992 = vlaneseq
        %v3993 = vshrl.u32 %v3992, 7
        %v3994 = vsub.s32 %v3508, %v3993
        %v3995 = vrot.slane %v3371, %v3994
        %v3996 = vsel %vm3513, %v3995, %v3991
        %v3997 = vlaneseq
        %v3998 = vshrl.u32 %v3997, 7
        %v3999 = vsub.s32 %v3515, %v3998
        %v4000 = vrot.slane %v3374, %v3999
        %v4001 = vsel %vm3520, %v4000, %v3996
        %v4002 = vlaneseq
        %v4003 = vshrl.u32 %v4002, 7
        %v4004 = vsub.s32 %v3522, %v4003
        %v4005 = vrot.slane %v3377, %v4004
        %v4006 = vsel %vm3527, %v4005, %v4001
        %v4007 = vlaneseq
        %v4008 = vshrl.u32 %v4007, 7
        %v4009 = vsub.s32 %v3529, %v4008
        %v4010 = vrot.slane %v3380, %v4009
        %v4011 = vsel %vm3534, %v4010, %v4006
        %v4012 = vlaneseq
        %v4013 = vshrl.u32 %v4012, 7
        %v4014 = vsub.s32 %v3536, %v4013
        %v4015 = vrot.slane %v3383, %v4014
        %v4016 = vsel %vm3541, %v4015, %v4011
        %v4017 = vlaneseq
        %v4018 = vshrl.u32 %v4017, 7
        %v4019 = vsub.s32 %v3433, %v4018
        %v4020 = vrot.slane %v3386, %v4019
        %v4021 = vlaneseq
        %v4022 = vshrl.u32 %v4021, 7
        %v4023 = vsub.s32 %v3438, %v4022
        %v4024 = vrot.slane %v3389, %v4023
        %v4025 = vsel %vm3443, %v4024, %v4020
        %v4026 = vlaneseq
        %v4027 = vshrl.u32 %v4026, 7
        %v4028 = vsub.s32 %v3445, %v4027
        %v4029 = vrot.slane %v3392, %v4028
        %v4030 = vsel %vm3450, %v4029, %v4025
        %v4031 = vlaneseq
        %v4032 = vshrl.u32 %v4031, 7
        %v4033 = vsub.s32 %v3452, %v4032
        %v4034 = vrot.slane %v3395, %v4033
        %v4035 = vsel %vm3457, %v4034, %v4030
        %v4036 = vlaneseq
        %v4037 = vshrl.u32 %v4036, 7
        %v4038 = vsub.s32 %v3459, %v4037
        %v4039 = vrot.slane %v3398, %v4038
        %v4040 = vsel %vm3464, %v4039, %v4035
        %v4041 = vlaneseq
        %v4042 = vshrl.u32 %v4041, 7
        %v4043 = vsub.s32 %v3466, %v4042
        %v4044 = vrot.slane %v3401, %v4043
        %v4045 = vsel %vm3471, %v4044, %v4040
        %v4046 = vlaneseq
        %v4047 = vshrl.u32 %v4046, 7
        %v4048 = vsub.s32 %v3473, %v4047
        %v4049 = vrot.slane %v3404, %v4048
        %v4050 = vsel %vm3478, %v4049, %v4045
        %v4051 = vlaneseq
        %v4052 = vshrl.u32 %v4051, 7
        %v4053 = vsub.s32 %v3480, %v4052
        %v4054 = vrot.slane %v3407, %v4053
        %v4055 = vsel %vm3485, %v4054, %v4050
        %v4056 = vlaneseq
        %v4057 = vshrl.u32 %v4056, 7
        %v4058 = vsub.s32 %v3487, %v4057
        %v4059 = vrot.slane %v3410, %v4058
        %v4060 = vsel %vm3492, %v4059, %v4055
        %v4061 = vlaneseq
        %v4062 = vshrl.u32 %v4061, 7
        %v4063 = vsub.s32 %v3494, %v4062
        %v4064 = vrot.slane %v3413, %v4063
        %v4065 = vsel %vm3499, %v4064, %v4060
        %v4066 = vlaneseq
        %v4067 = vshrl.u32 %v4066, 7
        %v4068 = vsub.s32 %v3501, %v4067
        %v4069 = vrot.slane %v3416, %v4068
        %v4070 = vsel %vm3506, %v4069, %v4065
        %v4071 = vlaneseq
        %v4072 = vshrl.u32 %v4071, 7
        %v4073 = vsub.s32 %v3508, %v4072
        %v4074 = vrot.slane %v3419, %v4073
        %v4075 = vsel %vm3513, %v4074, %v4070
        %v4076 = vlaneseq
        %v4077 = vshrl.u32 %v4076, 7
        %v4078 = vsub.s32 %v3515, %v4077
        %v4079 = vrot.slane %v3422, %v4078
        %v4080 = vsel %vm3520, %v4079, %v4075
        %v4081 = vlaneseq
        %v4082 = vshrl.u32 %v4081, 7
        %v4083 = vsub.s32 %v3522, %v4082
        %v4084 = vrot.slane %v3425, %v4083
        %v4085 = vsel %vm3527, %v4084, %v4080
        %v4086 = vlaneseq
        %v4087 = vshrl.u32 %v4086, 7
        %v4088 = vsub.s32 %v3529, %v4087
        %v4089 = vrot.slane %v3428, %v4088
        %v4090 = vsel %vm3534, %v4089, %v4085
        %v4091 = vlaneseq
        %v4092 = vshrl.u32 %v4091, 7
        %v4093 = vsub.s32 %v3536, %v4092
        %v4094 = vrot.slane %v3431, %v4093
        %v4095 = vsel %vm3541, %v4094, %v4090
        %vm4096 = vcmask 1041409
        %v4097 = vsel %vm4096, %v3621, %v3542
        %vm4098 = vcmask 1042434
        %v4099 = vsel %vm4098, %v3700, %v4097
        %vm4100 = vcmask 1043459
        %v4101 = vsel %vm4100, %v3779, %v4099
        %vm4102 = vcmask 1044484
        %v4103 = vsel %vm4102, %v3858, %v4101
        %vm4104 = vcmask 1045509
        %v4105 = vsel %vm4104, %v3937, %v4103
        %vm4106 = vcmask 1046534
        %v4107 = vsel %vm4106, %v4016, %v4105
        %vm4108 = vcmask 1047559
        %v4109 = vsel %vm4108, %v4095, %v4107
        %4111 = vmax.xlane.f32.xlu0 %v4109
        %v4112 = vpop.xlane.xlu0 %4111
        %v4114 = vlaneseq
        %v4115 = vshrl.u32 %v4114, 7
        %v4116 = vsub.s32 0, %v4115
        %v4117 = vrot.slane %v4112, %v4116
        %v4118 = vlaneseq
        %v4119 = vshrl.u32 %v4118, 7
        %v4120 = vsub.s32 1, %v4119
        %v4121 = vrot.slane %v4112, %v4120
        %v4122 = vlaneseq
        %v4123 = vshrl.u32 %v4122, 7
        %v4124 = vsub.s32 2, %v4123
        %v4125 = vrot.slane %v4112, %v4124
        %v4126 = vlaneseq
        %v4127 = vshrl.u32 %v4126, 7
        %v4128 = vsub.s32 3, %v4127
        %v4129 = vrot.slane %v4112, %v4128
        %v4130 = vlaneseq
        %v4131 = vshrl.u32 %v4130, 7
        %v4132 = vsub.s32 4, %v4131
        %v4133 = vrot.slane %v4112, %v4132
        %v4134 = vlaneseq
        %v4135 = vshrl.u32 %v4134, 7
        %v4136 = vsub.s32 5, %v4135
        %v4137 = vrot.slane %v4112, %v4136
        %v4138 = vlaneseq
        %v4139 = vshrl.u32 %v4138, 7
        %v4140 = vsub.s32 6, %v4139
        %v4141 = vrot.slane %v4112, %v4140
        %v4142 = vlaneseq
        %v4143 = vshrl.u32 %v4142, 7
        %v4144 = vsub.s32 7, %v4143
        %v4145 = vrot.slane %v4112, %v4144
        %v4154 = vsub.f32 %v2792, %v4117
        %v4155 = vsub.f32 %v2793, %v4117
        %v4156 = vsub.f32 %v2794, %v4117
        %v4157 = vsub.f32 %v2795, %v4117
        %v4158 = vsub.f32 %v2796, %v4117
        %v4159 = vsub.f32 %v2797, %v4117
        %v4160 = vsub.f32 %v2798, %v4117
        %v4161 = vsub.f32 %v2799, %v4117
        %v4162 = vsub.f32 %v2800, %v4117
        %v4163 = vsub.f32 %v2801, %v4117
        %v4164 = vsub.f32 %v2802, %v4117
        %v4165 = vsub.f32 %v2803, %v4117
        %v4166 = vsub.f32 %v2804, %v4117
        %v4167 = vsub.f32 %v2805, %v4117
        %v4168 = vsub.f32 %v2806, %v4117
        %v4169 = vsub.f32 %v2807, %v4117
        %v4170 = vsub.f32 %v2808, %v4121
        %v4171 = vsub.f32 %v2809, %v4121
        %v4172 = vsub.f32 %v2810, %v4121
        %v4173 = vsub.f32 %v2811, %v4121
        %v4174 = vsub.f32 %v2812, %v4121
        %v4175 = vsub.f32 %v2813, %v4121
        %v4176 = vsub.f32 %v2814, %v4121
        %v4177 = vsub.f32 %v2815, %v4121
        %v4178 = vsub.f32 %v2816, %v4121
        %v4179 = vsub.f32 %v2817, %v4121
        %v4180 = vsub.f32 %v2818, %v4121
        %v4181 = vsub.f32 %v2819, %v4121
        %v4182 = vsub.f32 %v2820, %v4121
        %v4183 = vsub.f32 %v2821, %v4121
        %v4184 = vsub.f32 %v2822, %v4121
        %v4185 = vsub.f32 %v2823, %v4121
        %v4186 = vsub.f32 %v2824, %v4125
        %v4187 = vsub.f32 %v2825, %v4125
        %v4188 = vsub.f32 %v2826, %v4125
        %v4189 = vsub.f32 %v2827, %v4125
        %v4190 = vsub.f32 %v2828, %v4125
        %v4191 = vsub.f32 %v2829, %v4125
        %v4192 = vsub.f32 %v2830, %v4125
        %v4193 = vsub.f32 %v2831, %v4125
        %v4194 = vsub.f32 %v2832, %v4125
        %v4195 = vsub.f32 %v2833, %v4125
        %v4196 = vsub.f32 %v2834, %v4125
        %v4197 = vsub.f32 %v2835, %v4125
        %v4198 = vsub.f32 %v2836, %v4125
        %v4199 = vsub.f32 %v2837, %v4125
        %v4200 = vsub.f32 %v2838, %v4125
        %v4201 = vsub.f32 %v2839, %v4125
        %v4202 = vsub.f32 %v2840, %v4129
        %v4203 = vsub.f32 %v2841, %v4129
        %v4204 = vsub.f32 %v2842, %v4129
        %v4205 = vsub.f32 %v2843, %v4129
        %v4206 = vsub.f32 %v2844, %v4129
        %v4207 = vsub.f32 %v2845, %v4129
        %v4208 = vsub.f32 %v2846, %v4129
        %v4209 = vsub.f32 %v2847, %v4129
        %v4210 = vsub.f32 %v2848, %v4129
        %v4211 = vsub.f32 %v2849, %v4129
        %v4212 = vsub.f32 %v2850, %v4129
        %v4213 = vsub.f32 %v2851, %v4129
        %v4214 = vsub.f32 %v2852, %v4129
        %v4215 = vsub.f32 %v2853, %v4129
        %v4216 = vsub.f32 %v2854, %v4129
        %v4217 = vsub.f32 %v2855, %v4129
        %v4218 = vsub.f32 %v2856, %v4133
        %v4219 = vsub.f32 %v2857, %v4133
        %v4220 = vsub.f32 %v2858, %v4133
        %v4221 = vsub.f32 %v2859, %v4133
        %v4222 = vsub.f32 %v2860, %v4133
        %v4223 = vsub.f32 %v2861, %v4133
        %v4224 = vsub.f32 %v2862, %v4133
        %v4225 = vsub.f32 %v2863, %v4133
        %v4226 = vsub.f32 %v2864, %v4133
        %v4227 = vsub.f32 %v2865, %v4133
        %v4228 = vsub.f32 %v2866, %v4133
        %v4229 = vsub.f32 %v2867, %v4133
        %v4230 = vsub.f32 %v2868, %v4133
        %v4231 = vsub.f32 %v2869, %v4133
        %v4232 = vsub.f32 %v2870, %v4133
        %v4233 = vsub.f32 %v2871, %v4133
        %v4234 = vsub.f32 %v2872, %v4137
        %v4235 = vsub.f32 %v2873, %v4137
        %v4236 = vsub.f32 %v2874, %v4137
        %v4237 = vsub.f32 %v2875, %v4137
        %v4238 = vsub.f32 %v2876, %v4137
        %v4239 = vsub.f32 %v2877, %v4137
        %v4240 = vsub.f32 %v2878, %v4137
        %v4241 = vsub.f32 %v2879, %v4137
        %v4242 = vsub.f32 %v2880, %v4137
        %v4243 = vsub.f32 %v2881, %v4137
        %v4244 = vsub.f32 %v2882, %v4137
        %v4245 = vsub.f32 %v2883, %v4137
        %v4246 = vsub.f32 %v2884, %v4137
        %v4247 = vsub.f32 %v2885, %v4137
        %v4248 = vsub.f32 %v2886, %v4137
        %v4249 = vsub.f32 %v2887, %v4137
        %v4250 = vsub.f32 %v2888, %v4141
        %v4251 = vsub.f32 %v2889, %v4141
        %v4252 = vsub.f32 %v2890, %v4141
        %v4253 = vsub.f32 %v2891, %v4141
        %v4254 = vsub.f32 %v2892, %v4141
        %v4255 = vsub.f32 %v2893, %v4141
        %v4256 = vsub.f32 %v2894, %v4141
        %v4257 = vsub.f32 %v2895, %v4141
        %v4258 = vsub.f32 %v2896, %v4141
        %v4259 = vsub.f32 %v2897, %v4141
        %v4260 = vsub.f32 %v2898, %v4141
        %v4261 = vsub.f32 %v2899, %v4141
        %v4262 = vsub.f32 %v2900, %v4141
        %v4263 = vsub.f32 %v2901, %v4141
        %v4264 = vsub.f32 %v2902, %v4141
        %v4265 = vsub.f32 %v2903, %v4141
        %v4266 = vsub.f32 %v2904, %v4145
        %v4267 = vsub.f32 %v2905, %v4145
        %v4268 = vsub.f32 %v2906, %v4145
        %v4269 = vsub.f32 %v2907, %v4145
        %v4270 = vsub.f32 %v2908, %v4145
        %v4271 = vsub.f32 %v2909, %v4145
        %v4272 = vsub.f32 %v2910, %v4145
        %v4273 = vsub.f32 %v2911, %v4145
        %v4274 = vsub.f32 %v2912, %v4145
        %v4275 = vsub.f32 %v2913, %v4145
        %v4276 = vsub.f32 %v2914, %v4145
        %v4277 = vsub.f32 %v2915, %v4145
        %v4278 = vsub.f32 %v2916, %v4145
        %v4279 = vsub.f32 %v2917, %v4145
        %v4280 = vsub.f32 %v2918, %v4145
        %v4281 = vsub.f32 %v2919, %v4145
        %v4282 = vmul.f32 %v4154, 1.442695
        %v4283 = vpow.pop %v4282
        %v4284 = vmul.f32 %v4155, 1.442695
        %v4285 = vpow.pop %v4284
        %v4286 = vmul.f32 %v4156, 1.442695
        %v4287 = vpow.pop %v4286
        %v4288 = vmul.f32 %v4157, 1.442695
        %v4289 = vpow.pop %v4288
        %v4290 = vmul.f32 %v4158, 1.442695
        %v4291 = vpow.pop %v4290
        %v4292 = vmul.f32 %v4159, 1.442695
        %v4293 = vpow.pop %v4292
        %v4294 = vmul.f32 %v4160, 1.442695
        %v4295 = vpow.pop %v4294
        %v4296 = vmul.f32 %v4161, 1.442695
        %v4297 = vpow.pop %v4296
        %v4298 = vmul.f32 %v4162, 1.442695
        %v4299 = vpow.pop %v4298
        %v4300 = vmul.f32 %v4163, 1.442695
        %v4301 = vpow.pop %v4300
        %v4302 = vmul.f32 %v4164, 1.442695
        %v4303 = vpow.pop %v4302
        %v4304 = vmul.f32 %v4165, 1.442695
        %v4305 = vpow.pop %v4304
        %v4306 = vmul.f32 %v4166, 1.442695
        %v4307 = vpow.pop %v4306
        %v4308 = vmul.f32 %v4167, 1.442695
        %v4309 = vpow.pop %v4308
        %v4310 = vmul.f32 %v4168, 1.442695
        %v4311 = vpow.pop %v4310
        %v4312 = vmul.f32 %v4169, 1.442695
        %v4313 = vpow.pop %v4312
        %v4314 = vmul.f32 %v4170, 1.442695
        %v4315 = vpow.pop %v4314
        %v4316 = vmul.f32 %v4171, 1.442695
        %v4317 = vpow.pop %v4316
        %v4318 = vmul.f32 %v4172, 1.442695
        %v4319 = vpow.pop %v4318
        %v4320 = vmul.f32 %v4173, 1.442695
        %v4321 = vpow.pop %v4320
        %v4322 = vmul.f32 %v4174, 1.442695
        %v4323 = vpow.pop %v4322
        %v4324 = vmul.f32 %v4175, 1.442695
        %v4325 = vpow.pop %v4324
        %v4326 = vmul.f32 %v4176, 1.442695
        %v4327 = vpow.pop %v4326
        %v4328 = vmul.f32 %v4177, 1.442695
        %v4329 = vpow.pop %v4328
        %v4330 = vmul.f32 %v4178, 1.442695
        %v4331 = vpow.pop %v4330
        %v4332 = vmul.f32 %v4179, 1.442695
        %v4333 = vpow.pop %v4332
        %v4334 = vmul.f32 %v4180, 1.442695
        %v4335 = vpow.pop %v4334
        %v4336 = vmul.f32 %v4181, 1.442695
        %v4337 = vpow.pop %v4336
        %v4338 = vmul.f32 %v4182, 1.442695
        %v4339 = vpow.pop %v4338
        %v4340 = vmul.f32 %v4183, 1.442695
        %v4341 = vpow.pop %v4340
        %v4342 = vmul.f32 %v4184, 1.442695
        %v4343 = vpow.pop %v4342
        %v4344 = vmul.f32 %v4185, 1.442695
        %v4345 = vpow.pop %v4344
        %v4346 = vmul.f32 %v4186, 1.442695
        %v4347 = vpow.pop %v4346
        %v4348 = vmul.f32 %v4187, 1.442695
        %v4349 = vpow.pop %v4348
        %v4350 = vmul.f32 %v4188, 1.442695
        %v4351 = vpow.pop %v4350
        %v4352 = vmul.f32 %v4189, 1.442695
        %v4353 = vpow.pop %v4352
        %v4354 = vmul.f32 %v4190, 1.442695
        %v4355 = vpow.pop %v4354
        %v4356 = vmul.f32 %v4191, 1.442695
        %v4357 = vpow.pop %v4356
        %v4358 = vmul.f32 %v4192, 1.442695
        %v4359 = vpow.pop %v4358
        %v4360 = vmul.f32 %v4193, 1.442695
        %v4361 = vpow.pop %v4360
        %v4362 = vmul.f32 %v4194, 1.442695
        %v4363 = vpow.pop %v4362
        %v4364 = vmul.f32 %v4195, 1.442695
        %v4365 = vpow.pop %v4364
        %v4366 = vmul.f32 %v4196, 1.442695
        %v4367 = vpow.pop %v4366
        %v4368 = vmul.f32 %v4197, 1.442695
        %v4369 = vpow.pop %v4368
        %v4370 = vmul.f32 %v4198, 1.442695
        %v4371 = vpow.pop %v4370
        %v4372 = vmul.f32 %v4199, 1.442695
        %v4373 = vpow.pop %v4372
        %v4374 = vmul.f32 %v4200, 1.442695
        %v4375 = vpow.pop %v4374
        %v4376 = vmul.f32 %v4201, 1.442695
        %v4377 = vpow.pop %v4376
        %v4378 = vmul.f32 %v4202, 1.442695
        %v4379 = vpow.pop %v4378
        %v4380 = vmul.f32 %v4203, 1.442695
        %v4381 = vpow.pop %v4380
        %v4382 = vmul.f32 %v4204, 1.442695
        %v4383 = vpow.pop %v4382
        %v4384 = vmul.f32 %v4205, 1.442695
        %v4385 = vpow.pop %v4384
        %v4386 = vmul.f32 %v4206, 1.442695
        %v4387 = vpow.pop %v4386
        %v4388 = vmul.f32 %v4207, 1.442695
        %v4389 = vpow.pop %v4388
        %v4390 = vmul.f32 %v4208, 1.442695
        %v4391 = vpow.pop %v4390
        %v4392 = vmul.f32 %v4209, 1.442695
        %v4393 = vpow.pop %v4392
        %v4394 = vmul.f32 %v4210, 1.442695
        %v4395 = vpow.pop %v4394
        %v4396 = vmul.f32 %v4211, 1.442695
        %v4397 = vpow.pop %v4396
        %v4398 = vmul.f32 %v4212, 1.442695
        %v4399 = vpow.pop %v4398
        %v4400 = vmul.f32 %v4213, 1.442695
        %v4401 = vpow.pop %v4400
        %v4402 = vmul.f32 %v4214, 1.442695
        %v4403 = vpow.pop %v4402
        %v4404 = vmul.f32 %v4215, 1.442695
        %v4405 = vpow.pop %v4404
        %v4406 = vmul.f32 %v4216, 1.442695
        %v4407 = vpow.pop %v4406
        %v4408 = vmul.f32 %v4217, 1.442695
        %v4409 = vpow.pop %v4408
        %v4410 = vmul.f32 %v4218, 1.442695
        %v4411 = vpow.pop %v4410
        %v4412 = vmul.f32 %v4219, 1.442695
        %v4413 = vpow.pop %v4412
        %v4414 = vmul.f32 %v4220, 1.442695
        %v4415 = vpow.pop %v4414
        %v4416 = vmul.f32 %v4221, 1.442695
        %v4417 = vpow.pop %v4416
        %v4418 = vmul.f32 %v4222, 1.442695
        %v4419 = vpow.pop %v4418
        %v4420 = vmul.f32 %v4223, 1.442695
        %v4421 = vpow.pop %v4420
        %v4422 = vmul.f32 %v4224, 1.442695
        %v4423 = vpow.pop %v4422
        %v4424 = vmul.f32 %v4225, 1.442695
        %v4425 = vpow.pop %v4424
        %v4426 = vmul.f32 %v4226, 1.442695
        %v4427 = vpow.pop %v4426
        %v4428 = vmul.f32 %v4227, 1.442695
        %v4429 = vpow.pop %v4428
        %v4430 = vmul.f32 %v4228, 1.442695
        %v4431 = vpow.pop %v4430
        %v4432 = vmul.f32 %v4229, 1.442695
        %v4433 = vpow.pop %v4432
        %v4434 = vmul.f32 %v4230, 1.442695
        %v4435 = vpow.pop %v4434
        %v4436 = vmul.f32 %v4231, 1.442695
        %v4437 = vpow.pop %v4436
        %v4438 = vmul.f32 %v4232, 1.442695
        %v4439 = vpow.pop %v4438
        %v4440 = vmul.f32 %v4233, 1.442695
        %v4441 = vpow.pop %v4440
        %v4442 = vmul.f32 %v4234, 1.442695
        %v4443 = vpow.pop %v4442
        %v4444 = vmul.f32 %v4235, 1.442695
        %v4445 = vpow.pop %v4444
        %v4446 = vmul.f32 %v4236, 1.442695
        %v4447 = vpow.pop %v4446
        %v4448 = vmul.f32 %v4237, 1.442695
        %v4449 = vpow.pop %v4448
        %v4450 = vmul.f32 %v4238, 1.442695
        %v4451 = vpow.pop %v4450
        %v4452 = vmul.f32 %v4239, 1.442695
        %v4453 = vpow.pop %v4452
        %v4454 = vmul.f32 %v4240, 1.442695
        %v4455 = vpow.pop %v4454
        %v4456 = vmul.f32 %v4241, 1.442695
        %v4457 = vpow.pop %v4456
        %v4458 = vmul.f32 %v4242, 1.442695
        %v4459 = vpow.pop %v4458
        %v4460 = vmul.f32 %v4243, 1.442695
        %v4461 = vpow.pop %v4460
        %v4462 = vmul.f32 %v4244, 1.442695
        %v4463 = vpow.pop %v4462
        %v4464 = vmul.f32 %v4245, 1.442695
        %v4465 = vpow.pop %v4464
        %v4466 = vmul.f32 %v4246, 1.442695
        %v4467 = vpow.pop %v4466
        %v4468 = vmul.f32 %v4247, 1.442695
        %v4469 = vpow.pop %v4468
        %v4470 = vmul.f32 %v4248, 1.442695
        %v4471 = vpow.pop %v4470
        %v4472 = vmul.f32 %v4249, 1.442695
        %v4473 = vpow.pop %v4472
        %v4474 = vmul.f32 %v4250, 1.442695
        %v4475 = vpow.pop %v4474
        %v4476 = vmul.f32 %v4251, 1.442695
        %v4477 = vpow.pop %v4476
        %v4478 = vmul.f32 %v4252, 1.442695
        %v4479 = vpow.pop %v4478
        %v4480 = vmul.f32 %v4253, 1.442695
        %v4481 = vpow.pop %v4480
        %v4482 = vmul.f32 %v4254, 1.442695
        %v4483 = vpow.pop %v4482
        %v4484 = vmul.f32 %v4255, 1.442695
        %v4485 = vpow.pop %v4484
        %v4486 = vmul.f32 %v4256, 1.442695
        %v4487 = vpow.pop %v4486
        %v4488 = vmul.f32 %v4257, 1.442695
        %v4489 = vpow.pop %v4488
        %v4490 = vmul.f32 %v4258, 1.442695
        %v4491 = vpow.pop %v4490
        %v4492 = vmul.f32 %v4259, 1.442695
        %v4493 = vpow.pop %v4492
        %v4494 = vmul.f32 %v4260, 1.442695
        %v4495 = vpow.pop %v4494
        %v4496 = vmul.f32 %v4261, 1.442695
        %v4497 = vpow.pop %v4496
        %v4498 = vmul.f32 %v4262, 1.442695
        %v4499 = vpow.pop %v4498
        %v4500 = vmul.f32 %v4263, 1.442695
        %v4501 = vpow.pop %v4500
        %v4502 = vmul.f32 %v4264, 1.442695
        %v4503 = vpow.pop %v4502
        %v4504 = vmul.f32 %v4265, 1.442695
        %v4505 = vpow.pop %v4504
        %v4506 = vmul.f32 %v4266, 1.442695
        %v4507 = vpow.pop %v4506
        %v4508 = vmul.f32 %v4267, 1.442695
        %v4509 = vpow.pop %v4508
        %v4510 = vmul.f32 %v4268, 1.442695
        %v4511 = vpow.pop %v4510
        %v4512 = vmul.f32 %v4269, 1.442695
        %v4513 = vpow.pop %v4512
        %v4514 = vmul.f32 %v4270, 1.442695
        %v4515 = vpow.pop %v4514
        %v4516 = vmul.f32 %v4271, 1.442695
        %v4517 = vpow.pop %v4516
        %v4518 = vmul.f32 %v4272, 1.442695
        %v4519 = vpow.pop %v4518
        %v4520 = vmul.f32 %v4273, 1.442695
        %v4521 = vpow.pop %v4520
        %v4522 = vmul.f32 %v4274, 1.442695
        %v4523 = vpow.pop %v4522
        %v4524 = vmul.f32 %v4275, 1.442695
        %v4525 = vpow.pop %v4524
        %v4526 = vmul.f32 %v4276, 1.442695
        %v4527 = vpow.pop %v4526
        %v4528 = vmul.f32 %v4277, 1.442695
        %v4529 = vpow.pop %v4528
        %v4530 = vmul.f32 %v4278, 1.442695
        %v4531 = vpow.pop %v4530
        %v4532 = vmul.f32 %v4279, 1.442695
        %v4533 = vpow.pop %v4532
        %v4534 = vmul.f32 %v4280, 1.442695
        %v4535 = vpow.pop %v4534
        %v4536 = vmul.f32 %v4281, 1.442695
        %v4537 = vpow.pop %v4536
        %4666 = vset.pattern.permute.xlu0 0
        %4667 = vperm.xlu0 %4666, %v4283
        %v4668 = vpop.permute.xlu0 %4667
        %4669 = vset.pattern.permute.xlu0 0
        %4670 = vperm.xlu0 %4669, %v4285
        %v4671 = vpop.permute.xlu0 %4670
        %4672 = vset.pattern.permute.xlu0 0
        %4673 = vperm.xlu0 %4672, %v4287
        %v4674 = vpop.permute.xlu0 %4673
        %4675 = vset.pattern.permute.xlu0 0
        %4676 = vperm.xlu0 %4675, %v4289
        %v4677 = vpop.permute.xlu0 %4676
        %4678 = vset.pattern.permute.xlu0 0
        %4679 = vperm.xlu0 %4678, %v4291
        %v4680 = vpop.permute.xlu0 %4679
        %4681 = vset.pattern.permute.xlu0 0
        %4682 = vperm.xlu0 %4681, %v4293
        %v4683 = vpop.permute.xlu0 %4682
        %4684 = vset.pattern.permute.xlu0 0
        %4685 = vperm.xlu0 %4684, %v4295
        %v4686 = vpop.permute.xlu0 %4685
        %4687 = vset.pattern.permute.xlu0 0
        %4688 = vperm.xlu0 %4687, %v4297
        %v4689 = vpop.permute.xlu0 %4688
        %4690 = vset.pattern.permute.xlu0 0
        %4691 = vperm.xlu0 %4690, %v4299
        %v4692 = vpop.permute.xlu0 %4691
        %4693 = vset.pattern.permute.xlu0 0
        %4694 = vperm.xlu0 %4693, %v4301
        %v4695 = vpop.permute.xlu0 %4694
        %4696 = vset.pattern.permute.xlu0 0
        %4697 = vperm.xlu0 %4696, %v4303
        %v4698 = vpop.permute.xlu0 %4697
        %4699 = vset.pattern.permute.xlu0 0
        %4700 = vperm.xlu0 %4699, %v4305
        %v4701 = vpop.permute.xlu0 %4700
        %4702 = vset.pattern.permute.xlu0 0
        %4703 = vperm.xlu0 %4702, %v4307
        %v4704 = vpop.permute.xlu0 %4703
        %4705 = vset.pattern.permute.xlu0 0
        %4706 = vperm.xlu0 %4705, %v4309
        %v4707 = vpop.permute.xlu0 %4706
        %4708 = vset.pattern.permute.xlu0 0
        %4709 = vperm.xlu0 %4708, %v4311
        %v4710 = vpop.permute.xlu0 %4709
        %4711 = vset.pattern.permute.xlu0 0
        %4712 = vperm.xlu0 %4711, %v4313
        %v4713 = vpop.permute.xlu0 %4712
        %4714 = vset.pattern.permute.xlu0 0
        %4715 = vperm.xlu0 %4714, %v4315
        %v4716 = vpop.permute.xlu0 %4715
        %4717 = vset.pattern.permute.xlu0 0
        %4718 = vperm.xlu0 %4717, %v4317
        %v4719 = vpop.permute.xlu0 %4718
        %4720 = vset.pattern.permute.xlu0 0
        %4721 = vperm.xlu0 %4720, %v4319
        %v4722 = vpop.permute.xlu0 %4721
        %4723 = vset.pattern.permute.xlu0 0
        %4724 = vperm.xlu0 %4723, %v4321
        %v4725 = vpop.permute.xlu0 %4724
        %4726 = vset.pattern.permute.xlu0 0
        %4727 = vperm.xlu0 %4726, %v4323
        %v4728 = vpop.permute.xlu0 %4727
        %4729 = vset.pattern.permute.xlu0 0
        %4730 = vperm.xlu0 %4729, %v4325
        %v4731 = vpop.permute.xlu0 %4730
        %4732 = vset.pattern.permute.xlu0 0
        %4733 = vperm.xlu0 %4732, %v4327
        %v4734 = vpop.permute.xlu0 %4733
        %4735 = vset.pattern.permute.xlu0 0
        %4736 = vperm.xlu0 %4735, %v4329
        %v4737 = vpop.permute.xlu0 %4736
        %4738 = vset.pattern.permute.xlu0 0
        %4739 = vperm.xlu0 %4738, %v4331
        %v4740 = vpop.permute.xlu0 %4739
        %4741 = vset.pattern.permute.xlu0 0
        %4742 = vperm.xlu0 %4741, %v4333
        %v4743 = vpop.permute.xlu0 %4742
        %4744 = vset.pattern.permute.xlu0 0
        %4745 = vperm.xlu0 %4744, %v4335
        %v4746 = vpop.permute.xlu0 %4745
        %4747 = vset.pattern.permute.xlu0 0
        %4748 = vperm.xlu0 %4747, %v4337
        %v4749 = vpop.permute.xlu0 %4748
        %4750 = vset.pattern.permute.xlu0 0
        %4751 = vperm.xlu0 %4750, %v4339
        %v4752 = vpop.permute.xlu0 %4751
        %4753 = vset.pattern.permute.xlu0 0
        %4754 = vperm.xlu0 %4753, %v4341
        %v4755 = vpop.permute.xlu0 %4754
        %4756 = vset.pattern.permute.xlu0 0
        %4757 = vperm.xlu0 %4756, %v4343
        %v4758 = vpop.permute.xlu0 %4757
        %4759 = vset.pattern.permute.xlu0 0
        %4760 = vperm.xlu0 %4759, %v4345
        %v4761 = vpop.permute.xlu0 %4760
        %4762 = vset.pattern.permute.xlu0 0
        %4763 = vperm.xlu0 %4762, %v4347
        %v4764 = vpop.permute.xlu0 %4763
        %4765 = vset.pattern.permute.xlu0 0
        %4766 = vperm.xlu0 %4765, %v4349
        %v4767 = vpop.permute.xlu0 %4766
        %4768 = vset.pattern.permute.xlu0 0
        %4769 = vperm.xlu0 %4768, %v4351
        %v4770 = vpop.permute.xlu0 %4769
        %4771 = vset.pattern.permute.xlu0 0
        %4772 = vperm.xlu0 %4771, %v4353
        %v4773 = vpop.permute.xlu0 %4772
        %4774 = vset.pattern.permute.xlu0 0
        %4775 = vperm.xlu0 %4774, %v4355
        %v4776 = vpop.permute.xlu0 %4775
        %4777 = vset.pattern.permute.xlu0 0
        %4778 = vperm.xlu0 %4777, %v4357
        %v4779 = vpop.permute.xlu0 %4778
        %4780 = vset.pattern.permute.xlu0 0
        %4781 = vperm.xlu0 %4780, %v4359
        %v4782 = vpop.permute.xlu0 %4781
        %4783 = vset.pattern.permute.xlu0 0
        %4784 = vperm.xlu0 %4783, %v4361
        %v4785 = vpop.permute.xlu0 %4784
        %4786 = vset.pattern.permute.xlu0 0
        %4787 = vperm.xlu0 %4786, %v4363
        %v4788 = vpop.permute.xlu0 %4787
        %4789 = vset.pattern.permute.xlu0 0
        %4790 = vperm.xlu0 %4789, %v4365
        %v4791 = vpop.permute.xlu0 %4790
        %4792 = vset.pattern.permute.xlu0 0
        %4793 = vperm.xlu0 %4792, %v4367
        %v4794 = vpop.permute.xlu0 %4793
        %4795 = vset.pattern.permute.xlu0 0
        %4796 = vperm.xlu0 %4795, %v4369
        %v4797 = vpop.permute.xlu0 %4796
        %4798 = vset.pattern.permute.xlu0 0
        %4799 = vperm.xlu0 %4798, %v4371
        %v4800 = vpop.permute.xlu0 %4799
        %4801 = vset.pattern.permute.xlu0 0
        %4802 = vperm.xlu0 %4801, %v4373
        %v4803 = vpop.permute.xlu0 %4802
        %4804 = vset.pattern.permute.xlu0 0
        %4805 = vperm.xlu0 %4804, %v4375
        %v4806 = vpop.permute.xlu0 %4805
        %4807 = vset.pattern.permute.xlu0 0
        %4808 = vperm.xlu0 %4807, %v4377
        %v4809 = vpop.permute.xlu0 %4808
        %4810 = vset.pattern.permute.xlu0 0
        %4811 = vperm.xlu0 %4810, %v4379
        %v4812 = vpop.permute.xlu0 %4811
        %4813 = vset.pattern.permute.xlu0 0
        %4814 = vperm.xlu0 %4813, %v4381
        %v4815 = vpop.permute.xlu0 %4814
        %4816 = vset.pattern.permute.xlu0 0
        %4817 = vperm.xlu0 %4816, %v4383
        %v4818 = vpop.permute.xlu0 %4817
        %4819 = vset.pattern.permute.xlu0 0
        %4820 = vperm.xlu0 %4819, %v4385
        %v4821 = vpop.permute.xlu0 %4820
        %4822 = vset.pattern.permute.xlu0 0
        %4823 = vperm.xlu0 %4822, %v4387
        %v4824 = vpop.permute.xlu0 %4823
        %4825 = vset.pattern.permute.xlu0 0
        %4826 = vperm.xlu0 %4825, %v4389
        %v4827 = vpop.permute.xlu0 %4826
        %4828 = vset.pattern.permute.xlu0 0
        %4829 = vperm.xlu0 %4828, %v4391
        %v4830 = vpop.permute.xlu0 %4829
        %4831 = vset.pattern.permute.xlu0 0
        %4832 = vperm.xlu0 %4831, %v4393
        %v4833 = vpop.permute.xlu0 %4832
        %4834 = vset.pattern.permute.xlu0 0
        %4835 = vperm.xlu0 %4834, %v4395
        %v4836 = vpop.permute.xlu0 %4835
        %4837 = vset.pattern.permute.xlu0 0
        %4838 = vperm.xlu0 %4837, %v4397
        %v4839 = vpop.permute.xlu0 %4838
        %4840 = vset.pattern.permute.xlu0 0
        %4841 = vperm.xlu0 %4840, %v4399
        %v4842 = vpop.permute.xlu0 %4841
        %4843 = vset.pattern.permute.xlu0 0
        %4844 = vperm.xlu0 %4843, %v4401
        %v4845 = vpop.permute.xlu0 %4844
        %4846 = vset.pattern.permute.xlu0 0
        %4847 = vperm.xlu0 %4846, %v4403
        %v4848 = vpop.permute.xlu0 %4847
        %4849 = vset.pattern.permute.xlu0 0
        %4850 = vperm.xlu0 %4849, %v4405
        %v4851 = vpop.permute.xlu0 %4850
        %4852 = vset.pattern.permute.xlu0 0
        %4853 = vperm.xlu0 %4852, %v4407
        %v4854 = vpop.permute.xlu0 %4853
        %4855 = vset.pattern.permute.xlu0 0
        %4856 = vperm.xlu0 %4855, %v4409
        %v4857 = vpop.permute.xlu0 %4856
        %4858 = vset.pattern.permute.xlu0 0
        %4859 = vperm.xlu0 %4858, %v4411
        %v4860 = vpop.permute.xlu0 %4859
        %4861 = vset.pattern.permute.xlu0 0
        %4862 = vperm.xlu0 %4861, %v4413
        %v4863 = vpop.permute.xlu0 %4862
        %4864 = vset.pattern.permute.xlu0 0
        %4865 = vperm.xlu0 %4864, %v4415
        %v4866 = vpop.permute.xlu0 %4865
        %4867 = vset.pattern.permute.xlu0 0
        %4868 = vperm.xlu0 %4867, %v4417
        %v4869 = vpop.permute.xlu0 %4868
        %4870 = vset.pattern.permute.xlu0 0
        %4871 = vperm.xlu0 %4870, %v4419
        %v4872 = vpop.permute.xlu0 %4871
        %4873 = vset.pattern.permute.xlu0 0
        %4874 = vperm.xlu0 %4873, %v4421
        %v4875 = vpop.permute.xlu0 %4874
        %4876 = vset.pattern.permute.xlu0 0
        %4877 = vperm.xlu0 %4876, %v4423
        %v4878 = vpop.permute.xlu0 %4877
        %4879 = vset.pattern.permute.xlu0 0
        %4880 = vperm.xlu0 %4879, %v4425
        %v4881 = vpop.permute.xlu0 %4880
        %4882 = vset.pattern.permute.xlu0 0
        %4883 = vperm.xlu0 %4882, %v4427
        %v4884 = vpop.permute.xlu0 %4883
        %4885 = vset.pattern.permute.xlu0 0
        %4886 = vperm.xlu0 %4885, %v4429
        %v4887 = vpop.permute.xlu0 %4886
        %4888 = vset.pattern.permute.xlu0 0
        %4889 = vperm.xlu0 %4888, %v4431
        %v4890 = vpop.permute.xlu0 %4889
        %4891 = vset.pattern.permute.xlu0 0
        %4892 = vperm.xlu0 %4891, %v4433
        %v4893 = vpop.permute.xlu0 %4892
        %4894 = vset.pattern.permute.xlu0 0
        %4895 = vperm.xlu0 %4894, %v4435
        %v4896 = vpop.permute.xlu0 %4895
        %4897 = vset.pattern.permute.xlu0 0
        %4898 = vperm.xlu0 %4897, %v4437
        %v4899 = vpop.permute.xlu0 %4898
        %4900 = vset.pattern.permute.xlu0 0
        %4901 = vperm.xlu0 %4900, %v4439
        %v4902 = vpop.permute.xlu0 %4901
        %4903 = vset.pattern.permute.xlu0 0
        %4904 = vperm.xlu0 %4903, %v4441
        %v4905 = vpop.permute.xlu0 %4904
        %4906 = vset.pattern.permute.xlu0 0
        %4907 = vperm.xlu0 %4906, %v4443
        %v4908 = vpop.permute.xlu0 %4907
        %4909 = vset.pattern.permute.xlu0 0
        %4910 = vperm.xlu0 %4909, %v4445
        %v4911 = vpop.permute.xlu0 %4910
        %4912 = vset.pattern.permute.xlu0 0
        %4913 = vperm.xlu0 %4912, %v4447
        %v4914 = vpop.permute.xlu0 %4913
        %4915 = vset.pattern.permute.xlu0 0
        %4916 = vperm.xlu0 %4915, %v4449
        %v4917 = vpop.permute.xlu0 %4916
        %4918 = vset.pattern.permute.xlu0 0
        %4919 = vperm.xlu0 %4918, %v4451
        %v4920 = vpop.permute.xlu0 %4919
        %4921 = vset.pattern.permute.xlu0 0
        %4922 = vperm.xlu0 %4921, %v4453
        %v4923 = vpop.permute.xlu0 %4922
        %4924 = vset.pattern.permute.xlu0 0
        %4925 = vperm.xlu0 %4924, %v4455
        %v4926 = vpop.permute.xlu0 %4925
        %4927 = vset.pattern.permute.xlu0 0
        %4928 = vperm.xlu0 %4927, %v4457
        %v4929 = vpop.permute.xlu0 %4928
        %4930 = vset.pattern.permute.xlu0 0
        %4931 = vperm.xlu0 %4930, %v4459
        %v4932 = vpop.permute.xlu0 %4931
        %4933 = vset.pattern.permute.xlu0 0
        %4934 = vperm.xlu0 %4933, %v4461
        %v4935 = vpop.permute.xlu0 %4934
        %4936 = vset.pattern.permute.xlu0 0
        %4937 = vperm.xlu0 %4936, %v4463
        %v4938 = vpop.permute.xlu0 %4937
        %4939 = vset.pattern.permute.xlu0 0
        %4940 = vperm.xlu0 %4939, %v4465
        %v4941 = vpop.permute.xlu0 %4940
        %4942 = vset.pattern.permute.xlu0 0
        %4943 = vperm.xlu0 %4942, %v4467
        %v4944 = vpop.permute.xlu0 %4943
        %4945 = vset.pattern.permute.xlu0 0
        %4946 = vperm.xlu0 %4945, %v4469
        %v4947 = vpop.permute.xlu0 %4946
        %4948 = vset.pattern.permute.xlu0 0
        %4949 = vperm.xlu0 %4948, %v4471
        %v4950 = vpop.permute.xlu0 %4949
        %4951 = vset.pattern.permute.xlu0 0
        %4952 = vperm.xlu0 %4951, %v4473
        %v4953 = vpop.permute.xlu0 %4952
        %4954 = vset.pattern.permute.xlu0 0
        %4955 = vperm.xlu0 %4954, %v4475
        %v4956 = vpop.permute.xlu0 %4955
        %4957 = vset.pattern.permute.xlu0 0
        %4958 = vperm.xlu0 %4957, %v4477
        %v4959 = vpop.permute.xlu0 %4958
        %4960 = vset.pattern.permute.xlu0 0
        %4961 = vperm.xlu0 %4960, %v4479
        %v4962 = vpop.permute.xlu0 %4961
        %4963 = vset.pattern.permute.xlu0 0
        %4964 = vperm.xlu0 %4963, %v4481
        %v4965 = vpop.permute.xlu0 %4964
        %4966 = vset.pattern.permute.xlu0 0
        %4967 = vperm.xlu0 %4966, %v4483
        %v4968 = vpop.permute.xlu0 %4967
        %4969 = vset.pattern.permute.xlu0 0
        %4970 = vperm.xlu0 %4969, %v4485
        %v4971 = vpop.permute.xlu0 %4970
        %4972 = vset.pattern.permute.xlu0 0
        %4973 = vperm.xlu0 %4972, %v4487
        %v4974 = vpop.permute.xlu0 %4973
        %4975 = vset.pattern.permute.xlu0 0
        %4976 = vperm.xlu0 %4975, %v4489
        %v4977 = vpop.permute.xlu0 %4976
        %4978 = vset.pattern.permute.xlu0 0
        %4979 = vperm.xlu0 %4978, %v4491
        %v4980 = vpop.permute.xlu0 %4979
        %4981 = vset.pattern.permute.xlu0 0
        %4982 = vperm.xlu0 %4981, %v4493
        %v4983 = vpop.permute.xlu0 %4982
        %4984 = vset.pattern.permute.xlu0 0
        %4985 = vperm.xlu0 %4984, %v4495
        %v4986 = vpop.permute.xlu0 %4985
        %4987 = vset.pattern.permute.xlu0 0
        %4988 = vperm.xlu0 %4987, %v4497
        %v4989 = vpop.permute.xlu0 %4988
        %4990 = vset.pattern.permute.xlu0 0
        %4991 = vperm.xlu0 %4990, %v4499
        %v4992 = vpop.permute.xlu0 %4991
        %4993 = vset.pattern.permute.xlu0 0
        %4994 = vperm.xlu0 %4993, %v4501
        %v4995 = vpop.permute.xlu0 %4994
        %4996 = vset.pattern.permute.xlu0 0
        %4997 = vperm.xlu0 %4996, %v4503
        %v4998 = vpop.permute.xlu0 %4997
        %4999 = vset.pattern.permute.xlu0 0
        %5000 = vperm.xlu0 %4999, %v4505
        %v5001 = vpop.permute.xlu0 %5000
        %5002 = vset.pattern.permute.xlu0 0
        %5003 = vperm.xlu0 %5002, %v4507
        %v5004 = vpop.permute.xlu0 %5003
        %5005 = vset.pattern.permute.xlu0 0
        %5006 = vperm.xlu0 %5005, %v4509
        %v5007 = vpop.permute.xlu0 %5006
        %5008 = vset.pattern.permute.xlu0 0
        %5009 = vperm.xlu0 %5008, %v4511
        %v5010 = vpop.permute.xlu0 %5009
        %5011 = vset.pattern.permute.xlu0 0
        %5012 = vperm.xlu0 %5011, %v4513
        %v5013 = vpop.permute.xlu0 %5012
        %5014 = vset.pattern.permute.xlu0 0
        %5015 = vperm.xlu0 %5014, %v4515
        %v5016 = vpop.permute.xlu0 %5015
        %5017 = vset.pattern.permute.xlu0 0
        %5018 = vperm.xlu0 %5017, %v4517
        %v5019 = vpop.permute.xlu0 %5018
        %5020 = vset.pattern.permute.xlu0 0
        %5021 = vperm.xlu0 %5020, %v4519
        %v5022 = vpop.permute.xlu0 %5021
        %5023 = vset.pattern.permute.xlu0 0
        %5024 = vperm.xlu0 %5023, %v4521
        %v5025 = vpop.permute.xlu0 %5024
        %5026 = vset.pattern.permute.xlu0 0
        %5027 = vperm.xlu0 %5026, %v4523
        %v5028 = vpop.permute.xlu0 %5027
        %5029 = vset.pattern.permute.xlu0 0
        %5030 = vperm.xlu0 %5029, %v4525
        %v5031 = vpop.permute.xlu0 %5030
        %5032 = vset.pattern.permute.xlu0 0
        %5033 = vperm.xlu0 %5032, %v4527
        %v5034 = vpop.permute.xlu0 %5033
        %5035 = vset.pattern.permute.xlu0 0
        %5036 = vperm.xlu0 %5035, %v4529
        %v5037 = vpop.permute.xlu0 %5036
        %5038 = vset.pattern.permute.xlu0 0
        %5039 = vperm.xlu0 %5038, %v4531
        %v5040 = vpop.permute.xlu0 %5039
        %5041 = vset.pattern.permute.xlu0 0
        %5042 = vperm.xlu0 %5041, %v4533
        %v5043 = vpop.permute.xlu0 %5042
        %5044 = vset.pattern.permute.xlu0 0
        %5045 = vperm.xlu0 %5044, %v4535
        %v5046 = vpop.permute.xlu0 %5045
        %5047 = vset.pattern.permute.xlu0 0
        %5048 = vperm.xlu0 %5047, %v4537
        %v5049 = vpop.permute.xlu0 %5048
        %v5050 = vlaneseq
        %v5051 = vshrl.u32 %v5050, 7
        %v5052 = vsub.s32 %v3433, %v5051
        %v5053 = vrot.slane %v4668, %v5052
        %v5054 = vlaneseq
        %v5055 = vshrl.u32 %v5054, 7
        %v5056 = vsub.s32 %v3438, %v5055
        %v5057 = vrot.slane %v4671, %v5056
        %v5058 = vsel %vm3443, %v5057, %v5053
        %v5059 = vlaneseq
        %v5060 = vshrl.u32 %v5059, 7
        %v5061 = vsub.s32 %v3445, %v5060
        %v5062 = vrot.slane %v4674, %v5061
        %v5063 = vsel %vm3450, %v5062, %v5058
        %v5064 = vlaneseq
        %v5065 = vshrl.u32 %v5064, 7
        %v5066 = vsub.s32 %v3452, %v5065
        %v5067 = vrot.slane %v4677, %v5066
        %v5068 = vsel %vm3457, %v5067, %v5063
        %v5069 = vlaneseq
        %v5070 = vshrl.u32 %v5069, 7
        %v5071 = vsub.s32 %v3459, %v5070
        %v5072 = vrot.slane %v4680, %v5071
        %v5073 = vsel %vm3464, %v5072, %v5068
        %v5074 = vlaneseq
        %v5075 = vshrl.u32 %v5074, 7
        %v5076 = vsub.s32 %v3466, %v5075
        %v5077 = vrot.slane %v4683, %v5076
        %v5078 = vsel %vm3471, %v5077, %v5073
        %v5079 = vlaneseq
        %v5080 = vshrl.u32 %v5079, 7
        %v5081 = vsub.s32 %v3473, %v5080
        %v5082 = vrot.slane %v4686, %v5081
        %v5083 = vsel %vm3478, %v5082, %v5078
        %v5084 = vlaneseq
        %v5085 = vshrl.u32 %v5084, 7
        %v5086 = vsub.s32 %v3480, %v5085
        %v5087 = vrot.slane %v4689, %v5086
        %v5088 = vsel %vm3485, %v5087, %v5083
        %v5089 = vlaneseq
        %v5090 = vshrl.u32 %v5089, 7
        %v5091 = vsub.s32 %v3487, %v5090
        %v5092 = vrot.slane %v4692, %v5091
        %v5093 = vsel %vm3492, %v5092, %v5088
        %v5094 = vlaneseq
        %v5095 = vshrl.u32 %v5094, 7
        %v5096 = vsub.s32 %v3494, %v5095
        %v5097 = vrot.slane %v4695, %v5096
        %v5098 = vsel %vm3499, %v5097, %v5093
        %v5099 = vlaneseq
        %v5100 = vshrl.u32 %v5099, 7
        %v5101 = vsub.s32 %v3501, %v5100
        %v5102 = vrot.slane %v4698, %v5101
        %v5103 = vsel %vm3506, %v5102, %v5098
        %v5104 = vlaneseq
        %v5105 = vshrl.u32 %v5104, 7
        %v5106 = vsub.s32 %v3508, %v5105
        %v5107 = vrot.slane %v4701, %v5106
        %v5108 = vsel %vm3513, %v5107, %v5103
        %v5109 = vlaneseq
        %v5110 = vshrl.u32 %v5109, 7
        %v5111 = vsub.s32 %v3515, %v5110
        %v5112 = vrot.slane %v4704, %v5111
        %v5113 = vsel %vm3520, %v5112, %v5108
        %v5114 = vlaneseq
        %v5115 = vshrl.u32 %v5114, 7
        %v5116 = vsub.s32 %v3522, %v5115
        %v5117 = vrot.slane %v4707, %v5116
        %v5118 = vsel %vm3527, %v5117, %v5113
        %v5119 = vlaneseq
        %v5120 = vshrl.u32 %v5119, 7
        %v5121 = vsub.s32 %v3529, %v5120
        %v5122 = vrot.slane %v4710, %v5121
        %v5123 = vsel %vm3534, %v5122, %v5118
        %v5124 = vlaneseq
        %v5125 = vshrl.u32 %v5124, 7
        %v5126 = vsub.s32 %v3536, %v5125
        %v5127 = vrot.slane %v4713, %v5126
        %v5128 = vsel %vm3541, %v5127, %v5123
        %v5129 = vlaneseq
        %v5130 = vshrl.u32 %v5129, 7
        %v5131 = vsub.s32 %v3433, %v5130
        %v5132 = vrot.slane %v4716, %v5131
        %v5133 = vlaneseq
        %v5134 = vshrl.u32 %v5133, 7
        %v5135 = vsub.s32 %v3438, %v5134
        %v5136 = vrot.slane %v4719, %v5135
        %v5137 = vsel %vm3443, %v5136, %v5132
        %v5138 = vlaneseq
        %v5139 = vshrl.u32 %v5138, 7
        %v5140 = vsub.s32 %v3445, %v5139
        %v5141 = vrot.slane %v4722, %v5140
        %v5142 = vsel %vm3450, %v5141, %v5137
        %v5143 = vlaneseq
        %v5144 = vshrl.u32 %v5143, 7
        %v5145 = vsub.s32 %v3452, %v5144
        %v5146 = vrot.slane %v4725, %v5145
        %v5147 = vsel %vm3457, %v5146, %v5142
        %v5148 = vlaneseq
        %v5149 = vshrl.u32 %v5148, 7
        %v5150 = vsub.s32 %v3459, %v5149
        %v5151 = vrot.slane %v4728, %v5150
        %v5152 = vsel %vm3464, %v5151, %v5147
        %v5153 = vlaneseq
        %v5154 = vshrl.u32 %v5153, 7
        %v5155 = vsub.s32 %v3466, %v5154
        %v5156 = vrot.slane %v4731, %v5155
        %v5157 = vsel %vm3471, %v5156, %v5152
        %v5158 = vlaneseq
        %v5159 = vshrl.u32 %v5158, 7
        %v5160 = vsub.s32 %v3473, %v5159
        %v5161 = vrot.slane %v4734, %v5160
        %v5162 = vsel %vm3478, %v5161, %v5157
        %v5163 = vlaneseq
        %v5164 = vshrl.u32 %v5163, 7
        %v5165 = vsub.s32 %v3480, %v5164
        %v5166 = vrot.slane %v4737, %v5165
        %v5167 = vsel %vm3485, %v5166, %v5162
        %v5168 = vlaneseq
        %v5169 = vshrl.u32 %v5168, 7
        %v5170 = vsub.s32 %v3487, %v5169
        %v5171 = vrot.slane %v4740, %v5170
        %v5172 = vsel %vm3492, %v5171, %v5167
        %v5173 = vlaneseq
        %v5174 = vshrl.u32 %v5173, 7
        %v5175 = vsub.s32 %v3494, %v5174
        %v5176 = vrot.slane %v4743, %v5175
        %v5177 = vsel %vm3499, %v5176, %v5172
        %v5178 = vlaneseq
        %v5179 = vshrl.u32 %v5178, 7
        %v5180 = vsub.s32 %v3501, %v5179
        %v5181 = vrot.slane %v4746, %v5180
        %v5182 = vsel %vm3506, %v5181, %v5177
        %v5183 = vlaneseq
        %v5184 = vshrl.u32 %v5183, 7
        %v5185 = vsub.s32 %v3508, %v5184
        %v5186 = vrot.slane %v4749, %v5185
        %v5187 = vsel %vm3513, %v5186, %v5182
        %v5188 = vlaneseq
        %v5189 = vshrl.u32 %v5188, 7
        %v5190 = vsub.s32 %v3515, %v5189
        %v5191 = vrot.slane %v4752, %v5190
        %v5192 = vsel %vm3520, %v5191, %v5187
        %v5193 = vlaneseq
        %v5194 = vshrl.u32 %v5193, 7
        %v5195 = vsub.s32 %v3522, %v5194
        %v5196 = vrot.slane %v4755, %v5195
        %v5197 = vsel %vm3527, %v5196, %v5192
        %v5198 = vlaneseq
        %v5199 = vshrl.u32 %v5198, 7
        %v5200 = vsub.s32 %v3529, %v5199
        %v5201 = vrot.slane %v4758, %v5200
        %v5202 = vsel %vm3534, %v5201, %v5197
        %v5203 = vlaneseq
        %v5204 = vshrl.u32 %v5203, 7
        %v5205 = vsub.s32 %v3536, %v5204
        %v5206 = vrot.slane %v4761, %v5205
        %v5207 = vsel %vm3541, %v5206, %v5202
        %v5208 = vlaneseq
        %v5209 = vshrl.u32 %v5208, 7
        %v5210 = vsub.s32 %v3433, %v5209
        %v5211 = vrot.slane %v4764, %v5210
        %v5212 = vlaneseq
        %v5213 = vshrl.u32 %v5212, 7
        %v5214 = vsub.s32 %v3438, %v5213
        %v5215 = vrot.slane %v4767, %v5214
        %v5216 = vsel %vm3443, %v5215, %v5211
        %v5217 = vlaneseq
        %v5218 = vshrl.u32 %v5217, 7
        %v5219 = vsub.s32 %v3445, %v5218
        %v5220 = vrot.slane %v4770, %v5219
        %v5221 = vsel %vm3450, %v5220, %v5216
        %v5222 = vlaneseq
        %v5223 = vshrl.u32 %v5222, 7
        %v5224 = vsub.s32 %v3452, %v5223
        %v5225 = vrot.slane %v4773, %v5224
        %v5226 = vsel %vm3457, %v5225, %v5221
        %v5227 = vlaneseq
        %v5228 = vshrl.u32 %v5227, 7
        %v5229 = vsub.s32 %v3459, %v5228
        %v5230 = vrot.slane %v4776, %v5229
        %v5231 = vsel %vm3464, %v5230, %v5226
        %v5232 = vlaneseq
        %v5233 = vshrl.u32 %v5232, 7
        %v5234 = vsub.s32 %v3466, %v5233
        %v5235 = vrot.slane %v4779, %v5234
        %v5236 = vsel %vm3471, %v5235, %v5231
        %v5237 = vlaneseq
        %v5238 = vshrl.u32 %v5237, 7
        %v5239 = vsub.s32 %v3473, %v5238
        %v5240 = vrot.slane %v4782, %v5239
        %v5241 = vsel %vm3478, %v5240, %v5236
        %v5242 = vlaneseq
        %v5243 = vshrl.u32 %v5242, 7
        %v5244 = vsub.s32 %v3480, %v5243
        %v5245 = vrot.slane %v4785, %v5244
        %v5246 = vsel %vm3485, %v5245, %v5241
        %v5247 = vlaneseq
        %v5248 = vshrl.u32 %v5247, 7
        %v5249 = vsub.s32 %v3487, %v5248
        %v5250 = vrot.slane %v4788, %v5249
        %v5251 = vsel %vm3492, %v5250, %v5246
        %v5252 = vlaneseq
        %v5253 = vshrl.u32 %v5252, 7
        %v5254 = vsub.s32 %v3494, %v5253
        %v5255 = vrot.slane %v4791, %v5254
        %v5256 = vsel %vm3499, %v5255, %v5251
        %v5257 = vlaneseq
        %v5258 = vshrl.u32 %v5257, 7
        %v5259 = vsub.s32 %v3501, %v5258
        %v5260 = vrot.slane %v4794, %v5259
        %v5261 = vsel %vm3506, %v5260, %v5256
        %v5262 = vlaneseq
        %v5263 = vshrl.u32 %v5262, 7
        %v5264 = vsub.s32 %v3508, %v5263
        %v5265 = vrot.slane %v4797, %v5264
        %v5266 = vsel %vm3513, %v5265, %v5261
        %v5267 = vlaneseq
        %v5268 = vshrl.u32 %v5267, 7
        %v5269 = vsub.s32 %v3515, %v5268
        %v5270 = vrot.slane %v4800, %v5269
        %v5271 = vsel %vm3520, %v5270, %v5266
        %v5272 = vlaneseq
        %v5273 = vshrl.u32 %v5272, 7
        %v5274 = vsub.s32 %v3522, %v5273
        %v5275 = vrot.slane %v4803, %v5274
        %v5276 = vsel %vm3527, %v5275, %v5271
        %v5277 = vlaneseq
        %v5278 = vshrl.u32 %v5277, 7
        %v5279 = vsub.s32 %v3529, %v5278
        %v5280 = vrot.slane %v4806, %v5279
        %v5281 = vsel %vm3534, %v5280, %v5276
        %v5282 = vlaneseq
        %v5283 = vshrl.u32 %v5282, 7
        %v5284 = vsub.s32 %v3536, %v5283
        %v5285 = vrot.slane %v4809, %v5284
        %v5286 = vsel %vm3541, %v5285, %v5281
        %v5287 = vlaneseq
        %v5288 = vshrl.u32 %v5287, 7
        %v5289 = vsub.s32 %v3433, %v5288
        %v5290 = vrot.slane %v4812, %v5289
        %v5291 = vlaneseq
        %v5292 = vshrl.u32 %v5291, 7
        %v5293 = vsub.s32 %v3438, %v5292
        %v5294 = vrot.slane %v4815, %v5293
        %v5295 = vsel %vm3443, %v5294, %v5290
        %v5296 = vlaneseq
        %v5297 = vshrl.u32 %v5296, 7
        %v5298 = vsub.s32 %v3445, %v5297
        %v5299 = vrot.slane %v4818, %v5298
        %v5300 = vsel %vm3450, %v5299, %v5295
        %v5301 = vlaneseq
        %v5302 = vshrl.u32 %v5301, 7
        %v5303 = vsub.s32 %v3452, %v5302
        %v5304 = vrot.slane %v4821, %v5303
        %v5305 = vsel %vm3457, %v5304, %v5300
        %v5306 = vlaneseq
        %v5307 = vshrl.u32 %v5306, 7
        %v5308 = vsub.s32 %v3459, %v5307
        %v5309 = vrot.slane %v4824, %v5308
        %v5310 = vsel %vm3464, %v5309, %v5305
        %v5311 = vlaneseq
        %v5312 = vshrl.u32 %v5311, 7
        %v5313 = vsub.s32 %v3466, %v5312
        %v5314 = vrot.slane %v4827, %v5313
        %v5315 = vsel %vm3471, %v5314, %v5310
        %v5316 = vlaneseq
        %v5317 = vshrl.u32 %v5316, 7
        %v5318 = vsub.s32 %v3473, %v5317
        %v5319 = vrot.slane %v4830, %v5318
        %v5320 = vsel %vm3478, %v5319, %v5315
        %v5321 = vlaneseq
        %v5322 = vshrl.u32 %v5321, 7
        %v5323 = vsub.s32 %v3480, %v5322
        %v5324 = vrot.slane %v4833, %v5323
        %v5325 = vsel %vm3485, %v5324, %v5320
        %v5326 = vlaneseq
        %v5327 = vshrl.u32 %v5326, 7
        %v5328 = vsub.s32 %v3487, %v5327
        %v5329 = vrot.slane %v4836, %v5328
        %v5330 = vsel %vm3492, %v5329, %v5325
        %v5331 = vlaneseq
        %v5332 = vshrl.u32 %v5331, 7
        %v5333 = vsub.s32 %v3494, %v5332
        %v5334 = vrot.slane %v4839, %v5333
        %v5335 = vsel %vm3499, %v5334, %v5330
        %v5336 = vlaneseq
        %v5337 = vshrl.u32 %v5336, 7
        %v5338 = vsub.s32 %v3501, %v5337
        %v5339 = vrot.slane %v4842, %v5338
        %v5340 = vsel %vm3506, %v5339, %v5335
        %v5341 = vlaneseq
        %v5342 = vshrl.u32 %v5341, 7
        %v5343 = vsub.s32 %v3508, %v5342
        %v5344 = vrot.slane %v4845, %v5343
        %v5345 = vsel %vm3513, %v5344, %v5340
        %v5346 = vlaneseq
        %v5347 = vshrl.u32 %v5346, 7
        %v5348 = vsub.s32 %v3515, %v5347
        %v5349 = vrot.slane %v4848, %v5348
        %v5350 = vsel %vm3520, %v5349, %v5345
        %v5351 = vlaneseq
        %v5352 = vshrl.u32 %v5351, 7
        %v5353 = vsub.s32 %v3522, %v5352
        %v5354 = vrot.slane %v4851, %v5353
        %v5355 = vsel %vm3527, %v5354, %v5350
        %v5356 = vlaneseq
        %v5357 = vshrl.u32 %v5356, 7
        %v5358 = vsub.s32 %v3529, %v5357
        %v5359 = vrot.slane %v4854, %v5358
        %v5360 = vsel %vm3534, %v5359, %v5355
        %v5361 = vlaneseq
        %v5362 = vshrl.u32 %v5361, 7
        %v5363 = vsub.s32 %v3536, %v5362
        %v5364 = vrot.slane %v4857, %v5363
        %v5365 = vsel %vm3541, %v5364, %v5360
        %v5366 = vlaneseq
        %v5367 = vshrl.u32 %v5366, 7
        %v5368 = vsub.s32 %v3433, %v5367
        %v5369 = vrot.slane %v4860, %v5368
        %v5370 = vlaneseq
        %v5371 = vshrl.u32 %v5370, 7
        %v5372 = vsub.s32 %v3438, %v5371
        %v5373 = vrot.slane %v4863, %v5372
        %v5374 = vsel %vm3443, %v5373, %v5369
        %v5375 = vlaneseq
        %v5376 = vshrl.u32 %v5375, 7
        %v5377 = vsub.s32 %v3445, %v5376
        %v5378 = vrot.slane %v4866, %v5377
        %v5379 = vsel %vm3450, %v5378, %v5374
        %v5380 = vlaneseq
        %v5381 = vshrl.u32 %v5380, 7
        %v5382 = vsub.s32 %v3452, %v5381
        %v5383 = vrot.slane %v4869, %v5382
        %v5384 = vsel %vm3457, %v5383, %v5379
        %v5385 = vlaneseq
        %v5386 = vshrl.u32 %v5385, 7
        %v5387 = vsub.s32 %v3459, %v5386
        %v5388 = vrot.slane %v4872, %v5387
        %v5389 = vsel %vm3464, %v5388, %v5384
        %v5390 = vlaneseq
        %v5391 = vshrl.u32 %v5390, 7
        %v5392 = vsub.s32 %v3466, %v5391
        %v5393 = vrot.slane %v4875, %v5392
        %v5394 = vsel %vm3471, %v5393, %v5389
        %v5395 = vlaneseq
        %v5396 = vshrl.u32 %v5395, 7
        %v5397 = vsub.s32 %v3473, %v5396
        %v5398 = vrot.slane %v4878, %v5397
        %v5399 = vsel %vm3478, %v5398, %v5394
        %v5400 = vlaneseq
        %v5401 = vshrl.u32 %v5400, 7
        %v5402 = vsub.s32 %v3480, %v5401
        %v5403 = vrot.slane %v4881, %v5402
        %v5404 = vsel %vm3485, %v5403, %v5399
        %v5405 = vlaneseq
        %v5406 = vshrl.u32 %v5405, 7
        %v5407 = vsub.s32 %v3487, %v5406
        %v5408 = vrot.slane %v4884, %v5407
        %v5409 = vsel %vm3492, %v5408, %v5404
        %v5410 = vlaneseq
        %v5411 = vshrl.u32 %v5410, 7
        %v5412 = vsub.s32 %v3494, %v5411
        %v5413 = vrot.slane %v4887, %v5412
        %v5414 = vsel %vm3499, %v5413, %v5409
        %v5415 = vlaneseq
        %v5416 = vshrl.u32 %v5415, 7
        %v5417 = vsub.s32 %v3501, %v5416
        %v5418 = vrot.slane %v4890, %v5417
        %v5419 = vsel %vm3506, %v5418, %v5414
        %v5420 = vlaneseq
        %v5421 = vshrl.u32 %v5420, 7
        %v5422 = vsub.s32 %v3508, %v5421
        %v5423 = vrot.slane %v4893, %v5422
        %v5424 = vsel %vm3513, %v5423, %v5419
        %v5425 = vlaneseq
        %v5426 = vshrl.u32 %v5425, 7
        %v5427 = vsub.s32 %v3515, %v5426
        %v5428 = vrot.slane %v4896, %v5427
        %v5429 = vsel %vm3520, %v5428, %v5424
        %v5430 = vlaneseq
        %v5431 = vshrl.u32 %v5430, 7
        %v5432 = vsub.s32 %v3522, %v5431
        %v5433 = vrot.slane %v4899, %v5432
        %v5434 = vsel %vm3527, %v5433, %v5429
        %v5435 = vlaneseq
        %v5436 = vshrl.u32 %v5435, 7
        %v5437 = vsub.s32 %v3529, %v5436
        %v5438 = vrot.slane %v4902, %v5437
        %v5439 = vsel %vm3534, %v5438, %v5434
        %v5440 = vlaneseq
        %v5441 = vshrl.u32 %v5440, 7
        %v5442 = vsub.s32 %v3536, %v5441
        %v5443 = vrot.slane %v4905, %v5442
        %v5444 = vsel %vm3541, %v5443, %v5439
        %v5445 = vlaneseq
        %v5446 = vshrl.u32 %v5445, 7
        %v5447 = vsub.s32 %v3433, %v5446
        %v5448 = vrot.slane %v4908, %v5447
        %v5449 = vlaneseq
        %v5450 = vshrl.u32 %v5449, 7
        %v5451 = vsub.s32 %v3438, %v5450
        %v5452 = vrot.slane %v4911, %v5451
        %v5453 = vsel %vm3443, %v5452, %v5448
        %v5454 = vlaneseq
        %v5455 = vshrl.u32 %v5454, 7
        %v5456 = vsub.s32 %v3445, %v5455
        %v5457 = vrot.slane %v4914, %v5456
        %v5458 = vsel %vm3450, %v5457, %v5453
        %v5459 = vlaneseq
        %v5460 = vshrl.u32 %v5459, 7
        %v5461 = vsub.s32 %v3452, %v5460
        %v5462 = vrot.slane %v4917, %v5461
        %v5463 = vsel %vm3457, %v5462, %v5458
        %v5464 = vlaneseq
        %v5465 = vshrl.u32 %v5464, 7
        %v5466 = vsub.s32 %v3459, %v5465
        %v5467 = vrot.slane %v4920, %v5466
        %v5468 = vsel %vm3464, %v5467, %v5463
        %v5469 = vlaneseq
        %v5470 = vshrl.u32 %v5469, 7
        %v5471 = vsub.s32 %v3466, %v5470
        %v5472 = vrot.slane %v4923, %v5471
        %v5473 = vsel %vm3471, %v5472, %v5468
        %v5474 = vlaneseq
        %v5475 = vshrl.u32 %v5474, 7
        %v5476 = vsub.s32 %v3473, %v5475
        %v5477 = vrot.slane %v4926, %v5476
        %v5478 = vsel %vm3478, %v5477, %v5473
        %v5479 = vlaneseq
        %v5480 = vshrl.u32 %v5479, 7
        %v5481 = vsub.s32 %v3480, %v5480
        %v5482 = vrot.slane %v4929, %v5481
        %v5483 = vsel %vm3485, %v5482, %v5478
        %v5484 = vlaneseq
        %v5485 = vshrl.u32 %v5484, 7
        %v5486 = vsub.s32 %v3487, %v5485
        %v5487 = vrot.slane %v4932, %v5486
        %v5488 = vsel %vm3492, %v5487, %v5483
        %v5489 = vlaneseq
        %v5490 = vshrl.u32 %v5489, 7
        %v5491 = vsub.s32 %v3494, %v5490
        %v5492 = vrot.slane %v4935, %v5491
        %v5493 = vsel %vm3499, %v5492, %v5488
        %v5494 = vlaneseq
        %v5495 = vshrl.u32 %v5494, 7
        %v5496 = vsub.s32 %v3501, %v5495
        %v5497 = vrot.slane %v4938, %v5496
        %v5498 = vsel %vm3506, %v5497, %v5493
        %v5499 = vlaneseq
        %v5500 = vshrl.u32 %v5499, 7
        %v5501 = vsub.s32 %v3508, %v5500
        %v5502 = vrot.slane %v4941, %v5501
        %v5503 = vsel %vm3513, %v5502, %v5498
        %v5504 = vlaneseq
        %v5505 = vshrl.u32 %v5504, 7
        %v5506 = vsub.s32 %v3515, %v5505
        %v5507 = vrot.slane %v4944, %v5506
        %v5508 = vsel %vm3520, %v5507, %v5503
        %v5509 = vlaneseq
        %v5510 = vshrl.u32 %v5509, 7
        %v5511 = vsub.s32 %v3522, %v5510
        %v5512 = vrot.slane %v4947, %v5511
        %v5513 = vsel %vm3527, %v5512, %v5508
        %v5514 = vlaneseq
        %v5515 = vshrl.u32 %v5514, 7
        %v5516 = vsub.s32 %v3529, %v5515
        %v5517 = vrot.slane %v4950, %v5516
        %v5518 = vsel %vm3534, %v5517, %v5513
        %v5519 = vlaneseq
        %v5520 = vshrl.u32 %v5519, 7
        %v5521 = vsub.s32 %v3536, %v5520
        %v5522 = vrot.slane %v4953, %v5521
        %v5523 = vsel %vm3541, %v5522, %v5518
        %v5524 = vlaneseq
        %v5525 = vshrl.u32 %v5524, 7
        %v5526 = vsub.s32 %v3433, %v5525
        %v5527 = vrot.slane %v4956, %v5526
        %v5528 = vlaneseq
        %v5529 = vshrl.u32 %v5528, 7
        %v5530 = vsub.s32 %v3438, %v5529
        %v5531 = vrot.slane %v4959, %v5530
        %v5532 = vsel %vm3443, %v5531, %v5527
        %v5533 = vlaneseq
        %v5534 = vshrl.u32 %v5533, 7
        %v5535 = vsub.s32 %v3445, %v5534
        %v5536 = vrot.slane %v4962, %v5535
        %v5537 = vsel %vm3450, %v5536, %v5532
        %v5538 = vlaneseq
        %v5539 = vshrl.u32 %v5538, 7
        %v5540 = vsub.s32 %v3452, %v5539
        %v5541 = vrot.slane %v4965, %v5540
        %v5542 = vsel %vm3457, %v5541, %v5537
        %v5543 = vlaneseq
        %v5544 = vshrl.u32 %v5543, 7
        %v5545 = vsub.s32 %v3459, %v5544
        %v5546 = vrot.slane %v4968, %v5545
        %v5547 = vsel %vm3464, %v5546, %v5542
        %v5548 = vlaneseq
        %v5549 = vshrl.u32 %v5548, 7
        %v5550 = vsub.s32 %v3466, %v5549
        %v5551 = vrot.slane %v4971, %v5550
        %v5552 = vsel %vm3471, %v5551, %v5547
        %v5553 = vlaneseq
        %v5554 = vshrl.u32 %v5553, 7
        %v5555 = vsub.s32 %v3473, %v5554
        %v5556 = vrot.slane %v4974, %v5555
        %v5557 = vsel %vm3478, %v5556, %v5552
        %v5558 = vlaneseq
        %v5559 = vshrl.u32 %v5558, 7
        %v5560 = vsub.s32 %v3480, %v5559
        %v5561 = vrot.slane %v4977, %v5560
        %v5562 = vsel %vm3485, %v5561, %v5557
        %v5563 = vlaneseq
        %v5564 = vshrl.u32 %v5563, 7
        %v5565 = vsub.s32 %v3487, %v5564
        %v5566 = vrot.slane %v4980, %v5565
        %v5567 = vsel %vm3492, %v5566, %v5562
        %v5568 = vlaneseq
        %v5569 = vshrl.u32 %v5568, 7
        %v5570 = vsub.s32 %v3494, %v5569
        %v5571 = vrot.slane %v4983, %v5570
        %v5572 = vsel %vm3499, %v5571, %v5567
        %v5573 = vlaneseq
        %v5574 = vshrl.u32 %v5573, 7
        %v5575 = vsub.s32 %v3501, %v5574
        %v5576 = vrot.slane %v4986, %v5575
        %v5577 = vsel %vm3506, %v5576, %v5572
        %v5578 = vlaneseq
        %v5579 = vshrl.u32 %v5578, 7
        %v5580 = vsub.s32 %v3508, %v5579
        %v5581 = vrot.slane %v4989, %v5580
        %v5582 = vsel %vm3513, %v5581, %v5577
        %v5583 = vlaneseq
        %v5584 = vshrl.u32 %v5583, 7
        %v5585 = vsub.s32 %v3515, %v5584
        %v5586 = vrot.slane %v4992, %v5585
        %v5587 = vsel %vm3520, %v5586, %v5582
        %v5588 = vlaneseq
        %v5589 = vshrl.u32 %v5588, 7
        %v5590 = vsub.s32 %v3522, %v5589
        %v5591 = vrot.slane %v4995, %v5590
        %v5592 = vsel %vm3527, %v5591, %v5587
        %v5593 = vlaneseq
        %v5594 = vshrl.u32 %v5593, 7
        %v5595 = vsub.s32 %v3529, %v5594
        %v5596 = vrot.slane %v4998, %v5595
        %v5597 = vsel %vm3534, %v5596, %v5592
        %v5598 = vlaneseq
        %v5599 = vshrl.u32 %v5598, 7
        %v5600 = vsub.s32 %v3536, %v5599
        %v5601 = vrot.slane %v5001, %v5600
        %v5602 = vsel %vm3541, %v5601, %v5597
        %v5603 = vlaneseq
        %v5604 = vshrl.u32 %v5603, 7
        %v5605 = vsub.s32 %v3433, %v5604
        %v5606 = vrot.slane %v5004, %v5605
        %v5607 = vlaneseq
        %v5608 = vshrl.u32 %v5607, 7
        %v5609 = vsub.s32 %v3438, %v5608
        %v5610 = vrot.slane %v5007, %v5609
        %v5611 = vsel %vm3443, %v5610, %v5606
        %v5612 = vlaneseq
        %v5613 = vshrl.u32 %v5612, 7
        %v5614 = vsub.s32 %v3445, %v5613
        %v5615 = vrot.slane %v5010, %v5614
        %v5616 = vsel %vm3450, %v5615, %v5611
        %v5617 = vlaneseq
        %v5618 = vshrl.u32 %v5617, 7
        %v5619 = vsub.s32 %v3452, %v5618
        %v5620 = vrot.slane %v5013, %v5619
        %v5621 = vsel %vm3457, %v5620, %v5616
        %v5622 = vlaneseq
        %v5623 = vshrl.u32 %v5622, 7
        %v5624 = vsub.s32 %v3459, %v5623
        %v5625 = vrot.slane %v5016, %v5624
        %v5626 = vsel %vm3464, %v5625, %v5621
        %v5627 = vlaneseq
        %v5628 = vshrl.u32 %v5627, 7
        %v5629 = vsub.s32 %v3466, %v5628
        %v5630 = vrot.slane %v5019, %v5629
        %v5631 = vsel %vm3471, %v5630, %v5626
        %v5632 = vlaneseq
        %v5633 = vshrl.u32 %v5632, 7
        %v5634 = vsub.s32 %v3473, %v5633
        %v5635 = vrot.slane %v5022, %v5634
        %v5636 = vsel %vm3478, %v5635, %v5631
        %v5637 = vlaneseq
        %v5638 = vshrl.u32 %v5637, 7
        %v5639 = vsub.s32 %v3480, %v5638
        %v5640 = vrot.slane %v5025, %v5639
        %v5641 = vsel %vm3485, %v5640, %v5636
        %v5642 = vlaneseq
        %v5643 = vshrl.u32 %v5642, 7
        %v5644 = vsub.s32 %v3487, %v5643
        %v5645 = vrot.slane %v5028, %v5644
        %v5646 = vsel %vm3492, %v5645, %v5641
        %v5647 = vlaneseq
        %v5648 = vshrl.u32 %v5647, 7
        %v5649 = vsub.s32 %v3494, %v5648
        %v5650 = vrot.slane %v5031, %v5649
        %v5651 = vsel %vm3499, %v5650, %v5646
        %v5652 = vlaneseq
        %v5653 = vshrl.u32 %v5652, 7
        %v5654 = vsub.s32 %v3501, %v5653
        %v5655 = vrot.slane %v5034, %v5654
        %v5656 = vsel %vm3506, %v5655, %v5651
        %v5657 = vlaneseq
        %v5658 = vshrl.u32 %v5657, 7
        %v5659 = vsub.s32 %v3508, %v5658
        %v5660 = vrot.slane %v5037, %v5659
        %v5661 = vsel %vm3513, %v5660, %v5656
        %v5662 = vlaneseq
        %v5663 = vshrl.u32 %v5662, 7
        %v5664 = vsub.s32 %v3515, %v5663
        %v5665 = vrot.slane %v5040, %v5664
        %v5666 = vsel %vm3520, %v5665, %v5661
        %v5667 = vlaneseq
        %v5668 = vshrl.u32 %v5667, 7
        %v5669 = vsub.s32 %v3522, %v5668
        %v5670 = vrot.slane %v5043, %v5669
        %v5671 = vsel %vm3527, %v5670, %v5666
        %v5672 = vlaneseq
        %v5673 = vshrl.u32 %v5672, 7
        %v5674 = vsub.s32 %v3529, %v5673
        %v5675 = vrot.slane %v5046, %v5674
        %v5676 = vsel %vm3534, %v5675, %v5671
        %v5677 = vlaneseq
        %v5678 = vshrl.u32 %v5677, 7
        %v5679 = vsub.s32 %v3536, %v5678
        %v5680 = vrot.slane %v5049, %v5679
        %v5681 = vsel %vm3541, %v5680, %v5676
        %v5682 = vsel %vm4096, %v5207, %v5128
        %v5683 = vsel %vm4098, %v5286, %v5682
        %v5684 = vsel %vm4100, %v5365, %v5683
        %v5685 = vsel %vm4102, %v5444, %v5684
        %v5686 = vsel %vm4104, %v5523, %v5685
        %v5687 = vsel %vm4106, %v5602, %v5686
        %v5688 = vsel %vm4108, %v5681, %v5687
        %5690 = vadd.xlane.f32.xlu0 %v5688
        %v5691 = vpop.xlane.xlu0 %5690
        %v5692 = vrcp.pop %v5691
        %v5693 = vmul.f32 %v5691, %v5692
        %v5694 = vsub.f32 2.0, %v5693
        %v5695 = vmul.f32 %v5692, %v5694
        %v5697 = vlaneseq
        %v5698 = vshrl.u32 %v5697, 7
        %v5699 = vsub.s32 0, %v5698
        %v5700 = vrot.slane %v5695, %v5699
        %v5701 = vlaneseq
        %v5702 = vshrl.u32 %v5701, 7
        %v5703 = vsub.s32 1, %v5702
        %v5704 = vrot.slane %v5695, %v5703
        %v5705 = vlaneseq
        %v5706 = vshrl.u32 %v5705, 7
        %v5707 = vsub.s32 2, %v5706
        %v5708 = vrot.slane %v5695, %v5707
        %v5709 = vlaneseq
        %v5710 = vshrl.u32 %v5709, 7
        %v5711 = vsub.s32 3, %v5710
        %v5712 = vrot.slane %v5695, %v5711
        %v5713 = vlaneseq
        %v5714 = vshrl.u32 %v5713, 7
        %v5715 = vsub.s32 4, %v5714
        %v5716 = vrot.slane %v5695, %v5715
        %v5717 = vlaneseq
        %v5718 = vshrl.u32 %v5717, 7
        %v5719 = vsub.s32 5, %v5718
        %v5720 = vrot.slane %v5695, %v5719
        %v5721 = vlaneseq
        %v5722 = vshrl.u32 %v5721, 7
        %v5723 = vsub.s32 6, %v5722
        %v5724 = vrot.slane %v5695, %v5723
        %v5725 = vlaneseq
        %v5726 = vshrl.u32 %v5725, 7
        %v5727 = vsub.s32 7, %v5726
        %v5728 = vrot.slane %v5695, %v5727
        %v5737 = vmul.f32 %v4283, %v5700
        %v5738 = vmul.f32 %v4285, %v5700
        %v5739 = vmul.f32 %v4287, %v5700
        %v5740 = vmul.f32 %v4289, %v5700
        %v5741 = vmul.f32 %v4291, %v5700
        %v5742 = vmul.f32 %v4293, %v5700
        %v5743 = vmul.f32 %v4295, %v5700
        %v5744 = vmul.f32 %v4297, %v5700
        %v5745 = vmul.f32 %v4299, %v5700
        %v5746 = vmul.f32 %v4301, %v5700
        %v5747 = vmul.f32 %v4303, %v5700
        %v5748 = vmul.f32 %v4305, %v5700
        %v5749 = vmul.f32 %v4307, %v5700
        %v5750 = vmul.f32 %v4309, %v5700
        %v5751 = vmul.f32 %v4311, %v5700
        %v5752 = vmul.f32 %v4313, %v5700
        %v5753 = vmul.f32 %v4315, %v5704
        %v5754 = vmul.f32 %v4317, %v5704
        %v5755 = vmul.f32 %v4319, %v5704
        %v5756 = vmul.f32 %v4321, %v5704
        %v5757 = vmul.f32 %v4323, %v5704
        %v5758 = vmul.f32 %v4325, %v5704
        %v5759 = vmul.f32 %v4327, %v5704
        %v5760 = vmul.f32 %v4329, %v5704
        %v5761 = vmul.f32 %v4331, %v5704
        %v5762 = vmul.f32 %v4333, %v5704
        %v5763 = vmul.f32 %v4335, %v5704
        %v5764 = vmul.f32 %v4337, %v5704
        %v5765 = vmul.f32 %v4339, %v5704
        %v5766 = vmul.f32 %v4341, %v5704
        %v5767 = vmul.f32 %v4343, %v5704
        %v5768 = vmul.f32 %v4345, %v5704
        %v5769 = vmul.f32 %v4347, %v5708
        %v5770 = vmul.f32 %v4349, %v5708
        %v5771 = vmul.f32 %v4351, %v5708
        %v5772 = vmul.f32 %v4353, %v5708
        %v5773 = vmul.f32 %v4355, %v5708
        %v5774 = vmul.f32 %v4357, %v5708
        %v5775 = vmul.f32 %v4359, %v5708
        %v5776 = vmul.f32 %v4361, %v5708
        %v5777 = vmul.f32 %v4363, %v5708
        %v5778 = vmul.f32 %v4365, %v5708
        %v5779 = vmul.f32 %v4367, %v5708
        %v5780 = vmul.f32 %v4369, %v5708
        %v5781 = vmul.f32 %v4371, %v5708
        %v5782 = vmul.f32 %v4373, %v5708
        %v5783 = vmul.f32 %v4375, %v5708
        %v5784 = vmul.f32 %v4377, %v5708
        %v5785 = vmul.f32 %v4379, %v5712
        %v5786 = vmul.f32 %v4381, %v5712
        %v5787 = vmul.f32 %v4383, %v5712
        %v5788 = vmul.f32 %v4385, %v5712
        %v5789 = vmul.f32 %v4387, %v5712
        %v5790 = vmul.f32 %v4389, %v5712
        %v5791 = vmul.f32 %v4391, %v5712
        %v5792 = vmul.f32 %v4393, %v5712
        %v5793 = vmul.f32 %v4395, %v5712
        %v5794 = vmul.f32 %v4397, %v5712
        %v5795 = vmul.f32 %v4399, %v5712
        %v5796 = vmul.f32 %v4401, %v5712
        %v5797 = vmul.f32 %v4403, %v5712
        %v5798 = vmul.f32 %v4405, %v5712
        %v5799 = vmul.f32 %v4407, %v5712
        %v5800 = vmul.f32 %v4409, %v5712
        %v5801 = vmul.f32 %v4411, %v5716
        %v5802 = vmul.f32 %v4413, %v5716
        %v5803 = vmul.f32 %v4415, %v5716
        %v5804 = vmul.f32 %v4417, %v5716
        %v5805 = vmul.f32 %v4419, %v5716
        %v5806 = vmul.f32 %v4421, %v5716
        %v5807 = vmul.f32 %v4423, %v5716
        %v5808 = vmul.f32 %v4425, %v5716
        %v5809 = vmul.f32 %v4427, %v5716
        %v5810 = vmul.f32 %v4429, %v5716
        %v5811 = vmul.f32 %v4431, %v5716
        %v5812 = vmul.f32 %v4433, %v5716
        %v5813 = vmul.f32 %v4435, %v5716
        %v5814 = vmul.f32 %v4437, %v5716
        %v5815 = vmul.f32 %v4439, %v5716
        %v5816 = vmul.f32 %v4441, %v5716
        %v5817 = vmul.f32 %v4443, %v5720
        %v5818 = vmul.f32 %v4445, %v5720
        %v5819 = vmul.f32 %v4447, %v5720
        %v5820 = vmul.f32 %v4449, %v5720
        %v5821 = vmul.f32 %v4451, %v5720
        %v5822 = vmul.f32 %v4453, %v5720
        %v5823 = vmul.f32 %v4455, %v5720
        %v5824 = vmul.f32 %v4457, %v5720
        %v5825 = vmul.f32 %v4459, %v5720
        %v5826 = vmul.f32 %v4461, %v5720
        %v5827 = vmul.f32 %v4463, %v5720
        %v5828 = vmul.f32 %v4465, %v5720
        %v5829 = vmul.f32 %v4467, %v5720
        %v5830 = vmul.f32 %v4469, %v5720
        %v5831 = vmul.f32 %v4471, %v5720
        %v5832 = vmul.f32 %v4473, %v5720
        %v5833 = vmul.f32 %v4475, %v5724
        %v5834 = vmul.f32 %v4477, %v5724
        %v5835 = vmul.f32 %v4479, %v5724
        %v5836 = vmul.f32 %v4481, %v5724
        %v5837 = vmul.f32 %v4483, %v5724
        %v5838 = vmul.f32 %v4485, %v5724
        %v5839 = vmul.f32 %v4487, %v5724
        %v5840 = vmul.f32 %v4489, %v5724
        %v5841 = vmul.f32 %v4491, %v5724
        %v5842 = vmul.f32 %v4493, %v5724
        %v5843 = vmul.f32 %v4495, %v5724
        %v5844 = vmul.f32 %v4497, %v5724
        %v5845 = vmul.f32 %v4499, %v5724
        %v5846 = vmul.f32 %v4501, %v5724
        %v5847 = vmul.f32 %v4503, %v5724
        %v5848 = vmul.f32 %v4505, %v5724
        %v5849 = vmul.f32 %v4507, %v5728
        %v5850 = vmul.f32 %v4509, %v5728
        %v5851 = vmul.f32 %v4511, %v5728
        %v5852 = vmul.f32 %v4513, %v5728
        %v5853 = vmul.f32 %v4515, %v5728
        %v5854 = vmul.f32 %v4517, %v5728
        %v5855 = vmul.f32 %v4519, %v5728
        %v5856 = vmul.f32 %v4521, %v5728
        %v5857 = vmul.f32 %v4523, %v5728
        %v5858 = vmul.f32 %v4525, %v5728
        %v5859 = vmul.f32 %v4527, %v5728
        %v5860 = vmul.f32 %v4529, %v5728
        %v5861 = vmul.f32 %v4531, %v5728
        %v5862 = vmul.f32 %v4533, %v5728
        %v5863 = vmul.f32 %v4535, %v5728
        %v5864 = vmul.f32 %v4537, %v5728
        %5993 = vset.pattern.permute.xlu0 0
        %5994 = vperm.xlu0 %5993, %v5737
        %v5995 = vpop.permute.xlu0 %5994
        %5996 = vset.pattern.permute.xlu0 0
        %5997 = vperm.xlu0 %5996, %v5738
        %v5998 = vpop.permute.xlu0 %5997
        %5999 = vset.pattern.permute.xlu0 0
        %6000 = vperm.xlu0 %5999, %v5739
        %v6001 = vpop.permute.xlu0 %6000
        %6002 = vset.pattern.permute.xlu0 0
        %6003 = vperm.xlu0 %6002, %v5740
        %v6004 = vpop.permute.xlu0 %6003
        %6005 = vset.pattern.permute.xlu0 0
        %6006 = vperm.xlu0 %6005, %v5741
        %v6007 = vpop.permute.xlu0 %6006
        %6008 = vset.pattern.permute.xlu0 0
        %6009 = vperm.xlu0 %6008, %v5742
        %v6010 = vpop.permute.xlu0 %6009
        %6011 = vset.pattern.permute.xlu0 0
        %6012 = vperm.xlu0 %6011, %v5743
        %v6013 = vpop.permute.xlu0 %6012
        %6014 = vset.pattern.permute.xlu0 0
        %6015 = vperm.xlu0 %6014, %v5744
        %v6016 = vpop.permute.xlu0 %6015
        %6017 = vset.pattern.permute.xlu0 0
        %6018 = vperm.xlu0 %6017, %v5745
        %v6019 = vpop.permute.xlu0 %6018
        %6020 = vset.pattern.permute.xlu0 0
        %6021 = vperm.xlu0 %6020, %v5746
        %v6022 = vpop.permute.xlu0 %6021
        %6023 = vset.pattern.permute.xlu0 0
        %6024 = vperm.xlu0 %6023, %v5747
        %v6025 = vpop.permute.xlu0 %6024
        %6026 = vset.pattern.permute.xlu0 0
        %6027 = vperm.xlu0 %6026, %v5748
        %v6028 = vpop.permute.xlu0 %6027
        %6029 = vset.pattern.permute.xlu0 0
        %6030 = vperm.xlu0 %6029, %v5749
        %v6031 = vpop.permute.xlu0 %6030
        %6032 = vset.pattern.permute.xlu0 0
        %6033 = vperm.xlu0 %6032, %v5750
        %v6034 = vpop.permute.xlu0 %6033
        %6035 = vset.pattern.permute.xlu0 0
        %6036 = vperm.xlu0 %6035, %v5751
        %v6037 = vpop.permute.xlu0 %6036
        %6038 = vset.pattern.permute.xlu0 0
        %6039 = vperm.xlu0 %6038, %v5752
        %v6040 = vpop.permute.xlu0 %6039
        %6041 = vset.pattern.permute.xlu0 0
        %6042 = vperm.xlu0 %6041, %v5753
        %v6043 = vpop.permute.xlu0 %6042
        %6044 = vset.pattern.permute.xlu0 0
        %6045 = vperm.xlu0 %6044, %v5754
        %v6046 = vpop.permute.xlu0 %6045
        %6047 = vset.pattern.permute.xlu0 0
        %6048 = vperm.xlu0 %6047, %v5755
        %v6049 = vpop.permute.xlu0 %6048
        %6050 = vset.pattern.permute.xlu0 0
        %6051 = vperm.xlu0 %6050, %v5756
        %v6052 = vpop.permute.xlu0 %6051
        %6053 = vset.pattern.permute.xlu0 0
        %6054 = vperm.xlu0 %6053, %v5757
        %v6055 = vpop.permute.xlu0 %6054
        %6056 = vset.pattern.permute.xlu0 0
        %6057 = vperm.xlu0 %6056, %v5758
        %v6058 = vpop.permute.xlu0 %6057
        %6059 = vset.pattern.permute.xlu0 0
        %6060 = vperm.xlu0 %6059, %v5759
        %v6061 = vpop.permute.xlu0 %6060
        %6062 = vset.pattern.permute.xlu0 0
        %6063 = vperm.xlu0 %6062, %v5760
        %v6064 = vpop.permute.xlu0 %6063
        %6065 = vset.pattern.permute.xlu0 0
        %6066 = vperm.xlu0 %6065, %v5761
        %v6067 = vpop.permute.xlu0 %6066
        %6068 = vset.pattern.permute.xlu0 0
        %6069 = vperm.xlu0 %6068, %v5762
        %v6070 = vpop.permute.xlu0 %6069
        %6071 = vset.pattern.permute.xlu0 0
        %6072 = vperm.xlu0 %6071, %v5763
        %v6073 = vpop.permute.xlu0 %6072
        %6074 = vset.pattern.permute.xlu0 0
        %6075 = vperm.xlu0 %6074, %v5764
        %v6076 = vpop.permute.xlu0 %6075
        %6077 = vset.pattern.permute.xlu0 0
        %6078 = vperm.xlu0 %6077, %v5765
        %v6079 = vpop.permute.xlu0 %6078
        %6080 = vset.pattern.permute.xlu0 0
        %6081 = vperm.xlu0 %6080, %v5766
        %v6082 = vpop.permute.xlu0 %6081
        %6083 = vset.pattern.permute.xlu0 0
        %6084 = vperm.xlu0 %6083, %v5767
        %v6085 = vpop.permute.xlu0 %6084
        %6086 = vset.pattern.permute.xlu0 0
        %6087 = vperm.xlu0 %6086, %v5768
        %v6088 = vpop.permute.xlu0 %6087
        %6089 = vset.pattern.permute.xlu0 0
        %6090 = vperm.xlu0 %6089, %v5769
        %v6091 = vpop.permute.xlu0 %6090
        %6092 = vset.pattern.permute.xlu0 0
        %6093 = vperm.xlu0 %6092, %v5770
        %v6094 = vpop.permute.xlu0 %6093
        %6095 = vset.pattern.permute.xlu0 0
        %6096 = vperm.xlu0 %6095, %v5771
        %v6097 = vpop.permute.xlu0 %6096
        %6098 = vset.pattern.permute.xlu0 0
        %6099 = vperm.xlu0 %6098, %v5772
        %v6100 = vpop.permute.xlu0 %6099
        %6101 = vset.pattern.permute.xlu0 0
        %6102 = vperm.xlu0 %6101, %v5773
        %v6103 = vpop.permute.xlu0 %6102
        %6104 = vset.pattern.permute.xlu0 0
        %6105 = vperm.xlu0 %6104, %v5774
        %v6106 = vpop.permute.xlu0 %6105
        %6107 = vset.pattern.permute.xlu0 0
        %6108 = vperm.xlu0 %6107, %v5775
        %v6109 = vpop.permute.xlu0 %6108
        %6110 = vset.pattern.permute.xlu0 0
        %6111 = vperm.xlu0 %6110, %v5776
        %v6112 = vpop.permute.xlu0 %6111
        %6113 = vset.pattern.permute.xlu0 0
        %6114 = vperm.xlu0 %6113, %v5777
        %v6115 = vpop.permute.xlu0 %6114
        %6116 = vset.pattern.permute.xlu0 0
        %6117 = vperm.xlu0 %6116, %v5778
        %v6118 = vpop.permute.xlu0 %6117
        %6119 = vset.pattern.permute.xlu0 0
        %6120 = vperm.xlu0 %6119, %v5779
        %v6121 = vpop.permute.xlu0 %6120
        %6122 = vset.pattern.permute.xlu0 0
        %6123 = vperm.xlu0 %6122, %v5780
        %v6124 = vpop.permute.xlu0 %6123
        %6125 = vset.pattern.permute.xlu0 0
        %6126 = vperm.xlu0 %6125, %v5781
        %v6127 = vpop.permute.xlu0 %6126
        %6128 = vset.pattern.permute.xlu0 0
        %6129 = vperm.xlu0 %6128, %v5782
        %v6130 = vpop.permute.xlu0 %6129
        %6131 = vset.pattern.permute.xlu0 0
        %6132 = vperm.xlu0 %6131, %v5783
        %v6133 = vpop.permute.xlu0 %6132
        %6134 = vset.pattern.permute.xlu0 0
        %6135 = vperm.xlu0 %6134, %v5784
        %v6136 = vpop.permute.xlu0 %6135
        %6137 = vset.pattern.permute.xlu0 0
        %6138 = vperm.xlu0 %6137, %v5785
        %v6139 = vpop.permute.xlu0 %6138
        %6140 = vset.pattern.permute.xlu0 0
        %6141 = vperm.xlu0 %6140, %v5786
        %v6142 = vpop.permute.xlu0 %6141
        %6143 = vset.pattern.permute.xlu0 0
        %6144 = vperm.xlu0 %6143, %v5787
        %v6145 = vpop.permute.xlu0 %6144
        %6146 = vset.pattern.permute.xlu0 0
        %6147 = vperm.xlu0 %6146, %v5788
        %v6148 = vpop.permute.xlu0 %6147
        %6149 = vset.pattern.permute.xlu0 0
        %6150 = vperm.xlu0 %6149, %v5789
        %v6151 = vpop.permute.xlu0 %6150
        %6152 = vset.pattern.permute.xlu0 0
        %6153 = vperm.xlu0 %6152, %v5790
        %v6154 = vpop.permute.xlu0 %6153
        %6155 = vset.pattern.permute.xlu0 0
        %6156 = vperm.xlu0 %6155, %v5791
        %v6157 = vpop.permute.xlu0 %6156
        %6158 = vset.pattern.permute.xlu0 0
        %6159 = vperm.xlu0 %6158, %v5792
        %v6160 = vpop.permute.xlu0 %6159
        %6161 = vset.pattern.permute.xlu0 0
        %6162 = vperm.xlu0 %6161, %v5793
        %v6163 = vpop.permute.xlu0 %6162
        %6164 = vset.pattern.permute.xlu0 0
        %6165 = vperm.xlu0 %6164, %v5794
        %v6166 = vpop.permute.xlu0 %6165
        %6167 = vset.pattern.permute.xlu0 0
        %6168 = vperm.xlu0 %6167, %v5795
        %v6169 = vpop.permute.xlu0 %6168
        %6170 = vset.pattern.permute.xlu0 0
        %6171 = vperm.xlu0 %6170, %v5796
        %v6172 = vpop.permute.xlu0 %6171
        %6173 = vset.pattern.permute.xlu0 0
        %6174 = vperm.xlu0 %6173, %v5797
        %v6175 = vpop.permute.xlu0 %6174
        %6176 = vset.pattern.permute.xlu0 0
        %6177 = vperm.xlu0 %6176, %v5798
        %v6178 = vpop.permute.xlu0 %6177
        %6179 = vset.pattern.permute.xlu0 0
        %6180 = vperm.xlu0 %6179, %v5799
        %v6181 = vpop.permute.xlu0 %6180
        %6182 = vset.pattern.permute.xlu0 0
        %6183 = vperm.xlu0 %6182, %v5800
        %v6184 = vpop.permute.xlu0 %6183
        %6185 = vset.pattern.permute.xlu0 0
        %6186 = vperm.xlu0 %6185, %v5801
        %v6187 = vpop.permute.xlu0 %6186
        %6188 = vset.pattern.permute.xlu0 0
        %6189 = vperm.xlu0 %6188, %v5802
        %v6190 = vpop.permute.xlu0 %6189
        %6191 = vset.pattern.permute.xlu0 0
        %6192 = vperm.xlu0 %6191, %v5803
        %v6193 = vpop.permute.xlu0 %6192
        %6194 = vset.pattern.permute.xlu0 0
        %6195 = vperm.xlu0 %6194, %v5804
        %v6196 = vpop.permute.xlu0 %6195
        %6197 = vset.pattern.permute.xlu0 0
        %6198 = vperm.xlu0 %6197, %v5805
        %v6199 = vpop.permute.xlu0 %6198
        %6200 = vset.pattern.permute.xlu0 0
        %6201 = vperm.xlu0 %6200, %v5806
        %v6202 = vpop.permute.xlu0 %6201
        %6203 = vset.pattern.permute.xlu0 0
        %6204 = vperm.xlu0 %6203, %v5807
        %v6205 = vpop.permute.xlu0 %6204
        %6206 = vset.pattern.permute.xlu0 0
        %6207 = vperm.xlu0 %6206, %v5808
        %v6208 = vpop.permute.xlu0 %6207
        %6209 = vset.pattern.permute.xlu0 0
        %6210 = vperm.xlu0 %6209, %v5809
        %v6211 = vpop.permute.xlu0 %6210
        %6212 = vset.pattern.permute.xlu0 0
        %6213 = vperm.xlu0 %6212, %v5810
        %v6214 = vpop.permute.xlu0 %6213
        %6215 = vset.pattern.permute.xlu0 0
        %6216 = vperm.xlu0 %6215, %v5811
        %v6217 = vpop.permute.xlu0 %6216
        %6218 = vset.pattern.permute.xlu0 0
        %6219 = vperm.xlu0 %6218, %v5812
        %v6220 = vpop.permute.xlu0 %6219
        %6221 = vset.pattern.permute.xlu0 0
        %6222 = vperm.xlu0 %6221, %v5813
        %v6223 = vpop.permute.xlu0 %6222
        %6224 = vset.pattern.permute.xlu0 0
        %6225 = vperm.xlu0 %6224, %v5814
        %v6226 = vpop.permute.xlu0 %6225
        %6227 = vset.pattern.permute.xlu0 0
        %6228 = vperm.xlu0 %6227, %v5815
        %v6229 = vpop.permute.xlu0 %6228
        %6230 = vset.pattern.permute.xlu0 0
        %6231 = vperm.xlu0 %6230, %v5816
        %v6232 = vpop.permute.xlu0 %6231
        %6233 = vset.pattern.permute.xlu0 0
        %6234 = vperm.xlu0 %6233, %v5817
        %v6235 = vpop.permute.xlu0 %6234
        %6236 = vset.pattern.permute.xlu0 0
        %6237 = vperm.xlu0 %6236, %v5818
        %v6238 = vpop.permute.xlu0 %6237
        %6239 = vset.pattern.permute.xlu0 0
        %6240 = vperm.xlu0 %6239, %v5819
        %v6241 = vpop.permute.xlu0 %6240
        %6242 = vset.pattern.permute.xlu0 0
        %6243 = vperm.xlu0 %6242, %v5820
        %v6244 = vpop.permute.xlu0 %6243
        %6245 = vset.pattern.permute.xlu0 0
        %6246 = vperm.xlu0 %6245, %v5821
        %v6247 = vpop.permute.xlu0 %6246
        %6248 = vset.pattern.permute.xlu0 0
        %6249 = vperm.xlu0 %6248, %v5822
        %v6250 = vpop.permute.xlu0 %6249
        %6251 = vset.pattern.permute.xlu0 0
        %6252 = vperm.xlu0 %6251, %v5823
        %v6253 = vpop.permute.xlu0 %6252
        %6254 = vset.pattern.permute.xlu0 0
        %6255 = vperm.xlu0 %6254, %v5824
        %v6256 = vpop.permute.xlu0 %6255
        %6257 = vset.pattern.permute.xlu0 0
        %6258 = vperm.xlu0 %6257, %v5825
        %v6259 = vpop.permute.xlu0 %6258
        %6260 = vset.pattern.permute.xlu0 0
        %6261 = vperm.xlu0 %6260, %v5826
        %v6262 = vpop.permute.xlu0 %6261
        %6263 = vset.pattern.permute.xlu0 0
        %6264 = vperm.xlu0 %6263, %v5827
        %v6265 = vpop.permute.xlu0 %6264
        %6266 = vset.pattern.permute.xlu0 0
        %6267 = vperm.xlu0 %6266, %v5828
        %v6268 = vpop.permute.xlu0 %6267
        %6269 = vset.pattern.permute.xlu0 0
        %6270 = vperm.xlu0 %6269, %v5829
        %v6271 = vpop.permute.xlu0 %6270
        %6272 = vset.pattern.permute.xlu0 0
        %6273 = vperm.xlu0 %6272, %v5830
        %v6274 = vpop.permute.xlu0 %6273
        %6275 = vset.pattern.permute.xlu0 0
        %6276 = vperm.xlu0 %6275, %v5831
        %v6277 = vpop.permute.xlu0 %6276
        %6278 = vset.pattern.permute.xlu0 0
        %6279 = vperm.xlu0 %6278, %v5832
        %v6280 = vpop.permute.xlu0 %6279
        %6281 = vset.pattern.permute.xlu0 0
        %6282 = vperm.xlu0 %6281, %v5833
        %v6283 = vpop.permute.xlu0 %6282
        %6284 = vset.pattern.permute.xlu0 0
        %6285 = vperm.xlu0 %6284, %v5834
        %v6286 = vpop.permute.xlu0 %6285
        %6287 = vset.pattern.permute.xlu0 0
        %6288 = vperm.xlu0 %6287, %v5835
        %v6289 = vpop.permute.xlu0 %6288
        %6290 = vset.pattern.permute.xlu0 0
        %6291 = vperm.xlu0 %6290, %v5836
        %v6292 = vpop.permute.xlu0 %6291
        %6293 = vset.pattern.permute.xlu0 0
        %6294 = vperm.xlu0 %6293, %v5837
        %v6295 = vpop.permute.xlu0 %6294
        %6296 = vset.pattern.permute.xlu0 0
        %6297 = vperm.xlu0 %6296, %v5838
        %v6298 = vpop.permute.xlu0 %6297
        %6299 = vset.pattern.permute.xlu0 0
        %6300 = vperm.xlu0 %6299, %v5839
        %v6301 = vpop.permute.xlu0 %6300
        %6302 = vset.pattern.permute.xlu0 0
        %6303 = vperm.xlu0 %6302, %v5840
        %v6304 = vpop.permute.xlu0 %6303
        %6305 = vset.pattern.permute.xlu0 0
        %6306 = vperm.xlu0 %6305, %v5841
        %v6307 = vpop.permute.xlu0 %6306
        %6308 = vset.pattern.permute.xlu0 0
        %6309 = vperm.xlu0 %6308, %v5842
        %v6310 = vpop.permute.xlu0 %6309
        %6311 = vset.pattern.permute.xlu0 0
        %6312 = vperm.xlu0 %6311, %v5843
        %v6313 = vpop.permute.xlu0 %6312
        %6314 = vset.pattern.permute.xlu0 0
        %6315 = vperm.xlu0 %6314, %v5844
        %v6316 = vpop.permute.xlu0 %6315
        %6317 = vset.pattern.permute.xlu0 0
        %6318 = vperm.xlu0 %6317, %v5845
        %v6319 = vpop.permute.xlu0 %6318
        %6320 = vset.pattern.permute.xlu0 0
        %6321 = vperm.xlu0 %6320, %v5846
        %v6322 = vpop.permute.xlu0 %6321
        %6323 = vset.pattern.permute.xlu0 0
        %6324 = vperm.xlu0 %6323, %v5847
        %v6325 = vpop.permute.xlu0 %6324
        %6326 = vset.pattern.permute.xlu0 0
        %6327 = vperm.xlu0 %6326, %v5848
        %v6328 = vpop.permute.xlu0 %6327
        %6329 = vset.pattern.permute.xlu0 0
        %6330 = vperm.xlu0 %6329, %v5849
        %v6331 = vpop.permute.xlu0 %6330
        %6332 = vset.pattern.permute.xlu0 0
        %6333 = vperm.xlu0 %6332, %v5850
        %v6334 = vpop.permute.xlu0 %6333
        %6335 = vset.pattern.permute.xlu0 0
        %6336 = vperm.xlu0 %6335, %v5851
        %v6337 = vpop.permute.xlu0 %6336
        %6338 = vset.pattern.permute.xlu0 0
        %6339 = vperm.xlu0 %6338, %v5852
        %v6340 = vpop.permute.xlu0 %6339
        %6341 = vset.pattern.permute.xlu0 0
        %6342 = vperm.xlu0 %6341, %v5853
        %v6343 = vpop.permute.xlu0 %6342
        %6344 = vset.pattern.permute.xlu0 0
        %6345 = vperm.xlu0 %6344, %v5854
        %v6346 = vpop.permute.xlu0 %6345
        %6347 = vset.pattern.permute.xlu0 0
        %6348 = vperm.xlu0 %6347, %v5855
        %v6349 = vpop.permute.xlu0 %6348
        %6350 = vset.pattern.permute.xlu0 0
        %6351 = vperm.xlu0 %6350, %v5856
        %v6352 = vpop.permute.xlu0 %6351
        %6353 = vset.pattern.permute.xlu0 0
        %6354 = vperm.xlu0 %6353, %v5857
        %v6355 = vpop.permute.xlu0 %6354
        %6356 = vset.pattern.permute.xlu0 0
        %6357 = vperm.xlu0 %6356, %v5858
        %v6358 = vpop.permute.xlu0 %6357
        %6359 = vset.pattern.permute.xlu0 0
        %6360 = vperm.xlu0 %6359, %v5859
        %v6361 = vpop.permute.xlu0 %6360
        %6362 = vset.pattern.permute.xlu0 0
        %6363 = vperm.xlu0 %6362, %v5860
        %v6364 = vpop.permute.xlu0 %6363
        %6365 = vset.pattern.permute.xlu0 0
        %6366 = vperm.xlu0 %6365, %v5861
        %v6367 = vpop.permute.xlu0 %6366
        %6368 = vset.pattern.permute.xlu0 0
        %6369 = vperm.xlu0 %6368, %v5862
        %v6370 = vpop.permute.xlu0 %6369
        %6371 = vset.pattern.permute.xlu0 0
        %6372 = vperm.xlu0 %6371, %v5863
        %v6373 = vpop.permute.xlu0 %6372
        %6374 = vset.pattern.permute.xlu0 0
        %6375 = vperm.xlu0 %6374, %v5864
        %v6376 = vpop.permute.xlu0 %6375
        %v6377 = vlaneseq
        %v6378 = vshrl.u32 %v6377, 7
        %v6379 = vsub.s32 %v3433, %v6378
        %v6380 = vrot.slane %v5995, %v6379
        %v6381 = vlaneseq
        %v6382 = vshrl.u32 %v6381, 7
        %v6383 = vsub.s32 %v3438, %v6382
        %v6384 = vrot.slane %v5998, %v6383
        %v6385 = vsel %vm3443, %v6384, %v6380
        %v6386 = vlaneseq
        %v6387 = vshrl.u32 %v6386, 7
        %v6388 = vsub.s32 %v3445, %v6387
        %v6389 = vrot.slane %v6001, %v6388
        %v6390 = vsel %vm3450, %v6389, %v6385
        %v6391 = vlaneseq
        %v6392 = vshrl.u32 %v6391, 7
        %v6393 = vsub.s32 %v3452, %v6392
        %v6394 = vrot.slane %v6004, %v6393
        %v6395 = vsel %vm3457, %v6394, %v6390
        %v6396 = vlaneseq
        %v6397 = vshrl.u32 %v6396, 7
        %v6398 = vsub.s32 %v3459, %v6397
        %v6399 = vrot.slane %v6007, %v6398
        %v6400 = vsel %vm3464, %v6399, %v6395
        %v6401 = vlaneseq
        %v6402 = vshrl.u32 %v6401, 7
        %v6403 = vsub.s32 %v3466, %v6402
        %v6404 = vrot.slane %v6010, %v6403
        %v6405 = vsel %vm3471, %v6404, %v6400
        %v6406 = vlaneseq
        %v6407 = vshrl.u32 %v6406, 7
        %v6408 = vsub.s32 %v3473, %v6407
        %v6409 = vrot.slane %v6013, %v6408
        %v6410 = vsel %vm3478, %v6409, %v6405
        %v6411 = vlaneseq
        %v6412 = vshrl.u32 %v6411, 7
        %v6413 = vsub.s32 %v3480, %v6412
        %v6414 = vrot.slane %v6016, %v6413
        %v6415 = vsel %vm3485, %v6414, %v6410
        %v6416 = vlaneseq
        %v6417 = vshrl.u32 %v6416, 7
        %v6418 = vsub.s32 %v3487, %v6417
        %v6419 = vrot.slane %v6019, %v6418
        %v6420 = vsel %vm3492, %v6419, %v6415
        %v6421 = vlaneseq
        %v6422 = vshrl.u32 %v6421, 7
        %v6423 = vsub.s32 %v3494, %v6422
        %v6424 = vrot.slane %v6022, %v6423
        %v6425 = vsel %vm3499, %v6424, %v6420
        %v6426 = vlaneseq
        %v6427 = vshrl.u32 %v6426, 7
        %v6428 = vsub.s32 %v3501, %v6427
        %v6429 = vrot.slane %v6025, %v6428
        %v6430 = vsel %vm3506, %v6429, %v6425
        %v6431 = vlaneseq
        %v6432 = vshrl.u32 %v6431, 7
        %v6433 = vsub.s32 %v3508, %v6432
        %v6434 = vrot.slane %v6028, %v6433
        %v6435 = vsel %vm3513, %v6434, %v6430
        %v6436 = vlaneseq
        %v6437 = vshrl.u32 %v6436, 7
        %v6438 = vsub.s32 %v3515, %v6437
        %v6439 = vrot.slane %v6031, %v6438
        %v6440 = vsel %vm3520, %v6439, %v6435
        %v6441 = vlaneseq
        %v6442 = vshrl.u32 %v6441, 7
        %v6443 = vsub.s32 %v3522, %v6442
        %v6444 = vrot.slane %v6034, %v6443
        %v6445 = vsel %vm3527, %v6444, %v6440
        %v6446 = vlaneseq
        %v6447 = vshrl.u32 %v6446, 7
        %v6448 = vsub.s32 %v3529, %v6447
        %v6449 = vrot.slane %v6037, %v6448
        %v6450 = vsel %vm3534, %v6449, %v6445
        %v6451 = vlaneseq
        %v6452 = vshrl.u32 %v6451, 7
        %v6453 = vsub.s32 %v3536, %v6452
        %v6454 = vrot.slane %v6040, %v6453
        %v6455 = vsel %vm3541, %v6454, %v6450
        %v6456 = vlaneseq
        %v6457 = vshrl.u32 %v6456, 7
        %v6458 = vsub.s32 %v3433, %v6457
        %v6459 = vrot.slane %v6043, %v6458
        %v6460 = vlaneseq
        %v6461 = vshrl.u32 %v6460, 7
        %v6462 = vsub.s32 %v3438, %v6461
        %v6463 = vrot.slane %v6046, %v6462
        %v6464 = vsel %vm3443, %v6463, %v6459
        %v6465 = vlaneseq
        %v6466 = vshrl.u32 %v6465, 7
        %v6467 = vsub.s32 %v3445, %v6466
        %v6468 = vrot.slane %v6049, %v6467
        %v6469 = vsel %vm3450, %v6468, %v6464
        %v6470 = vlaneseq
        %v6471 = vshrl.u32 %v6470, 7
        %v6472 = vsub.s32 %v3452, %v6471
        %v6473 = vrot.slane %v6052, %v6472
        %v6474 = vsel %vm3457, %v6473, %v6469
        %v6475 = vlaneseq
        %v6476 = vshrl.u32 %v6475, 7
        %v6477 = vsub.s32 %v3459, %v6476
        %v6478 = vrot.slane %v6055, %v6477
        %v6479 = vsel %vm3464, %v6478, %v6474
        %v6480 = vlaneseq
        %v6481 = vshrl.u32 %v6480, 7
        %v6482 = vsub.s32 %v3466, %v6481
        %v6483 = vrot.slane %v6058, %v6482
        %v6484 = vsel %vm3471, %v6483, %v6479
        %v6485 = vlaneseq
        %v6486 = vshrl.u32 %v6485, 7
        %v6487 = vsub.s32 %v3473, %v6486
        %v6488 = vrot.slane %v6061, %v6487
        %v6489 = vsel %vm3478, %v6488, %v6484
        %v6490 = vlaneseq
        %v6491 = vshrl.u32 %v6490, 7
        %v6492 = vsub.s32 %v3480, %v6491
        %v6493 = vrot.slane %v6064, %v6492
        %v6494 = vsel %vm3485, %v6493, %v6489
        %v6495 = vlaneseq
        %v6496 = vshrl.u32 %v6495, 7
        %v6497 = vsub.s32 %v3487, %v6496
        %v6498 = vrot.slane %v6067, %v6497
        %v6499 = vsel %vm3492, %v6498, %v6494
        %v6500 = vlaneseq
        %v6501 = vshrl.u32 %v6500, 7
        %v6502 = vsub.s32 %v3494, %v6501
        %v6503 = vrot.slane %v6070, %v6502
        %v6504 = vsel %vm3499, %v6503, %v6499
        %v6505 = vlaneseq
        %v6506 = vshrl.u32 %v6505, 7
        %v6507 = vsub.s32 %v3501, %v6506
        %v6508 = vrot.slane %v6073, %v6507
        %v6509 = vsel %vm3506, %v6508, %v6504
        %v6510 = vlaneseq
        %v6511 = vshrl.u32 %v6510, 7
        %v6512 = vsub.s32 %v3508, %v6511
        %v6513 = vrot.slane %v6076, %v6512
        %v6514 = vsel %vm3513, %v6513, %v6509
        %v6515 = vlaneseq
        %v6516 = vshrl.u32 %v6515, 7
        %v6517 = vsub.s32 %v3515, %v6516
        %v6518 = vrot.slane %v6079, %v6517
        %v6519 = vsel %vm3520, %v6518, %v6514
        %v6520 = vlaneseq
        %v6521 = vshrl.u32 %v6520, 7
        %v6522 = vsub.s32 %v3522, %v6521
        %v6523 = vrot.slane %v6082, %v6522
        %v6524 = vsel %vm3527, %v6523, %v6519
        %v6525 = vlaneseq
        %v6526 = vshrl.u32 %v6525, 7
        %v6527 = vsub.s32 %v3529, %v6526
        %v6528 = vrot.slane %v6085, %v6527
        %v6529 = vsel %vm3534, %v6528, %v6524
        %v6530 = vlaneseq
        %v6531 = vshrl.u32 %v6530, 7
        %v6532 = vsub.s32 %v3536, %v6531
        %v6533 = vrot.slane %v6088, %v6532
        %v6534 = vsel %vm3541, %v6533, %v6529
        %v6535 = vlaneseq
        %v6536 = vshrl.u32 %v6535, 7
        %v6537 = vsub.s32 %v3433, %v6536
        %v6538 = vrot.slane %v6091, %v6537
        %v6539 = vlaneseq
        %v6540 = vshrl.u32 %v6539, 7
        %v6541 = vsub.s32 %v3438, %v6540
        %v6542 = vrot.slane %v6094, %v6541
        %v6543 = vsel %vm3443, %v6542, %v6538
        %v6544 = vlaneseq
        %v6545 = vshrl.u32 %v6544, 7
        %v6546 = vsub.s32 %v3445, %v6545
        %v6547 = vrot.slane %v6097, %v6546
        %v6548 = vsel %vm3450, %v6547, %v6543
        %v6549 = vlaneseq
        %v6550 = vshrl.u32 %v6549, 7
        %v6551 = vsub.s32 %v3452, %v6550
        %v6552 = vrot.slane %v6100, %v6551
        %v6553 = vsel %vm3457, %v6552, %v6548
        %v6554 = vlaneseq
        %v6555 = vshrl.u32 %v6554, 7
        %v6556 = vsub.s32 %v3459, %v6555
        %v6557 = vrot.slane %v6103, %v6556
        %v6558 = vsel %vm3464, %v6557, %v6553
        %v6559 = vlaneseq
        %v6560 = vshrl.u32 %v6559, 7
        %v6561 = vsub.s32 %v3466, %v6560
        %v6562 = vrot.slane %v6106, %v6561
        %v6563 = vsel %vm3471, %v6562, %v6558
        %v6564 = vlaneseq
        %v6565 = vshrl.u32 %v6564, 7
        %v6566 = vsub.s32 %v3473, %v6565
        %v6567 = vrot.slane %v6109, %v6566
        %v6568 = vsel %vm3478, %v6567, %v6563
        %v6569 = vlaneseq
        %v6570 = vshrl.u32 %v6569, 7
        %v6571 = vsub.s32 %v3480, %v6570
        %v6572 = vrot.slane %v6112, %v6571
        %v6573 = vsel %vm3485, %v6572, %v6568
        %v6574 = vlaneseq
        %v6575 = vshrl.u32 %v6574, 7
        %v6576 = vsub.s32 %v3487, %v6575
        %v6577 = vrot.slane %v6115, %v6576
        %v6578 = vsel %vm3492, %v6577, %v6573
        %v6579 = vlaneseq
        %v6580 = vshrl.u32 %v6579, 7
        %v6581 = vsub.s32 %v3494, %v6580
        %v6582 = vrot.slane %v6118, %v6581
        %v6583 = vsel %vm3499, %v6582, %v6578
        %v6584 = vlaneseq
        %v6585 = vshrl.u32 %v6584, 7
        %v6586 = vsub.s32 %v3501, %v6585
        %v6587 = vrot.slane %v6121, %v6586
        %v6588 = vsel %vm3506, %v6587, %v6583
        %v6589 = vlaneseq
        %v6590 = vshrl.u32 %v6589, 7
        %v6591 = vsub.s32 %v3508, %v6590
        %v6592 = vrot.slane %v6124, %v6591
        %v6593 = vsel %vm3513, %v6592, %v6588
        %v6594 = vlaneseq
        %v6595 = vshrl.u32 %v6594, 7
        %v6596 = vsub.s32 %v3515, %v6595
        %v6597 = vrot.slane %v6127, %v6596
        %v6598 = vsel %vm3520, %v6597, %v6593
        %v6599 = vlaneseq
        %v6600 = vshrl.u32 %v6599, 7
        %v6601 = vsub.s32 %v3522, %v6600
        %v6602 = vrot.slane %v6130, %v6601
        %v6603 = vsel %vm3527, %v6602, %v6598
        %v6604 = vlaneseq
        %v6605 = vshrl.u32 %v6604, 7
        %v6606 = vsub.s32 %v3529, %v6605
        %v6607 = vrot.slane %v6133, %v6606
        %v6608 = vsel %vm3534, %v6607, %v6603
        %v6609 = vlaneseq
        %v6610 = vshrl.u32 %v6609, 7
        %v6611 = vsub.s32 %v3536, %v6610
        %v6612 = vrot.slane %v6136, %v6611
        %v6613 = vsel %vm3541, %v6612, %v6608
        %v6614 = vlaneseq
        %v6615 = vshrl.u32 %v6614, 7
        %v6616 = vsub.s32 %v3433, %v6615
        %v6617 = vrot.slane %v6139, %v6616
        %v6618 = vlaneseq
        %v6619 = vshrl.u32 %v6618, 7
        %v6620 = vsub.s32 %v3438, %v6619
        %v6621 = vrot.slane %v6142, %v6620
        %v6622 = vsel %vm3443, %v6621, %v6617
        %v6623 = vlaneseq
        %v6624 = vshrl.u32 %v6623, 7
        %v6625 = vsub.s32 %v3445, %v6624
        %v6626 = vrot.slane %v6145, %v6625
        %v6627 = vsel %vm3450, %v6626, %v6622
        %v6628 = vlaneseq
        %v6629 = vshrl.u32 %v6628, 7
        %v6630 = vsub.s32 %v3452, %v6629
        %v6631 = vrot.slane %v6148, %v6630
        %v6632 = vsel %vm3457, %v6631, %v6627
        %v6633 = vlaneseq
        %v6634 = vshrl.u32 %v6633, 7
        %v6635 = vsub.s32 %v3459, %v6634
        %v6636 = vrot.slane %v6151, %v6635
        %v6637 = vsel %vm3464, %v6636, %v6632
        %v6638 = vlaneseq
        %v6639 = vshrl.u32 %v6638, 7
        %v6640 = vsub.s32 %v3466, %v6639
        %v6641 = vrot.slane %v6154, %v6640
        %v6642 = vsel %vm3471, %v6641, %v6637
        %v6643 = vlaneseq
        %v6644 = vshrl.u32 %v6643, 7
        %v6645 = vsub.s32 %v3473, %v6644
        %v6646 = vrot.slane %v6157, %v6645
        %v6647 = vsel %vm3478, %v6646, %v6642
        %v6648 = vlaneseq
        %v6649 = vshrl.u32 %v6648, 7
        %v6650 = vsub.s32 %v3480, %v6649
        %v6651 = vrot.slane %v6160, %v6650
        %v6652 = vsel %vm3485, %v6651, %v6647
        %v6653 = vlaneseq
        %v6654 = vshrl.u32 %v6653, 7
        %v6655 = vsub.s32 %v3487, %v6654
        %v6656 = vrot.slane %v6163, %v6655
        %v6657 = vsel %vm3492, %v6656, %v6652
        %v6658 = vlaneseq
        %v6659 = vshrl.u32 %v6658, 7
        %v6660 = vsub.s32 %v3494, %v6659
        %v6661 = vrot.slane %v6166, %v6660
        %v6662 = vsel %vm3499, %v6661, %v6657
        %v6663 = vlaneseq
        %v6664 = vshrl.u32 %v6663, 7
        %v6665 = vsub.s32 %v3501, %v6664
        %v6666 = vrot.slane %v6169, %v6665
        %v6667 = vsel %vm3506, %v6666, %v6662
        %v6668 = vlaneseq
        %v6669 = vshrl.u32 %v6668, 7
        %v6670 = vsub.s32 %v3508, %v6669
        %v6671 = vrot.slane %v6172, %v6670
        %v6672 = vsel %vm3513, %v6671, %v6667
        %v6673 = vlaneseq
        %v6674 = vshrl.u32 %v6673, 7
        %v6675 = vsub.s32 %v3515, %v6674
        %v6676 = vrot.slane %v6175, %v6675
        %v6677 = vsel %vm3520, %v6676, %v6672
        %v6678 = vlaneseq
        %v6679 = vshrl.u32 %v6678, 7
        %v6680 = vsub.s32 %v3522, %v6679
        %v6681 = vrot.slane %v6178, %v6680
        %v6682 = vsel %vm3527, %v6681, %v6677
        %v6683 = vlaneseq
        %v6684 = vshrl.u32 %v6683, 7
        %v6685 = vsub.s32 %v3529, %v6684
        %v6686 = vrot.slane %v6181, %v6685
        %v6687 = vsel %vm3534, %v6686, %v6682
        %v6688 = vlaneseq
        %v6689 = vshrl.u32 %v6688, 7
        %v6690 = vsub.s32 %v3536, %v6689
        %v6691 = vrot.slane %v6184, %v6690
        %v6692 = vsel %vm3541, %v6691, %v6687
        %v6693 = vlaneseq
        %v6694 = vshrl.u32 %v6693, 7
        %v6695 = vsub.s32 %v3433, %v6694
        %v6696 = vrot.slane %v6187, %v6695
        %v6697 = vlaneseq
        %v6698 = vshrl.u32 %v6697, 7
        %v6699 = vsub.s32 %v3438, %v6698
        %v6700 = vrot.slane %v6190, %v6699
        %v6701 = vsel %vm3443, %v6700, %v6696
        %v6702 = vlaneseq
        %v6703 = vshrl.u32 %v6702, 7
        %v6704 = vsub.s32 %v3445, %v6703
        %v6705 = vrot.slane %v6193, %v6704
        %v6706 = vsel %vm3450, %v6705, %v6701
        %v6707 = vlaneseq
        %v6708 = vshrl.u32 %v6707, 7
        %v6709 = vsub.s32 %v3452, %v6708
        %v6710 = vrot.slane %v6196, %v6709
        %v6711 = vsel %vm3457, %v6710, %v6706
        %v6712 = vlaneseq
        %v6713 = vshrl.u32 %v6712, 7
        %v6714 = vsub.s32 %v3459, %v6713
        %v6715 = vrot.slane %v6199, %v6714
        %v6716 = vsel %vm3464, %v6715, %v6711
        %v6717 = vlaneseq
        %v6718 = vshrl.u32 %v6717, 7
        %v6719 = vsub.s32 %v3466, %v6718
        %v6720 = vrot.slane %v6202, %v6719
        %v6721 = vsel %vm3471, %v6720, %v6716
        %v6722 = vlaneseq
        %v6723 = vshrl.u32 %v6722, 7
        %v6724 = vsub.s32 %v3473, %v6723
        %v6725 = vrot.slane %v6205, %v6724
        %v6726 = vsel %vm3478, %v6725, %v6721
        %v6727 = vlaneseq
        %v6728 = vshrl.u32 %v6727, 7
        %v6729 = vsub.s32 %v3480, %v6728
        %v6730 = vrot.slane %v6208, %v6729
        %v6731 = vsel %vm3485, %v6730, %v6726
        %v6732 = vlaneseq
        %v6733 = vshrl.u32 %v6732, 7
        %v6734 = vsub.s32 %v3487, %v6733
        %v6735 = vrot.slane %v6211, %v6734
        %v6736 = vsel %vm3492, %v6735, %v6731
        %v6737 = vlaneseq
        %v6738 = vshrl.u32 %v6737, 7
        %v6739 = vsub.s32 %v3494, %v6738
        %v6740 = vrot.slane %v6214, %v6739
        %v6741 = vsel %vm3499, %v6740, %v6736
        %v6742 = vlaneseq
        %v6743 = vshrl.u32 %v6742, 7
        %v6744 = vsub.s32 %v3501, %v6743
        %v6745 = vrot.slane %v6217, %v6744
        %v6746 = vsel %vm3506, %v6745, %v6741
        %v6747 = vlaneseq
        %v6748 = vshrl.u32 %v6747, 7
        %v6749 = vsub.s32 %v3508, %v6748
        %v6750 = vrot.slane %v6220, %v6749
        %v6751 = vsel %vm3513, %v6750, %v6746
        %v6752 = vlaneseq
        %v6753 = vshrl.u32 %v6752, 7
        %v6754 = vsub.s32 %v3515, %v6753
        %v6755 = vrot.slane %v6223, %v6754
        %v6756 = vsel %vm3520, %v6755, %v6751
        %v6757 = vlaneseq
        %v6758 = vshrl.u32 %v6757, 7
        %v6759 = vsub.s32 %v3522, %v6758
        %v6760 = vrot.slane %v6226, %v6759
        %v6761 = vsel %vm3527, %v6760, %v6756
        %v6762 = vlaneseq
        %v6763 = vshrl.u32 %v6762, 7
        %v6764 = vsub.s32 %v3529, %v6763
        %v6765 = vrot.slane %v6229, %v6764
        %v6766 = vsel %vm3534, %v6765, %v6761
        %v6767 = vlaneseq
        %v6768 = vshrl.u32 %v6767, 7
        %v6769 = vsub.s32 %v3536, %v6768
        %v6770 = vrot.slane %v6232, %v6769
        %v6771 = vsel %vm3541, %v6770, %v6766
        %v6772 = vlaneseq
        %v6773 = vshrl.u32 %v6772, 7
        %v6774 = vsub.s32 %v3433, %v6773
        %v6775 = vrot.slane %v6235, %v6774
        %v6776 = vlaneseq
        %v6777 = vshrl.u32 %v6776, 7
        %v6778 = vsub.s32 %v3438, %v6777
        %v6779 = vrot.slane %v6238, %v6778
        %v6780 = vsel %vm3443, %v6779, %v6775
        %v6781 = vlaneseq
        %v6782 = vshrl.u32 %v6781, 7
        %v6783 = vsub.s32 %v3445, %v6782
        %v6784 = vrot.slane %v6241, %v6783
        %v6785 = vsel %vm3450, %v6784, %v6780
        %v6786 = vlaneseq
        %v6787 = vshrl.u32 %v6786, 7
        %v6788 = vsub.s32 %v3452, %v6787
        %v6789 = vrot.slane %v6244, %v6788
        %v6790 = vsel %vm3457, %v6789, %v6785
        %v6791 = vlaneseq
        %v6792 = vshrl.u32 %v6791, 7
        %v6793 = vsub.s32 %v3459, %v6792
        %v6794 = vrot.slane %v6247, %v6793
        %v6795 = vsel %vm3464, %v6794, %v6790
        %v6796 = vlaneseq
        %v6797 = vshrl.u32 %v6796, 7
        %v6798 = vsub.s32 %v3466, %v6797
        %v6799 = vrot.slane %v6250, %v6798
        %v6800 = vsel %vm3471, %v6799, %v6795
        %v6801 = vlaneseq
        %v6802 = vshrl.u32 %v6801, 7
        %v6803 = vsub.s32 %v3473, %v6802
        %v6804 = vrot.slane %v6253, %v6803
        %v6805 = vsel %vm3478, %v6804, %v6800
        %v6806 = vlaneseq
        %v6807 = vshrl.u32 %v6806, 7
        %v6808 = vsub.s32 %v3480, %v6807
        %v6809 = vrot.slane %v6256, %v6808
        %v6810 = vsel %vm3485, %v6809, %v6805
        %v6811 = vlaneseq
        %v6812 = vshrl.u32 %v6811, 7
        %v6813 = vsub.s32 %v3487, %v6812
        %v6814 = vrot.slane %v6259, %v6813
        %v6815 = vsel %vm3492, %v6814, %v6810
        %v6816 = vlaneseq
        %v6817 = vshrl.u32 %v6816, 7
        %v6818 = vsub.s32 %v3494, %v6817
        %v6819 = vrot.slane %v6262, %v6818
        %v6820 = vsel %vm3499, %v6819, %v6815
        %v6821 = vlaneseq
        %v6822 = vshrl.u32 %v6821, 7
        %v6823 = vsub.s32 %v3501, %v6822
        %v6824 = vrot.slane %v6265, %v6823
        %v6825 = vsel %vm3506, %v6824, %v6820
        %v6826 = vlaneseq
        %v6827 = vshrl.u32 %v6826, 7
        %v6828 = vsub.s32 %v3508, %v6827
        %v6829 = vrot.slane %v6268, %v6828
        %v6830 = vsel %vm3513, %v6829, %v6825
        %v6831 = vlaneseq
        %v6832 = vshrl.u32 %v6831, 7
        %v6833 = vsub.s32 %v3515, %v6832
        %v6834 = vrot.slane %v6271, %v6833
        %v6835 = vsel %vm3520, %v6834, %v6830
        %v6836 = vlaneseq
        %v6837 = vshrl.u32 %v6836, 7
        %v6838 = vsub.s32 %v3522, %v6837
        %v6839 = vrot.slane %v6274, %v6838
        %v6840 = vsel %vm3527, %v6839, %v6835
        %v6841 = vlaneseq
        %v6842 = vshrl.u32 %v6841, 7
        %v6843 = vsub.s32 %v3529, %v6842
        %v6844 = vrot.slane %v6277, %v6843
        %v6845 = vsel %vm3534, %v6844, %v6840
        %v6846 = vlaneseq
        %v6847 = vshrl.u32 %v6846, 7
        %v6848 = vsub.s32 %v3536, %v6847
        %v6849 = vrot.slane %v6280, %v6848
        %v6850 = vsel %vm3541, %v6849, %v6845
        %v6851 = vlaneseq
        %v6852 = vshrl.u32 %v6851, 7
        %v6853 = vsub.s32 %v3433, %v6852
        %v6854 = vrot.slane %v6283, %v6853
        %v6855 = vlaneseq
        %v6856 = vshrl.u32 %v6855, 7
        %v6857 = vsub.s32 %v3438, %v6856
        %v6858 = vrot.slane %v6286, %v6857
        %v6859 = vsel %vm3443, %v6858, %v6854
        %v6860 = vlaneseq
        %v6861 = vshrl.u32 %v6860, 7
        %v6862 = vsub.s32 %v3445, %v6861
        %v6863 = vrot.slane %v6289, %v6862
        %v6864 = vsel %vm3450, %v6863, %v6859
        %v6865 = vlaneseq
        %v6866 = vshrl.u32 %v6865, 7
        %v6867 = vsub.s32 %v3452, %v6866
        %v6868 = vrot.slane %v6292, %v6867
        %v6869 = vsel %vm3457, %v6868, %v6864
        %v6870 = vlaneseq
        %v6871 = vshrl.u32 %v6870, 7
        %v6872 = vsub.s32 %v3459, %v6871
        %v6873 = vrot.slane %v6295, %v6872
        %v6874 = vsel %vm3464, %v6873, %v6869
        %v6875 = vlaneseq
        %v6876 = vshrl.u32 %v6875, 7
        %v6877 = vsub.s32 %v3466, %v6876
        %v6878 = vrot.slane %v6298, %v6877
        %v6879 = vsel %vm3471, %v6878, %v6874
        %v6880 = vlaneseq
        %v6881 = vshrl.u32 %v6880, 7
        %v6882 = vsub.s32 %v3473, %v6881
        %v6883 = vrot.slane %v6301, %v6882
        %v6884 = vsel %vm3478, %v6883, %v6879
        %v6885 = vlaneseq
        %v6886 = vshrl.u32 %v6885, 7
        %v6887 = vsub.s32 %v3480, %v6886
        %v6888 = vrot.slane %v6304, %v6887
        %v6889 = vsel %vm3485, %v6888, %v6884
        %v6890 = vlaneseq
        %v6891 = vshrl.u32 %v6890, 7
        %v6892 = vsub.s32 %v3487, %v6891
        %v6893 = vrot.slane %v6307, %v6892
        %v6894 = vsel %vm3492, %v6893, %v6889
        %v6895 = vlaneseq
        %v6896 = vshrl.u32 %v6895, 7
        %v6897 = vsub.s32 %v3494, %v6896
        %v6898 = vrot.slane %v6310, %v6897
        %v6899 = vsel %vm3499, %v6898, %v6894
        %v6900 = vlaneseq
        %v6901 = vshrl.u32 %v6900, 7
        %v6902 = vsub.s32 %v3501, %v6901
        %v6903 = vrot.slane %v6313, %v6902
        %v6904 = vsel %vm3506, %v6903, %v6899
        %v6905 = vlaneseq
        %v6906 = vshrl.u32 %v6905, 7
        %v6907 = vsub.s32 %v3508, %v6906
        %v6908 = vrot.slane %v6316, %v6907
        %v6909 = vsel %vm3513, %v6908, %v6904
        %v6910 = vlaneseq
        %v6911 = vshrl.u32 %v6910, 7
        %v6912 = vsub.s32 %v3515, %v6911
        %v6913 = vrot.slane %v6319, %v6912
        %v6914 = vsel %vm3520, %v6913, %v6909
        %v6915 = vlaneseq
        %v6916 = vshrl.u32 %v6915, 7
        %v6917 = vsub.s32 %v3522, %v6916
        %v6918 = vrot.slane %v6322, %v6917
        %v6919 = vsel %vm3527, %v6918, %v6914
        %v6920 = vlaneseq
        %v6921 = vshrl.u32 %v6920, 7
        %v6922 = vsub.s32 %v3529, %v6921
        %v6923 = vrot.slane %v6325, %v6922
        %v6924 = vsel %vm3534, %v6923, %v6919
        %v6925 = vlaneseq
        %v6926 = vshrl.u32 %v6925, 7
        %v6927 = vsub.s32 %v3536, %v6926
        %v6928 = vrot.slane %v6328, %v6927
        %v6929 = vsel %vm3541, %v6928, %v6924
        %v6930 = vlaneseq
        %v6931 = vshrl.u32 %v6930, 7
        %v6932 = vsub.s32 %v3433, %v6931
        %v6933 = vrot.slane %v6331, %v6932
        %v6934 = vlaneseq
        %v6935 = vshrl.u32 %v6934, 7
        %v6936 = vsub.s32 %v3438, %v6935
        %v6937 = vrot.slane %v6334, %v6936
        %v6938 = vsel %vm3443, %v6937, %v6933
        %v6939 = vlaneseq
        %v6940 = vshrl.u32 %v6939, 7
        %v6941 = vsub.s32 %v3445, %v6940
        %v6942 = vrot.slane %v6337, %v6941
        %v6943 = vsel %vm3450, %v6942, %v6938
        %v6944 = vlaneseq
        %v6945 = vshrl.u32 %v6944, 7
        %v6946 = vsub.s32 %v3452, %v6945
        %v6947 = vrot.slane %v6340, %v6946
        %v6948 = vsel %vm3457, %v6947, %v6943
        %v6949 = vlaneseq
        %v6950 = vshrl.u32 %v6949, 7
        %v6951 = vsub.s32 %v3459, %v6950
        %v6952 = vrot.slane %v6343, %v6951
        %v6953 = vsel %vm3464, %v6952, %v6948
        %v6954 = vlaneseq
        %v6955 = vshrl.u32 %v6954, 7
        %v6956 = vsub.s32 %v3466, %v6955
        %v6957 = vrot.slane %v6346, %v6956
        %v6958 = vsel %vm3471, %v6957, %v6953
        %v6959 = vlaneseq
        %v6960 = vshrl.u32 %v6959, 7
        %v6961 = vsub.s32 %v3473, %v6960
        %v6962 = vrot.slane %v6349, %v6961
        %v6963 = vsel %vm3478, %v6962, %v6958
        %v6964 = vlaneseq
        %v6965 = vshrl.u32 %v6964, 7
        %v6966 = vsub.s32 %v3480, %v6965
        %v6967 = vrot.slane %v6352, %v6966
        %v6968 = vsel %vm3485, %v6967, %v6963
        %v6969 = vlaneseq
        %v6970 = vshrl.u32 %v6969, 7
        %v6971 = vsub.s32 %v3487, %v6970
        %v6972 = vrot.slane %v6355, %v6971
        %v6973 = vsel %vm3492, %v6972, %v6968
        %v6974 = vlaneseq
        %v6975 = vshrl.u32 %v6974, 7
        %v6976 = vsub.s32 %v3494, %v6975
        %v6977 = vrot.slane %v6358, %v6976
        %v6978 = vsel %vm3499, %v6977, %v6973
        %v6979 = vlaneseq
        %v6980 = vshrl.u32 %v6979, 7
        %v6981 = vsub.s32 %v3501, %v6980
        %v6982 = vrot.slane %v6361, %v6981
        %v6983 = vsel %vm3506, %v6982, %v6978
        %v6984 = vlaneseq
        %v6985 = vshrl.u32 %v6984, 7
        %v6986 = vsub.s32 %v3508, %v6985
        %v6987 = vrot.slane %v6364, %v6986
        %v6988 = vsel %vm3513, %v6987, %v6983
        %v6989 = vlaneseq
        %v6990 = vshrl.u32 %v6989, 7
        %v6991 = vsub.s32 %v3515, %v6990
        %v6992 = vrot.slane %v6367, %v6991
        %v6993 = vsel %vm3520, %v6992, %v6988
        %v6994 = vlaneseq
        %v6995 = vshrl.u32 %v6994, 7
        %v6996 = vsub.s32 %v3522, %v6995
        %v6997 = vrot.slane %v6370, %v6996
        %v6998 = vsel %vm3527, %v6997, %v6993
        %v6999 = vlaneseq
        %v7000 = vshrl.u32 %v6999, 7
        %v7001 = vsub.s32 %v3529, %v7000
        %v7002 = vrot.slane %v6373, %v7001
        %v7003 = vsel %vm3534, %v7002, %v6998
        %v7004 = vlaneseq
        %v7005 = vshrl.u32 %v7004, 7
        %v7006 = vsub.s32 %v3536, %v7005
        %v7007 = vrot.slane %v6376, %v7006
        %v7008 = vsel %vm3541, %v7007, %v7003
        %v7009 = vsel %vm4096, %v6534, %v6455
        %v7010 = vsel %vm4098, %v6613, %v7009
        %v7011 = vsel %vm4100, %v6692, %v7010
        %v7012 = vsel %vm4102, %v6771, %v7011
        %v7013 = vsel %vm4104, %v6850, %v7012
        %v7014 = vsel %vm4106, %v6929, %v7013
        %v7015 = vsel %vm4108, %v7008, %v7014
        %7017 = vst [vmem:[%s233] sm:$0xff] %v7015
        %s7018 = sand.u32 %s142, 1
        %s7019 = scalar_lea.sflag [#allocation3], %s7018
        %s7020 = sand.u32 %s142, 1
        %s7021 = smul.addr %s7020, 8
        %s7022 = scalar_lea.vmem [#allocation2], %s7021
        // Predicated region
        $region41: #{tpu_custom_call.1} parent=39 // pred_check
          %p7023 = pneg %p152
        $region42: #{tpu_custom_call.1} parent=39 // pred_check_branch
          %7025 = sbr.rel (%p7023) target = $region44
        $region43: #{tpu_custom_call.1} parent=39 // pred_region
          %s7027 = ssub.s32 128, 128
          %7028 = vsyncadd %s7019, %s7027
          %s7029 = smul.addr %s19, 128
          %s7030 = scalar_lea.hbm %s5, %s7029
          %s7032 = sshll.u32 %s7022, 4
          %s7033 = int_to_ptr.vmem [resolvable:$true] %s7032
          %7035 = dma.vmem_to_hbm [thread:$0]  %s7033, 128, %s7030, %s7019
        $region44: #{tpu_custom_call.1} parent=39 // pred_fallthru
          _
      $region40: #{tpu_custom_call.1} parent=5 // pred_fallthru
        _
      %p7036 = scmp.le.s32.totalorder 2, %s14
      // Predicated region
      $region45: #{tpu_custom_call.1} parent=5 // pred_check
        %p7037 = pneg %p7036
      $region46: #{tpu_custom_call.1} parent=5 // pred_check_branch
        %7039 = sbr.rel (%p7037) target = $region48
      $region47: #{tpu_custom_call.1} parent=5 // pred_region
        %s7040 = ssub.s32 %s14, 2
        // Predicated region
        $region49: #{tpu_custom_call.1} parent=47 // pred_check
          %p7041 = pneg %p158
        $region50: #{tpu_custom_call.1} parent=47 // pred_check_branch
          %7043 = sbr.rel (%p7041) target = $region52
        $region51: #{tpu_custom_call.1} parent=47 // pred_region
          %s7044 = sand.u32 %s143, 1
          %s7045 = scalar_lea.sflag [#allocation3], %s7044
          %s7046 = sand.u32 %s143, 1
          %s7047 = smul.addr %s7046, 8
          %s7048 = scalar_lea.vmem [#allocation2], %s7047
          %7049 = dma.done %s7045, 128
        $region52: #{tpu_custom_call.1} parent=47 // pred_fallthru
          _
      $region48: #{tpu_custom_call.1} parent=5 // pred_fallthru
        _
    $region6: #{tpu_custom_call.1} parent=1 // loop_footer
      %s18 = sadd.s32 1, %s14
    $region7: #{tpu_custom_call.1} parent=1 // loop_footer_branch
      %13 = sbr.rel target = $region3
    $region8: #{tpu_custom_call.1} parent=1 // loop_exit
      _
    %7050 = vsyncpa [#allocation3], 1
    %s7051 = scalar_lea.sflag [#allocation3], 1
    %7052 = vsyncpa %s7051, 1

</llo_original>
